<compile_context>
chip_gen: v6e
topology: v6e:2x2x1
jax: 0.10.0
libtpu: 0.0.40
codegen_flags: <defaults>
</compile_context>

<pallas_src>
import functools

import numpy as np
import jax
import jax.numpy as jnp
from jax.experimental import pallas as pl
from jax.experimental.pallas import tpu as pltpu


_LANES = 128
_GATES = ("r", "z", "n")


# ----------------------------------------------------------------------------
# Param-slab layout (shared by the host packer and the kernel).
# ----------------------------------------------------------------------------
def _slab_layout(nI, nH):
    """Row offsets of every packed tensor inside the (rows, 128) param slab."""
    off = {}
    r = 0

    def take(name, rows):
        nonlocal r
        off[name] = (r, rows)
        r += rows

    for g in _GATES:
        take(f"wi0_{g}", nI)     # layer-0 input weights, per gate: (nI, H)
    for g in _GATES:
        take(f"wh0_{g}", nH)     # layer-0 hidden weights, per gate: (H, H)
    for g in _GATES:
        take(f"wi1_{g}", nH)     # layer-1 input weights, per gate: (H, H)
    for g in _GATES:
        take(f"wh1_{g}", nH)     # layer-1 hidden weights, per gate: (H, H)
    for name in ("b0_r", "b0_z", "b0_in", "b0_hn",
                 "b1_r", "b1_z", "b1_in", "b1_hn"):
        take(name, 1)
    take("wfc", nH)              # (H, O)
    take("bfc", 1)
    rows = ((r + 7) // 8) * 8    # pad rows to a sublane multiple
    return off, rows


def _pack_param_slab(params, nI, nH, nO):
    """Pack all weights/biases (per-gate, pre-transposed) into one f32 slab."""
    off, rows = _slab_layout(nI, nH)
    H = nH

    def gate_blocks(w):
        # PyTorch (3H, K) row-blocks [r; z; n] -> per-gate (K, H) blocks for a@W
        return [w[g * H:(g + 1) * H, :].T for g in range(3)]

    wi0 = gate_blocks(params["wih0"])
    wh0 = gate_blocks(params["whh0"])
    wi1 = gate_blocks(params["wih1"])
    wh1 = gate_blocks(params["whh1"])
    bi0, bh0 = params["bih0"], params["bhh0"]
    bi1, bh1 = params["bih1"], params["bhh1"]

    entries = {}
    for gi, g in enumerate(_GATES):
        entries[f"wi0_{g}"] = wi0[gi]
        entries[f"wh0_{g}"] = wh0[gi]
        entries[f"wi1_{g}"] = wi1[gi]
        entries[f"wh1_{g}"] = wh1[gi]
    # r/z input+hidden biases can be pre-summed; the n-gate biases must stay
    # separate because r multiplies only the hidden part (PyTorch semantics).
    entries["b0_r"] = (bi0[0:H] + bh0[0:H]).reshape(1, H)
    entries["b0_z"] = (bi0[H:2 * H] + bh0[H:2 * H]).reshape(1, H)
    entries["b0_in"] = bi0[2 * H:3 * H].reshape(1, H)
    entries["b0_hn"] = bh0[2 * H:3 * H].reshape(1, H)
    entries["b1_r"] = (bi1[0:H] + bh1[0:H]).reshape(1, H)
    entries["b1_z"] = (bi1[H:2 * H] + bh1[H:2 * H]).reshape(1, H)
    entries["b1_in"] = bi1[2 * H:3 * H].reshape(1, H)
    entries["b1_hn"] = bh1[2 * H:3 * H].reshape(1, H)
    entries["wfc"] = params["wfc"].T            # (H, O)
    entries["bfc"] = params["bfc"].reshape(1, nO)

    slab = jnp.zeros((rows, _LANES), jnp.float32)   # zero pad -> padded lanes stay 0
    for name, v in entries.items():
        r0, nr = off[name]
        v = jnp.asarray(v, jnp.float32)
        slab = slab.at[r0:r0 + nr, :v.shape[1]].set(v)
    return slab


# ----------------------------------------------------------------------------
# Kernel.
# ----------------------------------------------------------------------------
def _sigmoid(x):
    # exact sigmoid via tanh: one EUP push, no divide on the critical chain
    return 0.5 * jnp.tanh(0.5 * x) + 0.5


def _gru_fc_kernel(x_ref, slab_ref, out_ref, *, off, T, B, I, H, O):
    W = slab_ref.shape[1]          # 128, lane-padded working width
    f32 = jnp.float32

    def block(name):               # static row-slice load from the param slab
        r0, nr = off[name]
        return slab_ref[r0:r0 + nr, :]

    # ---- loop-invariant loads (issued once, off the recurrence) ----
    wi0 = {g: block(f"wi0_{g}") for g in _GATES}     # (I, 128)
    wh0 = {g: block(f"wh0_{g}") for g in _GATES}     # (H, 128)
    wi1 = {g: block(f"wi1_{g}") for g in _GATES}     # (H, 128)
    wh1 = {g: block(f"wh1_{g}") for g in _GATES}     # (H, 128)
    wfc = block("wfc")                               # (H, 128)

    def bias(name):                # pre-broadcast once (broadcast is not CSE'd)
        return jnp.broadcast_to(block(name), (B, W))

    b0_r, b0_z, b0_in, b0_hn = bias("b0_r"), bias("b0_z"), bias("b0_in"), bias("b0_hn")
    b1_r, b1_z, b1_in, b1_hn = bias("b1_r"), bias("b1_z"), bias("b1_in"), bias("b1_hn")
    bfc = bias("bfc")

    def lane_bcasts(v, K):
        # the only cross-lane op on the chain; materialise once, share everywhere
        return [jnp.broadcast_to(v[:, k:k + 1], (B, W)) for k in range(K)]

    h0 = jnp.zeros((B, W), f32)    # lanes >= H stay exactly 0 (zero-padded slab)
    h1 = jnp.zeros((B, W), f32)

    # Skewed, fully unrolled schedule: step s runs layer-0 for t=s and
    # layer-1 for t=s-1 -> ~T+1 cells of serial latency instead of 2T.
    for s in range(T + 1):
        h0b = lane_bcasts(h0, H) if s >= 1 else None   # shared by gh0 & gi1
        nh0, nh1 = h0, h1

        if s < T:
            # ---- layer-0 cell, timestep t = s ----
            # input projection: depends only on x -> off the serial chain
            xt = x_ref[:, s * I:(s + 1) * I]           # (B, I)
            xb = lane_bcasts(xt, I)
            acc_r, acc_z, gi_n = b0_r, b0_z, b0_in
            for i in range(I):
                acc_r = acc_r + xb[i] * wi0["r"][i:i + 1, :]
                acc_z = acc_z + xb[i] * wi0["z"][i:i + 1, :]
                gi_n = gi_n + xb[i] * wi0["n"][i:i + 1, :]
            gh_n = b0_hn
            if s >= 1:                                  # h0[-1] == 0: skip zero FMAs
                for k in range(H):
                    acc_r = acc_r + h0b[k] * wh0["r"][k:k + 1, :]
                    acc_z = acc_z + h0b[k] * wh0["z"][k:k + 1, :]
                    gh_n = gh_n + h0b[k] * wh0["n"][k:k + 1, :]
            r = _sigmoid(acc_r)
            z = _sigmoid(acc_z)
            n = jnp.tanh(gi_n + r * gh_n)
            nh0 = z * (h0 - n) + n                      # == (1-z)*n + z*h0

        if s >= 1:
            # ---- layer-1 cell, timestep t = s-1 (input is h0[s-1], i.e. current h0) ----
            acc_r, acc_z, gi_n, gh_n = b1_r, b1_z, b1_in, b1_hn
            for k in range(H):
                acc_r = acc_r + h0b[k] * wi1["r"][k:k + 1, :]
                acc_z = acc_z + h0b[k] * wi1["z"][k:k + 1, :]
                gi_n = gi_n + h0b[k] * wi1["n"][k:k + 1, :]
            if s >= 2:                                  # h1[-1] == 0: skip zero FMAs
                h1b = lane_bcasts(h1, H)
                for k in range(H):
                    acc_r = acc_r + h1b[k] * wh1["r"][k:k + 1, :]
                    acc_z = acc_z + h1b[k] * wh1["z"][k:k + 1, :]
                    gh_n = gh_n + h1b[k] * wh1["n"][k:k + 1, :]
            r = _sigmoid(acc_r)
            z = _sigmoid(acc_z)
            n = jnp.tanh(gi_n + r * gh_n)
            nh1 = z * (h1 - n) + n

        h0, h1 = nh0, nh1

    # ---- final Linear on the last-timestep output of the top layer ----
    h1b = lane_bcasts(h1, H)
    out = bfc
    for k in range(H):
        out = out + h1b[k] * wfc[k:k + 1, :]
    out_ref[...] = out[:, :O].astype(out_ref.dtype)


# ----------------------------------------------------------------------------
# Wrapper.
# ----------------------------------------------------------------------------
@jax.jit
def my_gru_forward(x, params):
    """x: (B, T, nInput) float32, batch_first like PyTorch. Returns (B, nOutput)."""
    B, T, I = x.shape
    H = params["whh0"].shape[1]
    O = params["wfc"].shape[0]

    off, _ = _slab_layout(I, H)
    slab = _pack_param_slab(params, I, H, O)          # single (rows,128) param DMA
    x2 = x.astype(jnp.float32).reshape(B, T * I)      # reshape only, no transpose

    kernel = functools.partial(_gru_fc_kernel, off=off, T=T, B=B, I=I, H=H, O=O)
    vmem = pl.BlockSpec(memory_space=pltpu.MemorySpace.VMEM)
    return pl.pallas_call(
        kernel,
        out_shape=jax.ShapeDtypeStruct((B, O), jnp.float32),
        in_specs=[vmem, vmem],                        # 2 inputs -> 2 DMAs total
        out_specs=vmem,
    )(x2, slab)


# ----------------------------------------------------------------------------
# Init + float64 reference + test.
# ----------------------------------------------------------------------------
def init_params(key, nInput=3, nHidden=4, nOutput=18):
    """Deterministic init mimicking PyTorch's U(-1/sqrt(H), 1/sqrt(H))."""
    H = nHidden
    bound = 1.0 / np.sqrt(H)
    keys = jax.random.split(key, 11)

    def u(k, shape):
        return jax.random.uniform(k, shape, jnp.float32, -bound, bound)

    return {
        # layer 0 (input size = nInput)
        "wih0": u(keys[0], (3 * H, nInput)),
        "whh0": u(keys[1], (3 * H, H)),
        "bih0": u(keys[2], (3 * H,)),
        "bhh0": u(keys[3], (3 * H,)),
        # layer 1 (input size = nHidden)
        "wih1": u(keys[4], (3 * H, H)),
        "whh1": u(keys[5], (3 * H, H)),
        "bih1": u(keys[6], (3 * H,)),
        "bhh1": u(keys[7], (3 * H,)),
        # fc
        "wfc": u(keys[8], (nOutput, H)),
        "bfc": u(keys[9], (nOutput,)),
    }


def reference_forward_np(x, params):
    """Exact float64 NumPy reference of the PyTorch MyGRU forward."""
    p = {k: np.asarray(v, np.float64) for k, v in params.items()}
    x = np.asarray(x, np.float64)
    H = p["whh0"].shape[1]
    B, T, _ = x.shape

    def sigmoid(v):
        return 1.0 / (1.0 + np.exp(-v))

    def cell(xt, h, wih, whh, bih, bhh):
        gi = xt @ wih.T + bih
        gh = h @ whh.T + bhh
        r = sigmoid(gi[:, 0:H] + gh[:, 0:H])
        z = sigmoid(gi[:, H:2 * H] + gh[:, H:2 * H])
        n = np.tanh(gi[:, 2 * H:3 * H] + r * gh[:, 2 * H:3 * H])
        return (1.0 - z) * n + z * h

    h0 = np.zeros((B, H))
    h1 = np.zeros((B, H))
    for t in range(T):
        xt = x[:, t, :]
        h0 = cell(xt, h0, p["wih0"], p["whh0"], p["bih0"], p["bhh0"])
        h1 = cell(h0, h1, p["wih1"], p["whh1"], p["bih1"], p["bhh1"])
    return h1 @ p["wfc"].T + p["bfc"]


if __name__ == "__main__":
    nInput, nHidden, nLayer, nOutput = 3, 4, 2, 18
    B, T = 2, 8

    key = jax.random.PRNGKey(0)
    kx, kp = jax.random.split(key)
    x = jax.random.normal(kx, (B, T, nInput), jnp.float32)
    params = init_params(kp, nInput, nHidden, nOutput)

    out = my_gru_forward(x, params)
    out = jax.block_until_ready(out)

    ref = reference_forward_np(x, params)
    assert out.shape == (B, nOutput)
    # Kernel arithmetic is exact f32 (VPU FMAs, tanh-based sigmoid), so it
    # matches the float64 reference well within 1e-3.
    np.testing.assert_allclose(np.asarray(out), ref, rtol=1e-3, atol=1e-3)
    print("KERNEL_OK")
</pallas_src>

<mosaic_0001>
module attributes {stable_mosaic.version = 11 : i64} {
  func.func @_gru_fc_kernel(%arg0: memref<2x24xf32, #tpu.memory_space<vmem>>, %arg1: memref<64x128xf32, #tpu.memory_space<vmem>>, %arg2: memref<2x18xf32, #tpu.memory_space<vmem>>) attributes {dimension_semantics = [], scalar_prefetch = 0 : i64, scratch_operands = 0 : i64, tpu.core_type = #tpu.core_type<tc>} {
    %c0 = arith.constant 0 : index
    %c0_0 = arith.constant 0 : index
    %0 = vector.load %arg1[%c0, %c0_0] : memref<64x128xf32, #tpu.memory_space<vmem>>, vector<3x128xf32>
    %c3 = arith.constant 3 : index
    %c0_1 = arith.constant 0 : index
    %1 = vector.load %arg1[%c3, %c0_1] : memref<64x128xf32, #tpu.memory_space<vmem>>, vector<3x128xf32>
    %c6 = arith.constant 6 : index
    %c0_2 = arith.constant 0 : index
    %2 = vector.load %arg1[%c6, %c0_2] : memref<64x128xf32, #tpu.memory_space<vmem>>, vector<3x128xf32>
    %c9 = arith.constant 9 : index
    %c0_3 = arith.constant 0 : index
    %3 = vector.load %arg1[%c9, %c0_3] : memref<64x128xf32, #tpu.memory_space<vmem>>, vector<4x128xf32>
    %c13 = arith.constant 13 : index
    %c0_4 = arith.constant 0 : index
    %4 = vector.load %arg1[%c13, %c0_4] : memref<64x128xf32, #tpu.memory_space<vmem>>, vector<4x128xf32>
    %c17 = arith.constant 17 : index
    %c0_5 = arith.constant 0 : index
    %5 = vector.load %arg1[%c17, %c0_5] : memref<64x128xf32, #tpu.memory_space<vmem>>, vector<4x128xf32>
    %c21 = arith.constant 21 : index
    %c0_6 = arith.constant 0 : index
    %6 = vector.load %arg1[%c21, %c0_6] : memref<64x128xf32, #tpu.memory_space<vmem>>, vector<4x128xf32>
    %c25 = arith.constant 25 : index
    %c0_7 = arith.constant 0 : index
    %7 = vector.load %arg1[%c25, %c0_7] : memref<64x128xf32, #tpu.memory_space<vmem>>, vector<4x128xf32>
    %c29 = arith.constant 29 : index
    %c0_8 = arith.constant 0 : index
    %8 = vector.load %arg1[%c29, %c0_8] : memref<64x128xf32, #tpu.memory_space<vmem>>, vector<4x128xf32>
    %c33 = arith.constant 33 : index
    %c0_9 = arith.constant 0 : index
    %9 = vector.load %arg1[%c33, %c0_9] : memref<64x128xf32, #tpu.memory_space<vmem>>, vector<4x128xf32>
    %c37 = arith.constant 37 : index
    %c0_10 = arith.constant 0 : index
    %10 = vector.load %arg1[%c37, %c0_10] : memref<64x128xf32, #tpu.memory_space<vmem>>, vector<4x128xf32>
    %c41 = arith.constant 41 : index
    %c0_11 = arith.constant 0 : index
    %11 = vector.load %arg1[%c41, %c0_11] : memref<64x128xf32, #tpu.memory_space<vmem>>, vector<4x128xf32>
    %c53 = arith.constant 53 : index
    %c0_12 = arith.constant 0 : index
    %12 = vector.load %arg1[%c53, %c0_12] : memref<64x128xf32, #tpu.memory_space<vmem>>, vector<4x128xf32>
    %c45 = arith.constant 45 : index
    %c0_13 = arith.constant 0 : index
    %13 = vector.load %arg1[%c45, %c0_13] : memref<64x128xf32, #tpu.memory_space<vmem>>, vector<1x128xf32>
    %14 = vector.shape_cast %13 : vector<1x128xf32> to vector<1x128xf32>
    %15 = vector.broadcast %14 : vector<1x128xf32> to vector<2x128xf32>
    %c46 = arith.constant 46 : index
    %c0_14 = arith.constant 0 : index
    %16 = vector.load %arg1[%c46, %c0_14] : memref<64x128xf32, #tpu.memory_space<vmem>>, vector<1x128xf32>
    %17 = vector.shape_cast %16 : vector<1x128xf32> to vector<1x128xf32>
    %18 = vector.broadcast %17 : vector<1x128xf32> to vector<2x128xf32>
    %c47 = arith.constant 47 : index
    %c0_15 = arith.constant 0 : index
    %19 = vector.load %arg1[%c47, %c0_15] : memref<64x128xf32, #tpu.memory_space<vmem>>, vector<1x128xf32>
    %20 = vector.shape_cast %19 : vector<1x128xf32> to vector<1x128xf32>
    %21 = vector.broadcast %20 : vector<1x128xf32> to vector<2x128xf32>
    %c48 = arith.constant 48 : index
    %c0_16 = arith.constant 0 : index
    %22 = vector.load %arg1[%c48, %c0_16] : memref<64x128xf32, #tpu.memory_space<vmem>>, vector<1x128xf32>
    %23 = vector.shape_cast %22 : vector<1x128xf32> to vector<1x128xf32>
    %24 = vector.broadcast %23 : vector<1x128xf32> to vector<2x128xf32>
    %c49 = arith.constant 49 : index
    %c0_17 = arith.constant 0 : index
    %25 = vector.load %arg1[%c49, %c0_17] : memref<64x128xf32, #tpu.memory_space<vmem>>, vector<1x128xf32>
    %26 = vector.shape_cast %25 : vector<1x128xf32> to vector<1x128xf32>
    %27 = vector.broadcast %26 : vector<1x128xf32> to vector<2x128xf32>
    %c50 = arith.constant 50 : index
    %c0_18 = arith.constant 0 : index
    %28 = vector.load %arg1[%c50, %c0_18] : memref<64x128xf32, #tpu.memory_space<vmem>>, vector<1x128xf32>
    %29 = vector.shape_cast %28 : vector<1x128xf32> to vector<1x128xf32>
    %30 = vector.broadcast %29 : vector<1x128xf32> to vector<2x128xf32>
    %c51 = arith.constant 51 : index
    %c0_19 = arith.constant 0 : index
    %31 = vector.load %arg1[%c51, %c0_19] : memref<64x128xf32, #tpu.memory_space<vmem>>, vector<1x128xf32>
    %32 = vector.shape_cast %31 : vector<1x128xf32> to vector<1x128xf32>
    %33 = vector.broadcast %32 : vector<1x128xf32> to vector<2x128xf32>
    %c52 = arith.constant 52 : index
    %c0_20 = arith.constant 0 : index
    %34 = vector.load %arg1[%c52, %c0_20] : memref<64x128xf32, #tpu.memory_space<vmem>>, vector<1x128xf32>
    %35 = vector.shape_cast %34 : vector<1x128xf32> to vector<1x128xf32>
    %36 = vector.broadcast %35 : vector<1x128xf32> to vector<2x128xf32>
    %c57 = arith.constant 57 : index
    %c0_21 = arith.constant 0 : index
    %37 = vector.load %arg1[%c57, %c0_21] : memref<64x128xf32, #tpu.memory_space<vmem>>, vector<1x128xf32>
    %38 = vector.shape_cast %37 : vector<1x128xf32> to vector<1x128xf32>
    %39 = vector.broadcast %38 : vector<1x128xf32> to vector<2x128xf32>
    %cst = arith.constant 0.000000e+00 : f32
    %40 = vector.broadcast %cst : f32 to vector<2x128xf32>
    %cst_22 = arith.constant 0.000000e+00 : f32
    %41 = vector.broadcast %cst_22 : f32 to vector<2x128xf32>
    %c0_23 = arith.constant 0 : index
    %c0_24 = arith.constant 0 : index
    %42 = vector.load %arg0[%c0_23, %c0_24] : memref<2x24xf32, #tpu.memory_space<vmem>>, vector<2x3xf32>
    %43 = vector.extract_strided_slice %42 {offsets = [0, 0], sizes = [2, 1], strides = [1, 1]} : vector<2x3xf32> to vector<2x1xf32>
    %44 = vector.shape_cast %43 : vector<2x1xf32> to vector<2x1xf32>
    %45 = vector.broadcast %44 : vector<2x1xf32> to vector<2x128xf32>
    %46 = vector.extract_strided_slice %42 {offsets = [0, 1], sizes = [2, 1], strides = [1, 1]} : vector<2x3xf32> to vector<2x1xf32>
    %47 = vector.shape_cast %46 : vector<2x1xf32> to vector<2x1xf32>
    %48 = vector.broadcast %47 : vector<2x1xf32> to vector<2x128xf32>
    %49 = vector.extract_strided_slice %42 {offsets = [0, 2], sizes = [2, 1], strides = [1, 1]} : vector<2x3xf32> to vector<2x1xf32>
    %50 = vector.shape_cast %49 : vector<2x1xf32> to vector<2x1xf32>
    %51 = vector.broadcast %50 : vector<2x1xf32> to vector<2x128xf32>
    %52 = vector.extract_strided_slice %0 {offsets = [0, 0], sizes = [1, 128], strides = [1, 1]} : vector<3x128xf32> to vector<1x128xf32>
    %53 = vector.broadcast %52 : vector<1x128xf32> to vector<2x128xf32>
    %54 = arith.mulf %45, %53 : vector<2x128xf32>
    %55 = arith.addf %15, %54 : vector<2x128xf32>
    %56 = vector.extract_strided_slice %1 {offsets = [0, 0], sizes = [1, 128], strides = [1, 1]} : vector<3x128xf32> to vector<1x128xf32>
    %57 = vector.broadcast %56 : vector<1x128xf32> to vector<2x128xf32>
    %58 = arith.mulf %45, %57 : vector<2x128xf32>
    %59 = arith.addf %18, %58 : vector<2x128xf32>
    %60 = vector.extract_strided_slice %2 {offsets = [0, 0], sizes = [1, 128], strides = [1, 1]} : vector<3x128xf32> to vector<1x128xf32>
    %61 = vector.broadcast %60 : vector<1x128xf32> to vector<2x128xf32>
    %62 = arith.mulf %45, %61 : vector<2x128xf32>
    %63 = arith.addf %21, %62 : vector<2x128xf32>
    %64 = vector.extract_strided_slice %0 {offsets = [1, 0], sizes = [1, 128], strides = [1, 1]} : vector<3x128xf32> to vector<1x128xf32>
    %65 = vector.broadcast %64 : vector<1x128xf32> to vector<2x128xf32>
    %66 = arith.mulf %48, %65 : vector<2x128xf32>
    %67 = arith.addf %55, %66 : vector<2x128xf32>
    %68 = vector.extract_strided_slice %1 {offsets = [1, 0], sizes = [1, 128], strides = [1, 1]} : vector<3x128xf32> to vector<1x128xf32>
    %69 = vector.broadcast %68 : vector<1x128xf32> to vector<2x128xf32>
    %70 = arith.mulf %48, %69 : vector<2x128xf32>
    %71 = arith.addf %59, %70 : vector<2x128xf32>
    %72 = vector.extract_strided_slice %2 {offsets = [1, 0], sizes = [1, 128], strides = [1, 1]} : vector<3x128xf32> to vector<1x128xf32>
    %73 = vector.broadcast %72 : vector<1x128xf32> to vector<2x128xf32>
    %74 = arith.mulf %48, %73 : vector<2x128xf32>
    %75 = arith.addf %63, %74 : vector<2x128xf32>
    %76 = vector.extract_strided_slice %0 {offsets = [2, 0], sizes = [1, 128], strides = [1, 1]} : vector<3x128xf32> to vector<1x128xf32>
    %77 = vector.broadcast %76 : vector<1x128xf32> to vector<2x128xf32>
    %78 = arith.mulf %51, %77 : vector<2x128xf32>
    %79 = arith.addf %67, %78 : vector<2x128xf32>
    %80 = vector.extract_strided_slice %1 {offsets = [2, 0], sizes = [1, 128], strides = [1, 1]} : vector<3x128xf32> to vector<1x128xf32>
    %81 = vector.broadcast %80 : vector<1x128xf32> to vector<2x128xf32>
    %82 = arith.mulf %51, %81 : vector<2x128xf32>
    %83 = arith.addf %71, %82 : vector<2x128xf32>
    %84 = vector.extract_strided_slice %2 {offsets = [2, 0], sizes = [1, 128], strides = [1, 1]} : vector<3x128xf32> to vector<1x128xf32>
    %85 = vector.broadcast %84 : vector<1x128xf32> to vector<2x128xf32>
    %86 = arith.mulf %51, %85 : vector<2x128xf32>
    %87 = arith.addf %75, %86 : vector<2x128xf32>
    %cst_25 = arith.constant 5.000000e-01 : f32
    %88 = vector.broadcast %cst_25 : f32 to vector<2x128xf32>
    %89 = arith.mulf %88, %79 : vector<2x128xf32>
    %90 = math.tanh %89 : vector<2x128xf32>
    %cst_26 = arith.constant 5.000000e-01 : f32
    %91 = vector.broadcast %cst_26 : f32 to vector<2x128xf32>
    %92 = arith.mulf %91, %90 : vector<2x128xf32>
    %cst_27 = arith.constant 5.000000e-01 : f32
    %93 = vector.broadcast %cst_27 : f32 to vector<2x128xf32>
    %94 = arith.addf %92, %93 : vector<2x128xf32>
    %cst_28 = arith.constant 5.000000e-01 : f32
    %95 = vector.broadcast %cst_28 : f32 to vector<2x128xf32>
    %96 = arith.mulf %95, %83 : vector<2x128xf32>
    %97 = math.tanh %96 : vector<2x128xf32>
    %cst_29 = arith.constant 5.000000e-01 : f32
    %98 = vector.broadcast %cst_29 : f32 to vector<2x128xf32>
    %99 = arith.mulf %98, %97 : vector<2x128xf32>
    %cst_30 = arith.constant 5.000000e-01 : f32
    %100 = vector.broadcast %cst_30 : f32 to vector<2x128xf32>
    %101 = arith.addf %99, %100 : vector<2x128xf32>
    %102 = arith.mulf %94, %24 : vector<2x128xf32>
    %103 = arith.addf %87, %102 : vector<2x128xf32>
    %104 = math.tanh %103 : vector<2x128xf32>
    %105 = arith.subf %40, %104 : vector<2x128xf32>
    %106 = arith.mulf %101, %105 : vector<2x128xf32>
    %107 = arith.addf %106, %104 : vector<2x128xf32>
    %108 = vector.extract_strided_slice %107 {offsets = [0, 0], sizes = [2, 1], strides = [1, 1]} : vector<2x128xf32> to vector<2x1xf32>
    %109 = vector.shape_cast %108 : vector<2x1xf32> to vector<2x1xf32>
    %110 = vector.broadcast %109 : vector<2x1xf32> to vector<2x128xf32>
    %111 = vector.extract_strided_slice %107 {offsets = [0, 1], sizes = [2, 1], strides = [1, 1]} : vector<2x128xf32> to vector<2x1xf32>
    %112 = vector.shape_cast %111 : vector<2x1xf32> to vector<2x1xf32>
    %113 = vector.broadcast %112 : vector<2x1xf32> to vector<2x128xf32>
    %114 = vector.extract_strided_slice %107 {offsets = [0, 2], sizes = [2, 1], strides = [1, 1]} : vector<2x128xf32> to vector<2x1xf32>
    %115 = vector.shape_cast %114 : vector<2x1xf32> to vector<2x1xf32>
    %116 = vector.broadcast %115 : vector<2x1xf32> to vector<2x128xf32>
    %117 = vector.extract_strided_slice %107 {offsets = [0, 3], sizes = [2, 1], strides = [1, 1]} : vector<2x128xf32> to vector<2x1xf32>
    %118 = vector.shape_cast %117 : vector<2x1xf32> to vector<2x1xf32>
    %119 = vector.broadcast %118 : vector<2x1xf32> to vector<2x128xf32>
    %c0_31 = arith.constant 0 : index
    %c3_32 = arith.constant 3 : index
    %120 = vector.load %arg0[%c0_31, %c3_32] : memref<2x24xf32, #tpu.memory_space<vmem>>, vector<2x3xf32>
    %121 = vector.extract_strided_slice %120 {offsets = [0, 0], sizes = [2, 1], strides = [1, 1]} : vector<2x3xf32> to vector<2x1xf32>
    %122 = vector.shape_cast %121 : vector<2x1xf32> to vector<2x1xf32>
    %123 = vector.broadcast %122 : vector<2x1xf32> to vector<2x128xf32>
    %124 = vector.extract_strided_slice %120 {offsets = [0, 1], sizes = [2, 1], strides = [1, 1]} : vector<2x3xf32> to vector<2x1xf32>
    %125 = vector.shape_cast %124 : vector<2x1xf32> to vector<2x1xf32>
    %126 = vector.broadcast %125 : vector<2x1xf32> to vector<2x128xf32>
    %127 = vector.extract_strided_slice %120 {offsets = [0, 2], sizes = [2, 1], strides = [1, 1]} : vector<2x3xf32> to vector<2x1xf32>
    %128 = vector.shape_cast %127 : vector<2x1xf32> to vector<2x1xf32>
    %129 = vector.broadcast %128 : vector<2x1xf32> to vector<2x128xf32>
    %130 = vector.extract_strided_slice %0 {offsets = [0, 0], sizes = [1, 128], strides = [1, 1]} : vector<3x128xf32> to vector<1x128xf32>
    %131 = vector.broadcast %130 : vector<1x128xf32> to vector<2x128xf32>
    %132 = arith.mulf %123, %131 : vector<2x128xf32>
    %133 = arith.addf %15, %132 : vector<2x128xf32>
    %134 = vector.extract_strided_slice %1 {offsets = [0, 0], sizes = [1, 128], strides = [1, 1]} : vector<3x128xf32> to vector<1x128xf32>
    %135 = vector.broadcast %134 : vector<1x128xf32> to vector<2x128xf32>
    %136 = arith.mulf %123, %135 : vector<2x128xf32>
    %137 = arith.addf %18, %136 : vector<2x128xf32>
    %138 = vector.extract_strided_slice %2 {offsets = [0, 0], sizes = [1, 128], strides = [1, 1]} : vector<3x128xf32> to vector<1x128xf32>
    %139 = vector.broadcast %138 : vector<1x128xf32> to vector<2x128xf32>
    %140 = arith.mulf %123, %139 : vector<2x128xf32>
    %141 = arith.addf %21, %140 : vector<2x128xf32>
    %142 = vector.extract_strided_slice %0 {offsets = [1, 0], sizes = [1, 128], strides = [1, 1]} : vector<3x128xf32> to vector<1x128xf32>
    %143 = vector.broadcast %142 : vector<1x128xf32> to vector<2x128xf32>
    %144 = arith.mulf %126, %143 : vector<2x128xf32>
    %145 = arith.addf %133, %144 : vector<2x128xf32>
    %146 = vector.extract_strided_slice %1 {offsets = [1, 0], sizes = [1, 128], strides = [1, 1]} : vector<3x128xf32> to vector<1x128xf32>
    %147 = vector.broadcast %146 : vector<1x128xf32> to vector<2x128xf32>
    %148 = arith.mulf %126, %147 : vector<2x128xf32>
    %149 = arith.addf %137, %148 : vector<2x128xf32>
    %150 = vector.extract_strided_slice %2 {offsets = [1, 0], sizes = [1, 128], strides = [1, 1]} : vector<3x128xf32> to vector<1x128xf32>
    %151 = vector.broadcast %150 : vector<1x128xf32> to vector<2x128xf32>
    %152 = arith.mulf %126, %151 : vector<2x128xf32>
    %153 = arith.addf %141, %152 : vector<2x128xf32>
    %154 = vector.extract_strided_slice %0 {offsets = [2, 0], sizes = [1, 128], strides = [1, 1]} : vector<3x128xf32> to vector<1x128xf32>
    %155 = vector.broadcast %154 : vector<1x128xf32> to vector<2x128xf32>
    %156 = arith.mulf %129, %155 : vector<2x128xf32>
    %157 = arith.addf %145, %156 : vector<2x128xf32>
    %158 = vector.extract_strided_slice %1 {offsets = [2, 0], sizes = [1, 128], strides = [1, 1]} : vector<3x128xf32> to vector<1x128xf32>
    %159 = vector.broadcast %158 : vector<1x128xf32> to vector<2x128xf32>
    %160 = arith.mulf %129, %159 : vector<2x128xf32>
    %161 = arith.addf %149, %160 : vector<2x128xf32>
    %162 = vector.extract_strided_slice %2 {offsets = [2, 0], sizes = [1, 128], strides = [1, 1]} : vector<3x128xf32> to vector<1x128xf32>
    %163 = vector.broadcast %162 : vector<1x128xf32> to vector<2x128xf32>
    %164 = arith.mulf %129, %163 : vector<2x128xf32>
    %165 = arith.addf %153, %164 : vector<2x128xf32>
    %166 = vector.extract_strided_slice %3 {offsets = [0, 0], sizes = [1, 128], strides = [1, 1]} : vector<4x128xf32> to vector<1x128xf32>
    %167 = vector.broadcast %166 : vector<1x128xf32> to vector<2x128xf32>
    %168 = arith.mulf %110, %167 : vector<2x128xf32>
    %169 = arith.addf %157, %168 : vector<2x128xf32>
    %170 = vector.extract_strided_slice %4 {offsets = [0, 0], sizes = [1, 128], strides = [1, 1]} : vector<4x128xf32> to vector<1x128xf32>
    %171 = vector.broadcast %170 : vector<1x128xf32> to vector<2x128xf32>
    %172 = arith.mulf %110, %171 : vector<2x128xf32>
    %173 = arith.addf %161, %172 : vector<2x128xf32>
    %174 = vector.extract_strided_slice %5 {offsets = [0, 0], sizes = [1, 128], strides = [1, 1]} : vector<4x128xf32> to vector<1x128xf32>
    %175 = vector.broadcast %174 : vector<1x128xf32> to vector<2x128xf32>
    %176 = arith.mulf %110, %175 : vector<2x128xf32>
    %177 = arith.addf %24, %176 : vector<2x128xf32>
    %178 = vector.extract_strided_slice %3 {offsets = [1, 0], sizes = [1, 128], strides = [1, 1]} : vector<4x128xf32> to vector<1x128xf32>
    %179 = vector.broadcast %178 : vector<1x128xf32> to vector<2x128xf32>
    %180 = arith.mulf %113, %179 : vector<2x128xf32>
    %181 = arith.addf %169, %180 : vector<2x128xf32>
    %182 = vector.extract_strided_slice %4 {offsets = [1, 0], sizes = [1, 128], strides = [1, 1]} : vector<4x128xf32> to vector<1x128xf32>
    %183 = vector.broadcast %182 : vector<1x128xf32> to vector<2x128xf32>
    %184 = arith.mulf %113, %183 : vector<2x128xf32>
    %185 = arith.addf %173, %184 : vector<2x128xf32>
    %186 = vector.extract_strided_slice %5 {offsets = [1, 0], sizes = [1, 128], strides = [1, 1]} : vector<4x128xf32> to vector<1x128xf32>
    %187 = vector.broadcast %186 : vector<1x128xf32> to vector<2x128xf32>
    %188 = arith.mulf %113, %187 : vector<2x128xf32>
    %189 = arith.addf %177, %188 : vector<2x128xf32>
    %190 = vector.extract_strided_slice %3 {offsets = [2, 0], sizes = [1, 128], strides = [1, 1]} : vector<4x128xf32> to vector<1x128xf32>
    %191 = vector.broadcast %190 : vector<1x128xf32> to vector<2x128xf32>
    %192 = arith.mulf %116, %191 : vector<2x128xf32>
    %193 = arith.addf %181, %192 : vector<2x128xf32>
    %194 = vector.extract_strided_slice %4 {offsets = [2, 0], sizes = [1, 128], strides = [1, 1]} : vector<4x128xf32> to vector<1x128xf32>
    %195 = vector.broadcast %194 : vector<1x128xf32> to vector<2x128xf32>
    %196 = arith.mulf %116, %195 : vector<2x128xf32>
    %197 = arith.addf %185, %196 : vector<2x128xf32>
    %198 = vector.extract_strided_slice %5 {offsets = [2, 0], sizes = [1, 128], strides = [1, 1]} : vector<4x128xf32> to vector<1x128xf32>
    %199 = vector.broadcast %198 : vector<1x128xf32> to vector<2x128xf32>
    %200 = arith.mulf %116, %199 : vector<2x128xf32>
    %201 = arith.addf %189, %200 : vector<2x128xf32>
    %202 = vector.extract_strided_slice %3 {offsets = [3, 0], sizes = [1, 128], strides = [1, 1]} : vector<4x128xf32> to vector<1x128xf32>
    %203 = vector.broadcast %202 : vector<1x128xf32> to vector<2x128xf32>
    %204 = arith.mulf %119, %203 : vector<2x128xf32>
    %205 = arith.addf %193, %204 : vector<2x128xf32>
    %206 = vector.extract_strided_slice %4 {offsets = [3, 0], sizes = [1, 128], strides = [1, 1]} : vector<4x128xf32> to vector<1x128xf32>
    %207 = vector.broadcast %206 : vector<1x128xf32> to vector<2x128xf32>
    %208 = arith.mulf %119, %207 : vector<2x128xf32>
    %209 = arith.addf %197, %208 : vector<2x128xf32>
    %210 = vector.extract_strided_slice %5 {offsets = [3, 0], sizes = [1, 128], strides = [1, 1]} : vector<4x128xf32> to vector<1x128xf32>
    %211 = vector.broadcast %210 : vector<1x128xf32> to vector<2x128xf32>
    %212 = arith.mulf %119, %211 : vector<2x128xf32>
    %213 = arith.addf %201, %212 : vector<2x128xf32>
    %cst_33 = arith.constant 5.000000e-01 : f32
    %214 = vector.broadcast %cst_33 : f32 to vector<2x128xf32>
    %215 = arith.mulf %214, %205 : vector<2x128xf32>
    %216 = math.tanh %215 : vector<2x128xf32>
    %cst_34 = arith.constant 5.000000e-01 : f32
    %217 = vector.broadcast %cst_34 : f32 to vector<2x128xf32>
    %218 = arith.mulf %217, %216 : vector<2x128xf32>
    %cst_35 = arith.constant 5.000000e-01 : f32
    %219 = vector.broadcast %cst_35 : f32 to vector<2x128xf32>
    %220 = arith.addf %218, %219 : vector<2x128xf32>
    %cst_36 = arith.constant 5.000000e-01 : f32
    %221 = vector.broadcast %cst_36 : f32 to vector<2x128xf32>
    %222 = arith.mulf %221, %209 : vector<2x128xf32>
    %223 = math.tanh %222 : vector<2x128xf32>
    %cst_37 = arith.constant 5.000000e-01 : f32
    %224 = vector.broadcast %cst_37 : f32 to vector<2x128xf32>
    %225 = arith.mulf %224, %223 : vector<2x128xf32>
    %cst_38 = arith.constant 5.000000e-01 : f32
    %226 = vector.broadcast %cst_38 : f32 to vector<2x128xf32>
    %227 = arith.addf %225, %226 : vector<2x128xf32>
    %228 = arith.mulf %220, %213 : vector<2x128xf32>
    %229 = arith.addf %165, %228 : vector<2x128xf32>
    %230 = math.tanh %229 : vector<2x128xf32>
    %231 = arith.subf %107, %230 : vector<2x128xf32>
    %232 = arith.mulf %227, %231 : vector<2x128xf32>
    %233 = arith.addf %232, %230 : vector<2x128xf32>
    %234 = vector.extract_strided_slice %6 {offsets = [0, 0], sizes = [1, 128], strides = [1, 1]} : vector<4x128xf32> to vector<1x128xf32>
    %235 = vector.broadcast %234 : vector<1x128xf32> to vector<2x128xf32>
    %236 = arith.mulf %110, %235 : vector<2x128xf32>
    %237 = arith.addf %27, %236 : vector<2x128xf32>
    %238 = vector.extract_strided_slice %7 {offsets = [0, 0], sizes = [1, 128], strides = [1, 1]} : vector<4x128xf32> to vector<1x128xf32>
    %239 = vector.broadcast %238 : vector<1x128xf32> to vector<2x128xf32>
    %240 = arith.mulf %110, %239 : vector<2x128xf32>
    %241 = arith.addf %30, %240 : vector<2x128xf32>
    %242 = vector.extract_strided_slice %8 {offsets = [0, 0], sizes = [1, 128], strides = [1, 1]} : vector<4x128xf32> to vector<1x128xf32>
    %243 = vector.broadcast %242 : vector<1x128xf32> to vector<2x128xf32>
    %244 = arith.mulf %110, %243 : vector<2x128xf32>
    %245 = arith.addf %33, %244 : vector<2x128xf32>
    %246 = vector.extract_strided_slice %6 {offsets = [1, 0], sizes = [1, 128], strides = [1, 1]} : vector<4x128xf32> to vector<1x128xf32>
    %247 = vector.broadcast %246 : vector<1x128xf32> to vector<2x128xf32>
    %248 = arith.mulf %113, %247 : vector<2x128xf32>
    %249 = arith.addf %237, %248 : vector<2x128xf32>
    %250 = vector.extract_strided_slice %7 {offsets = [1, 0], sizes = [1, 128], strides = [1, 1]} : vector<4x128xf32> to vector<1x128xf32>
    %251 = vector.broadcast %250 : vector<1x128xf32> to vector<2x128xf32>
    %252 = arith.mulf %113, %251 : vector<2x128xf32>
    %253 = arith.addf %241, %252 : vector<2x128xf32>
    %254 = vector.extract_strided_slice %8 {offsets = [1, 0], sizes = [1, 128], strides = [1, 1]} : vector<4x128xf32> to vector<1x128xf32>
    %255 = vector.broadcast %254 : vector<1x128xf32> to vector<2x128xf32>
    %256 = arith.mulf %113, %255 : vector<2x128xf32>
    %257 = arith.addf %245, %256 : vector<2x128xf32>
    %258 = vector.extract_strided_slice %6 {offsets = [2, 0], sizes = [1, 128], strides = [1, 1]} : vector<4x128xf32> to vector<1x128xf32>
    %259 = vector.broadcast %258 : vector<1x128xf32> to vector<2x128xf32>
    %260 = arith.mulf %116, %259 : vector<2x128xf32>
    %261 = arith.addf %249, %260 : vector<2x128xf32>
    %262 = vector.extract_strided_slice %7 {offsets = [2, 0], sizes = [1, 128], strides = [1, 1]} : vector<4x128xf32> to vector<1x128xf32>
    %263 = vector.broadcast %262 : vector<1x128xf32> to vector<2x128xf32>
    %264 = arith.mulf %116, %263 : vector<2x128xf32>
    %265 = arith.addf %253, %264 : vector<2x128xf32>
    %266 = vector.extract_strided_slice %8 {offsets = [2, 0], sizes = [1, 128], strides = [1, 1]} : vector<4x128xf32> to vector<1x128xf32>
    %267 = vector.broadcast %266 : vector<1x128xf32> to vector<2x128xf32>
    %268 = arith.mulf %116, %267 : vector<2x128xf32>
    %269 = arith.addf %257, %268 : vector<2x128xf32>
    %270 = vector.extract_strided_slice %6 {offsets = [3, 0], sizes = [1, 128], strides = [1, 1]} : vector<4x128xf32> to vector<1x128xf32>
    %271 = vector.broadcast %270 : vector<1x128xf32> to vector<2x128xf32>
    %272 = arith.mulf %119, %271 : vector<2x128xf32>
    %273 = arith.addf %261, %272 : vector<2x128xf32>
    %274 = vector.extract_strided_slice %7 {offsets = [3, 0], sizes = [1, 128], strides = [1, 1]} : vector<4x128xf32> to vector<1x128xf32>
    %275 = vector.broadcast %274 : vector<1x128xf32> to vector<2x128xf32>
    %276 = arith.mulf %119, %275 : vector<2x128xf32>
    %277 = arith.addf %265, %276 : vector<2x128xf32>
    %278 = vector.extract_strided_slice %8 {offsets = [3, 0], sizes = [1, 128], strides = [1, 1]} : vector<4x128xf32> to vector<1x128xf32>
    %279 = vector.broadcast %278 : vector<1x128xf32> to vector<2x128xf32>
    %280 = arith.mulf %119, %279 : vector<2x128xf32>
    %281 = arith.addf %269, %280 : vector<2x128xf32>
    %cst_39 = arith.constant 5.000000e-01 : f32
    %282 = vector.broadcast %cst_39 : f32 to vector<2x128xf32>
    %283 = arith.mulf %282, %273 : vector<2x128xf32>
    %284 = math.tanh %283 : vector<2x128xf32>
    %cst_40 = arith.constant 5.000000e-01 : f32
    %285 = vector.broadcast %cst_40 : f32 to vector<2x128xf32>
    %286 = arith.mulf %285, %284 : vector<2x128xf32>
    %cst_41 = arith.constant 5.000000e-01 : f32
    %287 = vector.broadcast %cst_41 : f32 to vector<2x128xf32>
    %288 = arith.addf %286, %287 : vector<2x128xf32>
    %cst_42 = arith.constant 5.000000e-01 : f32
    %289 = vector.broadcast %cst_42 : f32 to vector<2x128xf32>
    %290 = arith.mulf %289, %277 : vector<2x128xf32>
    %291 = math.tanh %290 : vector<2x128xf32>
    %cst_43 = arith.constant 5.000000e-01 : f32
    %292 = vector.broadcast %cst_43 : f32 to vector<2x128xf32>
    %293 = arith.mulf %292, %291 : vector<2x128xf32>
    %cst_44 = arith.constant 5.000000e-01 : f32
    %294 = vector.broadcast %cst_44 : f32 to vector<2x128xf32>
    %295 = arith.addf %293, %294 : vector<2x128xf32>
    %296 = arith.mulf %288, %36 : vector<2x128xf32>
    %297 = arith.addf %281, %296 : vector<2x128xf32>
    %298 = math.tanh %297 : vector<2x128xf32>
    %299 = arith.subf %41, %298 : vector<2x128xf32>
    %300 = arith.mulf %295, %299 : vector<2x128xf32>
    %301 = arith.addf %300, %298 : vector<2x128xf32>
    %302 = vector.extract_strided_slice %233 {offsets = [0, 0], sizes = [2, 1], strides = [1, 1]} : vector<2x128xf32> to vector<2x1xf32>
    %303 = vector.shape_cast %302 : vector<2x1xf32> to vector<2x1xf32>
    %304 = vector.broadcast %303 : vector<2x1xf32> to vector<2x128xf32>
    %305 = vector.extract_strided_slice %233 {offsets = [0, 1], sizes = [2, 1], strides = [1, 1]} : vector<2x128xf32> to vector<2x1xf32>
    %306 = vector.shape_cast %305 : vector<2x1xf32> to vector<2x1xf32>
    %307 = vector.broadcast %306 : vector<2x1xf32> to vector<2x128xf32>
    %308 = vector.extract_strided_slice %233 {offsets = [0, 2], sizes = [2, 1], strides = [1, 1]} : vector<2x128xf32> to vector<2x1xf32>
    %309 = vector.shape_cast %308 : vector<2x1xf32> to vector<2x1xf32>
    %310 = vector.broadcast %309 : vector<2x1xf32> to vector<2x128xf32>
    %311 = vector.extract_strided_slice %233 {offsets = [0, 3], sizes = [2, 1], strides = [1, 1]} : vector<2x128xf32> to vector<2x1xf32>
    %312 = vector.shape_cast %311 : vector<2x1xf32> to vector<2x1xf32>
    %313 = vector.broadcast %312 : vector<2x1xf32> to vector<2x128xf32>
    %c0_45 = arith.constant 0 : index
    %c6_46 = arith.constant 6 : index
    %314 = vector.load %arg0[%c0_45, %c6_46] : memref<2x24xf32, #tpu.memory_space<vmem>>, vector<2x3xf32>
    %315 = vector.extract_strided_slice %314 {offsets = [0, 0], sizes = [2, 1], strides = [1, 1]} : vector<2x3xf32> to vector<2x1xf32>
    %316 = vector.shape_cast %315 : vector<2x1xf32> to vector<2x1xf32>
    %317 = vector.broadcast %316 : vector<2x1xf32> to vector<2x128xf32>
    %318 = vector.extract_strided_slice %314 {offsets = [0, 1], sizes = [2, 1], strides = [1, 1]} : vector<2x3xf32> to vector<2x1xf32>
    %319 = vector.shape_cast %318 : vector<2x1xf32> to vector<2x1xf32>
    %320 = vector.broadcast %319 : vector<2x1xf32> to vector<2x128xf32>
    %321 = vector.extract_strided_slice %314 {offsets = [0, 2], sizes = [2, 1], strides = [1, 1]} : vector<2x3xf32> to vector<2x1xf32>
    %322 = vector.shape_cast %321 : vector<2x1xf32> to vector<2x1xf32>
    %323 = vector.broadcast %322 : vector<2x1xf32> to vector<2x128xf32>
    %324 = vector.extract_strided_slice %0 {offsets = [0, 0], sizes = [1, 128], strides = [1, 1]} : vector<3x128xf32> to vector<1x128xf32>
    %325 = vector.broadcast %324 : vector<1x128xf32> to vector<2x128xf32>
    %326 = arith.mulf %317, %325 : vector<2x128xf32>
    %327 = arith.addf %15, %326 : vector<2x128xf32>
    %328 = vector.extract_strided_slice %1 {offsets = [0, 0], sizes = [1, 128], strides = [1, 1]} : vector<3x128xf32> to vector<1x128xf32>
    %329 = vector.broadcast %328 : vector<1x128xf32> to vector<2x128xf32>
    %330 = arith.mulf %317, %329 : vector<2x128xf32>
    %331 = arith.addf %18, %330 : vector<2x128xf32>
    %332 = vector.extract_strided_slice %2 {offsets = [0, 0], sizes = [1, 128], strides = [1, 1]} : vector<3x128xf32> to vector<1x128xf32>
    %333 = vector.broadcast %332 : vector<1x128xf32> to vector<2x128xf32>
    %334 = arith.mulf %317, %333 : vector<2x128xf32>
    %335 = arith.addf %21, %334 : vector<2x128xf32>
    %336 = vector.extract_strided_slice %0 {offsets = [1, 0], sizes = [1, 128], strides = [1, 1]} : vector<3x128xf32> to vector<1x128xf32>
    %337 = vector.broadcast %336 : vector<1x128xf32> to vector<2x128xf32>
    %338 = arith.mulf %320, %337 : vector<2x128xf32>
    %339 = arith.addf %327, %338 : vector<2x128xf32>
    %340 = vector.extract_strided_slice %1 {offsets = [1, 0], sizes = [1, 128], strides = [1, 1]} : vector<3x128xf32> to vector<1x128xf32>
    %341 = vector.broadcast %340 : vector<1x128xf32> to vector<2x128xf32>
    %342 = arith.mulf %320, %341 : vector<2x128xf32>
    %343 = arith.addf %331, %342 : vector<2x128xf32>
    %344 = vector.extract_strided_slice %2 {offsets = [1, 0], sizes = [1, 128], strides = [1, 1]} : vector<3x128xf32> to vector<1x128xf32>
    %345 = vector.broadcast %344 : vector<1x128xf32> to vector<2x128xf32>
    %346 = arith.mulf %320, %345 : vector<2x128xf32>
    %347 = arith.addf %335, %346 : vector<2x128xf32>
    %348 = vector.extract_strided_slice %0 {offsets = [2, 0], sizes = [1, 128], strides = [1, 1]} : vector<3x128xf32> to vector<1x128xf32>
    %349 = vector.broadcast %348 : vector<1x128xf32> to vector<2x128xf32>
    %350 = arith.mulf %323, %349 : vector<2x128xf32>
    %351 = arith.addf %339, %350 : vector<2x128xf32>
    %352 = vector.extract_strided_slice %1 {offsets = [2, 0], sizes = [1, 128], strides = [1, 1]} : vector<3x128xf32> to vector<1x128xf32>
    %353 = vector.broadcast %352 : vector<1x128xf32> to vector<2x128xf32>
    %354 = arith.mulf %323, %353 : vector<2x128xf32>
    %355 = arith.addf %343, %354 : vector<2x128xf32>
    %356 = vector.extract_strided_slice %2 {offsets = [2, 0], sizes = [1, 128], strides = [1, 1]} : vector<3x128xf32> to vector<1x128xf32>
    %357 = vector.broadcast %356 : vector<1x128xf32> to vector<2x128xf32>
    %358 = arith.mulf %323, %357 : vector<2x128xf32>
    %359 = arith.addf %347, %358 : vector<2x128xf32>
    %360 = vector.extract_strided_slice %3 {offsets = [0, 0], sizes = [1, 128], strides = [1, 1]} : vector<4x128xf32> to vector<1x128xf32>
    %361 = vector.broadcast %360 : vector<1x128xf32> to vector<2x128xf32>
    %362 = arith.mulf %304, %361 : vector<2x128xf32>
    %363 = arith.addf %351, %362 : vector<2x128xf32>
    %364 = vector.extract_strided_slice %4 {offsets = [0, 0], sizes = [1, 128], strides = [1, 1]} : vector<4x128xf32> to vector<1x128xf32>
    %365 = vector.broadcast %364 : vector<1x128xf32> to vector<2x128xf32>
    %366 = arith.mulf %304, %365 : vector<2x128xf32>
    %367 = arith.addf %355, %366 : vector<2x128xf32>
    %368 = vector.extract_strided_slice %5 {offsets = [0, 0], sizes = [1, 128], strides = [1, 1]} : vector<4x128xf32> to vector<1x128xf32>
    %369 = vector.broadcast %368 : vector<1x128xf32> to vector<2x128xf32>
    %370 = arith.mulf %304, %369 : vector<2x128xf32>
    %371 = arith.addf %24, %370 : vector<2x128xf32>
    %372 = vector.extract_strided_slice %3 {offsets = [1, 0], sizes = [1, 128], strides = [1, 1]} : vector<4x128xf32> to vector<1x128xf32>
    %373 = vector.broadcast %372 : vector<1x128xf32> to vector<2x128xf32>
    %374 = arith.mulf %307, %373 : vector<2x128xf32>
    %375 = arith.addf %363, %374 : vector<2x128xf32>
    %376 = vector.extract_strided_slice %4 {offsets = [1, 0], sizes = [1, 128], strides = [1, 1]} : vector<4x128xf32> to vector<1x128xf32>
    %377 = vector.broadcast %376 : vector<1x128xf32> to vector<2x128xf32>
    %378 = arith.mulf %307, %377 : vector<2x128xf32>
    %379 = arith.addf %367, %378 : vector<2x128xf32>
    %380 = vector.extract_strided_slice %5 {offsets = [1, 0], sizes = [1, 128], strides = [1, 1]} : vector<4x128xf32> to vector<1x128xf32>
    %381 = vector.broadcast %380 : vector<1x128xf32> to vector<2x128xf32>
    %382 = arith.mulf %307, %381 : vector<2x128xf32>
    %383 = arith.addf %371, %382 : vector<2x128xf32>
    %384 = vector.extract_strided_slice %3 {offsets = [2, 0], sizes = [1, 128], strides = [1, 1]} : vector<4x128xf32> to vector<1x128xf32>
    %385 = vector.broadcast %384 : vector<1x128xf32> to vector<2x128xf32>
    %386 = arith.mulf %310, %385 : vector<2x128xf32>
    %387 = arith.addf %375, %386 : vector<2x128xf32>
    %388 = vector.extract_strided_slice %4 {offsets = [2, 0], sizes = [1, 128], strides = [1, 1]} : vector<4x128xf32> to vector<1x128xf32>
    %389 = vector.broadcast %388 : vector<1x128xf32> to vector<2x128xf32>
    %390 = arith.mulf %310, %389 : vector<2x128xf32>
    %391 = arith.addf %379, %390 : vector<2x128xf32>
    %392 = vector.extract_strided_slice %5 {offsets = [2, 0], sizes = [1, 128], strides = [1, 1]} : vector<4x128xf32> to vector<1x128xf32>
    %393 = vector.broadcast %392 : vector<1x128xf32> to vector<2x128xf32>
    %394 = arith.mulf %310, %393 : vector<2x128xf32>
    %395 = arith.addf %383, %394 : vector<2x128xf32>
    %396 = vector.extract_strided_slice %3 {offsets = [3, 0], sizes = [1, 128], strides = [1, 1]} : vector<4x128xf32> to vector<1x128xf32>
    %397 = vector.broadcast %396 : vector<1x128xf32> to vector<2x128xf32>
    %398 = arith.mulf %313, %397 : vector<2x128xf32>
    %399 = arith.addf %387, %398 : vector<2x128xf32>
    %400 = vector.extract_strided_slice %4 {offsets = [3, 0], sizes = [1, 128], strides = [1, 1]} : vector<4x128xf32> to vector<1x128xf32>
    %401 = vector.broadcast %400 : vector<1x128xf32> to vector<2x128xf32>
    %402 = arith.mulf %313, %401 : vector<2x128xf32>
    %403 = arith.addf %391, %402 : vector<2x128xf32>
    %404 = vector.extract_strided_slice %5 {offsets = [3, 0], sizes = [1, 128], strides = [1, 1]} : vector<4x128xf32> to vector<1x128xf32>
    %405 = vector.broadcast %404 : vector<1x128xf32> to vector<2x128xf32>
    %406 = arith.mulf %313, %405 : vector<2x128xf32>
    %407 = arith.addf %395, %406 : vector<2x128xf32>
    %cst_47 = arith.constant 5.000000e-01 : f32
    %408 = vector.broadcast %cst_47 : f32 to vector<2x128xf32>
    %409 = arith.mulf %408, %399 : vector<2x128xf32>
    %410 = math.tanh %409 : vector<2x128xf32>
    %cst_48 = arith.constant 5.000000e-01 : f32
    %411 = vector.broadcast %cst_48 : f32 to vector<2x128xf32>
    %412 = arith.mulf %411, %410 : vector<2x128xf32>
    %cst_49 = arith.constant 5.000000e-01 : f32
    %413 = vector.broadcast %cst_49 : f32 to vector<2x128xf32>
    %414 = arith.addf %412, %413 : vector<2x128xf32>
    %cst_50 = arith.constant 5.000000e-01 : f32
    %415 = vector.broadcast %cst_50 : f32 to vector<2x128xf32>
    %416 = arith.mulf %415, %403 : vector<2x128xf32>
    %417 = math.tanh %416 : vector<2x128xf32>
    %cst_51 = arith.constant 5.000000e-01 : f32
    %418 = vector.broadcast %cst_51 : f32 to vector<2x128xf32>
    %419 = arith.mulf %418, %417 : vector<2x128xf32>
    %cst_52 = arith.constant 5.000000e-01 : f32
    %420 = vector.broadcast %cst_52 : f32 to vector<2x128xf32>
    %421 = arith.addf %419, %420 : vector<2x128xf32>
    %422 = arith.mulf %414, %407 : vector<2x128xf32>
    %423 = arith.addf %359, %422 : vector<2x128xf32>
    %424 = math.tanh %423 : vector<2x128xf32>
    %425 = arith.subf %233, %424 : vector<2x128xf32>
    %426 = arith.mulf %421, %425 : vector<2x128xf32>
    %427 = arith.addf %426, %424 : vector<2x128xf32>
    %428 = vector.extract_strided_slice %6 {offsets = [0, 0], sizes = [1, 128], strides = [1, 1]} : vector<4x128xf32> to vector<1x128xf32>
    %429 = vector.broadcast %428 : vector<1x128xf32> to vector<2x128xf32>
    %430 = arith.mulf %304, %429 : vector<2x128xf32>
    %431 = arith.addf %27, %430 : vector<2x128xf32>
    %432 = vector.extract_strided_slice %7 {offsets = [0, 0], sizes = [1, 128], strides = [1, 1]} : vector<4x128xf32> to vector<1x128xf32>
    %433 = vector.broadcast %432 : vector<1x128xf32> to vector<2x128xf32>
    %434 = arith.mulf %304, %433 : vector<2x128xf32>
    %435 = arith.addf %30, %434 : vector<2x128xf32>
    %436 = vector.extract_strided_slice %8 {offsets = [0, 0], sizes = [1, 128], strides = [1, 1]} : vector<4x128xf32> to vector<1x128xf32>
    %437 = vector.broadcast %436 : vector<1x128xf32> to vector<2x128xf32>
    %438 = arith.mulf %304, %437 : vector<2x128xf32>
    %439 = arith.addf %33, %438 : vector<2x128xf32>
    %440 = vector.extract_strided_slice %6 {offsets = [1, 0], sizes = [1, 128], strides = [1, 1]} : vector<4x128xf32> to vector<1x128xf32>
    %441 = vector.broadcast %440 : vector<1x128xf32> to vector<2x128xf32>
    %442 = arith.mulf %307, %441 : vector<2x128xf32>
    %443 = arith.addf %431, %442 : vector<2x128xf32>
    %444 = vector.extract_strided_slice %7 {offsets = [1, 0], sizes = [1, 128], strides = [1, 1]} : vector<4x128xf32> to vector<1x128xf32>
    %445 = vector.broadcast %444 : vector<1x128xf32> to vector<2x128xf32>
    %446 = arith.mulf %307, %445 : vector<2x128xf32>
    %447 = arith.addf %435, %446 : vector<2x128xf32>
    %448 = vector.extract_strided_slice %8 {offsets = [1, 0], sizes = [1, 128], strides = [1, 1]} : vector<4x128xf32> to vector<1x128xf32>
    %449 = vector.broadcast %448 : vector<1x128xf32> to vector<2x128xf32>
    %450 = arith.mulf %307, %449 : vector<2x128xf32>
    %451 = arith.addf %439, %450 : vector<2x128xf32>
    %452 = vector.extract_strided_slice %6 {offsets = [2, 0], sizes = [1, 128], strides = [1, 1]} : vector<4x128xf32> to vector<1x128xf32>
    %453 = vector.broadcast %452 : vector<1x128xf32> to vector<2x128xf32>
    %454 = arith.mulf %310, %453 : vector<2x128xf32>
    %455 = arith.addf %443, %454 : vector<2x128xf32>
    %456 = vector.extract_strided_slice %7 {offsets = [2, 0], sizes = [1, 128], strides = [1, 1]} : vector<4x128xf32> to vector<1x128xf32>
    %457 = vector.broadcast %456 : vector<1x128xf32> to vector<2x128xf32>
    %458 = arith.mulf %310, %457 : vector<2x128xf32>
    %459 = arith.addf %447, %458 : vector<2x128xf32>
    %460 = vector.extract_strided_slice %8 {offsets = [2, 0], sizes = [1, 128], strides = [1, 1]} : vector<4x128xf32> to vector<1x128xf32>
    %461 = vector.broadcast %460 : vector<1x128xf32> to vector<2x128xf32>
    %462 = arith.mulf %310, %461 : vector<2x128xf32>
    %463 = arith.addf %451, %462 : vector<2x128xf32>
    %464 = vector.extract_strided_slice %6 {offsets = [3, 0], sizes = [1, 128], strides = [1, 1]} : vector<4x128xf32> to vector<1x128xf32>
    %465 = vector.broadcast %464 : vector<1x128xf32> to vector<2x128xf32>
    %466 = arith.mulf %313, %465 : vector<2x128xf32>
    %467 = arith.addf %455, %466 : vector<2x128xf32>
    %468 = vector.extract_strided_slice %7 {offsets = [3, 0], sizes = [1, 128], strides = [1, 1]} : vector<4x128xf32> to vector<1x128xf32>
    %469 = vector.broadcast %468 : vector<1x128xf32> to vector<2x128xf32>
    %470 = arith.mulf %313, %469 : vector<2x128xf32>
    %471 = arith.addf %459, %470 : vector<2x128xf32>
    %472 = vector.extract_strided_slice %8 {offsets = [3, 0], sizes = [1, 128], strides = [1, 1]} : vector<4x128xf32> to vector<1x128xf32>
    %473 = vector.broadcast %472 : vector<1x128xf32> to vector<2x128xf32>
    %474 = arith.mulf %313, %473 : vector<2x128xf32>
    %475 = arith.addf %463, %474 : vector<2x128xf32>
    %476 = vector.extract_strided_slice %301 {offsets = [0, 0], sizes = [2, 1], strides = [1, 1]} : vector<2x128xf32> to vector<2x1xf32>
    %477 = vector.shape_cast %476 : vector<2x1xf32> to vector<2x1xf32>
    %478 = vector.broadcast %477 : vector<2x1xf32> to vector<2x128xf32>
    %479 = vector.extract_strided_slice %301 {offsets = [0, 1], sizes = [2, 1], strides = [1, 1]} : vector<2x128xf32> to vector<2x1xf32>
    %480 = vector.shape_cast %479 : vector<2x1xf32> to vector<2x1xf32>
    %481 = vector.broadcast %480 : vector<2x1xf32> to vector<2x128xf32>
    %482 = vector.extract_strided_slice %301 {offsets = [0, 2], sizes = [2, 1], strides = [1, 1]} : vector<2x128xf32> to vector<2x1xf32>
    %483 = vector.shape_cast %482 : vector<2x1xf32> to vector<2x1xf32>
    %484 = vector.broadcast %483 : vector<2x1xf32> to vector<2x128xf32>
    %485 = vector.extract_strided_slice %301 {offsets = [0, 3], sizes = [2, 1], strides = [1, 1]} : vector<2x128xf32> to vector<2x1xf32>
    %486 = vector.shape_cast %485 : vector<2x1xf32> to vector<2x1xf32>
    %487 = vector.broadcast %486 : vector<2x1xf32> to vector<2x128xf32>
    %488 = vector.extract_strided_slice %9 {offsets = [0, 0], sizes = [1, 128], strides = [1, 1]} : vector<4x128xf32> to vector<1x128xf32>
    %489 = vector.broadcast %488 : vector<1x128xf32> to vector<2x128xf32>
    %490 = arith.mulf %478, %489 : vector<2x128xf32>
    %491 = arith.addf %467, %490 : vector<2x128xf32>
    %492 = vector.extract_strided_slice %10 {offsets = [0, 0], sizes = [1, 128], strides = [1, 1]} : vector<4x128xf32> to vector<1x128xf32>
    %493 = vector.broadcast %492 : vector<1x128xf32> to vector<2x128xf32>
    %494 = arith.mulf %478, %493 : vector<2x128xf32>
    %495 = arith.addf %471, %494 : vector<2x128xf32>
    %496 = vector.extract_strided_slice %11 {offsets = [0, 0], sizes = [1, 128], strides = [1, 1]} : vector<4x128xf32> to vector<1x128xf32>
    %497 = vector.broadcast %496 : vector<1x128xf32> to vector<2x128xf32>
    %498 = arith.mulf %478, %497 : vector<2x128xf32>
    %499 = arith.addf %36, %498 : vector<2x128xf32>
    %500 = vector.extract_strided_slice %9 {offsets = [1, 0], sizes = [1, 128], strides = [1, 1]} : vector<4x128xf32> to vector<1x128xf32>
    %501 = vector.broadcast %500 : vector<1x128xf32> to vector<2x128xf32>
    %502 = arith.mulf %481, %501 : vector<2x128xf32>
    %503 = arith.addf %491, %502 : vector<2x128xf32>
    %504 = vector.extract_strided_slice %10 {offsets = [1, 0], sizes = [1, 128], strides = [1, 1]} : vector<4x128xf32> to vector<1x128xf32>
    %505 = vector.broadcast %504 : vector<1x128xf32> to vector<2x128xf32>
    %506 = arith.mulf %481, %505 : vector<2x128xf32>
    %507 = arith.addf %495, %506 : vector<2x128xf32>
    %508 = vector.extract_strided_slice %11 {offsets = [1, 0], sizes = [1, 128], strides = [1, 1]} : vector<4x128xf32> to vector<1x128xf32>
    %509 = vector.broadcast %508 : vector<1x128xf32> to vector<2x128xf32>
    %510 = arith.mulf %481, %509 : vector<2x128xf32>
    %511 = arith.addf %499, %510 : vector<2x128xf32>
    %512 = vector.extract_strided_slice %9 {offsets = [2, 0], sizes = [1, 128], strides = [1, 1]} : vector<4x128xf32> to vector<1x128xf32>
    %513 = vector.broadcast %512 : vector<1x128xf32> to vector<2x128xf32>
    %514 = arith.mulf %484, %513 : vector<2x128xf32>
    %515 = arith.addf %503, %514 : vector<2x128xf32>
    %516 = vector.extract_strided_slice %10 {offsets = [2, 0], sizes = [1, 128], strides = [1, 1]} : vector<4x128xf32> to vector<1x128xf32>
    %517 = vector.broadcast %516 : vector<1x128xf32> to vector<2x128xf32>
    %518 = arith.mulf %484, %517 : vector<2x128xf32>
    %519 = arith.addf %507, %518 : vector<2x128xf32>
    %520 = vector.extract_strided_slice %11 {offsets = [2, 0], sizes = [1, 128], strides = [1, 1]} : vector<4x128xf32> to vector<1x128xf32>
    %521 = vector.broadcast %520 : vector<1x128xf32> to vector<2x128xf32>
    %522 = arith.mulf %484, %521 : vector<2x128xf32>
    %523 = arith.addf %511, %522 : vector<2x128xf32>
    %524 = vector.extract_strided_slice %9 {offsets = [3, 0], sizes = [1, 128], strides = [1, 1]} : vector<4x128xf32> to vector<1x128xf32>
    %525 = vector.broadcast %524 : vector<1x128xf32> to vector<2x128xf32>
    %526 = arith.mulf %487, %525 : vector<2x128xf32>
    %527 = arith.addf %515, %526 : vector<2x128xf32>
    %528 = vector.extract_strided_slice %10 {offsets = [3, 0], sizes = [1, 128], strides = [1, 1]} : vector<4x128xf32> to vector<1x128xf32>
    %529 = vector.broadcast %528 : vector<1x128xf32> to vector<2x128xf32>
    %530 = arith.mulf %487, %529 : vector<2x128xf32>
    %531 = arith.addf %519, %530 : vector<2x128xf32>
    %532 = vector.extract_strided_slice %11 {offsets = [3, 0], sizes = [1, 128], strides = [1, 1]} : vector<4x128xf32> to vector<1x128xf32>
    %533 = vector.broadcast %532 : vector<1x128xf32> to vector<2x128xf32>
    %534 = arith.mulf %487, %533 : vector<2x128xf32>
    %535 = arith.addf %523, %534 : vector<2x128xf32>
    %cst_53 = arith.constant 5.000000e-01 : f32
    %536 = vector.broadcast %cst_53 : f32 to vector<2x128xf32>
    %537 = arith.mulf %536, %527 : vector<2x128xf32>
    %538 = math.tanh %537 : vector<2x128xf32>
    %cst_54 = arith.constant 5.000000e-01 : f32
    %539 = vector.broadcast %cst_54 : f32 to vector<2x128xf32>
    %540 = arith.mulf %539, %538 : vector<2x128xf32>
    %cst_55 = arith.constant 5.000000e-01 : f32
    %541 = vector.broadcast %cst_55 : f32 to vector<2x128xf32>
    %542 = arith.addf %540, %541 : vector<2x128xf32>
    %cst_56 = arith.constant 5.000000e-01 : f32
    %543 = vector.broadcast %cst_56 : f32 to vector<2x128xf32>
    %544 = arith.mulf %543, %531 : vector<2x128xf32>
    %545 = math.tanh %544 : vector<2x128xf32>
    %cst_57 = arith.constant 5.000000e-01 : f32
    %546 = vector.broadcast %cst_57 : f32 to vector<2x128xf32>
    %547 = arith.mulf %546, %545 : vector<2x128xf32>
    %cst_58 = arith.constant 5.000000e-01 : f32
    %548 = vector.broadcast %cst_58 : f32 to vector<2x128xf32>
    %549 = arith.addf %547, %548 : vector<2x128xf32>
    %550 = arith.mulf %542, %535 : vector<2x128xf32>
    %551 = arith.addf %475, %550 : vector<2x128xf32>
    %552 = math.tanh %551 : vector<2x128xf32>
    %553 = arith.subf %301, %552 : vector<2x128xf32>
    %554 = arith.mulf %549, %553 : vector<2x128xf32>
    %555 = arith.addf %554, %552 : vector<2x128xf32>
    %556 = vector.extract_strided_slice %427 {offsets = [0, 0], sizes = [2, 1], strides = [1, 1]} : vector<2x128xf32> to vector<2x1xf32>
    %557 = vector.shape_cast %556 : vector<2x1xf32> to vector<2x1xf32>
    %558 = vector.broadcast %557 : vector<2x1xf32> to vector<2x128xf32>
    %559 = vector.extract_strided_slice %427 {offsets = [0, 1], sizes = [2, 1], strides = [1, 1]} : vector<2x128xf32> to vector<2x1xf32>
    %560 = vector.shape_cast %559 : vector<2x1xf32> to vector<2x1xf32>
    %561 = vector.broadcast %560 : vector<2x1xf32> to vector<2x128xf32>
    %562 = vector.extract_strided_slice %427 {offsets = [0, 2], sizes = [2, 1], strides = [1, 1]} : vector<2x128xf32> to vector<2x1xf32>
    %563 = vector.shape_cast %562 : vector<2x1xf32> to vector<2x1xf32>
    %564 = vector.broadcast %563 : vector<2x1xf32> to vector<2x128xf32>
    %565 = vector.extract_strided_slice %427 {offsets = [0, 3], sizes = [2, 1], strides = [1, 1]} : vector<2x128xf32> to vector<2x1xf32>
    %566 = vector.shape_cast %565 : vector<2x1xf32> to vector<2x1xf32>
    %567 = vector.broadcast %566 : vector<2x1xf32> to vector<2x128xf32>
    %c0_59 = arith.constant 0 : index
    %c9_60 = arith.constant 9 : index
    %568 = vector.load %arg0[%c0_59, %c9_60] : memref<2x24xf32, #tpu.memory_space<vmem>>, vector<2x3xf32>
    %569 = vector.extract_strided_slice %568 {offsets = [0, 0], sizes = [2, 1], strides = [1, 1]} : vector<2x3xf32> to vector<2x1xf32>
    %570 = vector.shape_cast %569 : vector<2x1xf32> to vector<2x1xf32>
    %571 = vector.broadcast %570 : vector<2x1xf32> to vector<2x128xf32>
    %572 = vector.extract_strided_slice %568 {offsets = [0, 1], sizes = [2, 1], strides = [1, 1]} : vector<2x3xf32> to vector<2x1xf32>
    %573 = vector.shape_cast %572 : vector<2x1xf32> to vector<2x1xf32>
    %574 = vector.broadcast %573 : vector<2x1xf32> to vector<2x128xf32>
    %575 = vector.extract_strided_slice %568 {offsets = [0, 2], sizes = [2, 1], strides = [1, 1]} : vector<2x3xf32> to vector<2x1xf32>
    %576 = vector.shape_cast %575 : vector<2x1xf32> to vector<2x1xf32>
    %577 = vector.broadcast %576 : vector<2x1xf32> to vector<2x128xf32>
    %578 = vector.extract_strided_slice %0 {offsets = [0, 0], sizes = [1, 128], strides = [1, 1]} : vector<3x128xf32> to vector<1x128xf32>
    %579 = vector.broadcast %578 : vector<1x128xf32> to vector<2x128xf32>
    %580 = arith.mulf %571, %579 : vector<2x128xf32>
    %581 = arith.addf %15, %580 : vector<2x128xf32>
    %582 = vector.extract_strided_slice %1 {offsets = [0, 0], sizes = [1, 128], strides = [1, 1]} : vector<3x128xf32> to vector<1x128xf32>
    %583 = vector.broadcast %582 : vector<1x128xf32> to vector<2x128xf32>
    %584 = arith.mulf %571, %583 : vector<2x128xf32>
    %585 = arith.addf %18, %584 : vector<2x128xf32>
    %586 = vector.extract_strided_slice %2 {offsets = [0, 0], sizes = [1, 128], strides = [1, 1]} : vector<3x128xf32> to vector<1x128xf32>
    %587 = vector.broadcast %586 : vector<1x128xf32> to vector<2x128xf32>
    %588 = arith.mulf %571, %587 : vector<2x128xf32>
    %589 = arith.addf %21, %588 : vector<2x128xf32>
    %590 = vector.extract_strided_slice %0 {offsets = [1, 0], sizes = [1, 128], strides = [1, 1]} : vector<3x128xf32> to vector<1x128xf32>
    %591 = vector.broadcast %590 : vector<1x128xf32> to vector<2x128xf32>
    %592 = arith.mulf %574, %591 : vector<2x128xf32>
    %593 = arith.addf %581, %592 : vector<2x128xf32>
    %594 = vector.extract_strided_slice %1 {offsets = [1, 0], sizes = [1, 128], strides = [1, 1]} : vector<3x128xf32> to vector<1x128xf32>
    %595 = vector.broadcast %594 : vector<1x128xf32> to vector<2x128xf32>
    %596 = arith.mulf %574, %595 : vector<2x128xf32>
    %597 = arith.addf %585, %596 : vector<2x128xf32>
    %598 = vector.extract_strided_slice %2 {offsets = [1, 0], sizes = [1, 128], strides = [1, 1]} : vector<3x128xf32> to vector<1x128xf32>
    %599 = vector.broadcast %598 : vector<1x128xf32> to vector<2x128xf32>
    %600 = arith.mulf %574, %599 : vector<2x128xf32>
    %601 = arith.addf %589, %600 : vector<2x128xf32>
    %602 = vector.extract_strided_slice %0 {offsets = [2, 0], sizes = [1, 128], strides = [1, 1]} : vector<3x128xf32> to vector<1x128xf32>
    %603 = vector.broadcast %602 : vector<1x128xf32> to vector<2x128xf32>
    %604 = arith.mulf %577, %603 : vector<2x128xf32>
    %605 = arith.addf %593, %604 : vector<2x128xf32>
    %606 = vector.extract_strided_slice %1 {offsets = [2, 0], sizes = [1, 128], strides = [1, 1]} : vector<3x128xf32> to vector<1x128xf32>
    %607 = vector.broadcast %606 : vector<1x128xf32> to vector<2x128xf32>
    %608 = arith.mulf %577, %607 : vector<2x128xf32>
    %609 = arith.addf %597, %608 : vector<2x128xf32>
    %610 = vector.extract_strided_slice %2 {offsets = [2, 0], sizes = [1, 128], strides = [1, 1]} : vector<3x128xf32> to vector<1x128xf32>
    %611 = vector.broadcast %610 : vector<1x128xf32> to vector<2x128xf32>
    %612 = arith.mulf %577, %611 : vector<2x128xf32>
    %613 = arith.addf %601, %612 : vector<2x128xf32>
    %614 = vector.extract_strided_slice %3 {offsets = [0, 0], sizes = [1, 128], strides = [1, 1]} : vector<4x128xf32> to vector<1x128xf32>
    %615 = vector.broadcast %614 : vector<1x128xf32> to vector<2x128xf32>
    %616 = arith.mulf %558, %615 : vector<2x128xf32>
    %617 = arith.addf %605, %616 : vector<2x128xf32>
    %618 = vector.extract_strided_slice %4 {offsets = [0, 0], sizes = [1, 128], strides = [1, 1]} : vector<4x128xf32> to vector<1x128xf32>
    %619 = vector.broadcast %618 : vector<1x128xf32> to vector<2x128xf32>
    %620 = arith.mulf %558, %619 : vector<2x128xf32>
    %621 = arith.addf %609, %620 : vector<2x128xf32>
    %622 = vector.extract_strided_slice %5 {offsets = [0, 0], sizes = [1, 128], strides = [1, 1]} : vector<4x128xf32> to vector<1x128xf32>
    %623 = vector.broadcast %622 : vector<1x128xf32> to vector<2x128xf32>
    %624 = arith.mulf %558, %623 : vector<2x128xf32>
    %625 = arith.addf %24, %624 : vector<2x128xf32>
    %626 = vector.extract_strided_slice %3 {offsets = [1, 0], sizes = [1, 128], strides = [1, 1]} : vector<4x128xf32> to vector<1x128xf32>
    %627 = vector.broadcast %626 : vector<1x128xf32> to vector<2x128xf32>
    %628 = arith.mulf %561, %627 : vector<2x128xf32>
    %629 = arith.addf %617, %628 : vector<2x128xf32>
    %630 = vector.extract_strided_slice %4 {offsets = [1, 0], sizes = [1, 128], strides = [1, 1]} : vector<4x128xf32> to vector<1x128xf32>
    %631 = vector.broadcast %630 : vector<1x128xf32> to vector<2x128xf32>
    %632 = arith.mulf %561, %631 : vector<2x128xf32>
    %633 = arith.addf %621, %632 : vector<2x128xf32>
    %634 = vector.extract_strided_slice %5 {offsets = [1, 0], sizes = [1, 128], strides = [1, 1]} : vector<4x128xf32> to vector<1x128xf32>
    %635 = vector.broadcast %634 : vector<1x128xf32> to vector<2x128xf32>
    %636 = arith.mulf %561, %635 : vector<2x128xf32>
    %637 = arith.addf %625, %636 : vector<2x128xf32>
    %638 = vector.extract_strided_slice %3 {offsets = [2, 0], sizes = [1, 128], strides = [1, 1]} : vector<4x128xf32> to vector<1x128xf32>
    %639 = vector.broadcast %638 : vector<1x128xf32> to vector<2x128xf32>
    %640 = arith.mulf %564, %639 : vector<2x128xf32>
    %641 = arith.addf %629, %640 : vector<2x128xf32>
    %642 = vector.extract_strided_slice %4 {offsets = [2, 0], sizes = [1, 128], strides = [1, 1]} : vector<4x128xf32> to vector<1x128xf32>
    %643 = vector.broadcast %642 : vector<1x128xf32> to vector<2x128xf32>
    %644 = arith.mulf %564, %643 : vector<2x128xf32>
    %645 = arith.addf %633, %644 : vector<2x128xf32>
    %646 = vector.extract_strided_slice %5 {offsets = [2, 0], sizes = [1, 128], strides = [1, 1]} : vector<4x128xf32> to vector<1x128xf32>
    %647 = vector.broadcast %646 : vector<1x128xf32> to vector<2x128xf32>
    %648 = arith.mulf %564, %647 : vector<2x128xf32>
    %649 = arith.addf %637, %648 : vector<2x128xf32>
    %650 = vector.extract_strided_slice %3 {offsets = [3, 0], sizes = [1, 128], strides = [1, 1]} : vector<4x128xf32> to vector<1x128xf32>
    %651 = vector.broadcast %650 : vector<1x128xf32> to vector<2x128xf32>
    %652 = arith.mulf %567, %651 : vector<2x128xf32>
    %653 = arith.addf %641, %652 : vector<2x128xf32>
    %654 = vector.extract_strided_slice %4 {offsets = [3, 0], sizes = [1, 128], strides = [1, 1]} : vector<4x128xf32> to vector<1x128xf32>
    %655 = vector.broadcast %654 : vector<1x128xf32> to vector<2x128xf32>
    %656 = arith.mulf %567, %655 : vector<2x128xf32>
    %657 = arith.addf %645, %656 : vector<2x128xf32>
    %658 = vector.extract_strided_slice %5 {offsets = [3, 0], sizes = [1, 128], strides = [1, 1]} : vector<4x128xf32> to vector<1x128xf32>
    %659 = vector.broadcast %658 : vector<1x128xf32> to vector<2x128xf32>
    %660 = arith.mulf %567, %659 : vector<2x128xf32>
    %661 = arith.addf %649, %660 : vector<2x128xf32>
    %cst_61 = arith.constant 5.000000e-01 : f32
    %662 = vector.broadcast %cst_61 : f32 to vector<2x128xf32>
    %663 = arith.mulf %662, %653 : vector<2x128xf32>
    %664 = math.tanh %663 : vector<2x128xf32>
    %cst_62 = arith.constant 5.000000e-01 : f32
    %665 = vector.broadcast %cst_62 : f32 to vector<2x128xf32>
    %666 = arith.mulf %665, %664 : vector<2x128xf32>
    %cst_63 = arith.constant 5.000000e-01 : f32
    %667 = vector.broadcast %cst_63 : f32 to vector<2x128xf32>
    %668 = arith.addf %666, %667 : vector<2x128xf32>
    %cst_64 = arith.constant 5.000000e-01 : f32
    %669 = vector.broadcast %cst_64 : f32 to vector<2x128xf32>
    %670 = arith.mulf %669, %657 : vector<2x128xf32>
    %671 = math.tanh %670 : vector<2x128xf32>
    %cst_65 = arith.constant 5.000000e-01 : f32
    %672 = vector.broadcast %cst_65 : f32 to vector<2x128xf32>
    %673 = arith.mulf %672, %671 : vector<2x128xf32>
    %cst_66 = arith.constant 5.000000e-01 : f32
    %674 = vector.broadcast %cst_66 : f32 to vector<2x128xf32>
    %675 = arith.addf %673, %674 : vector<2x128xf32>
    %676 = arith.mulf %668, %661 : vector<2x128xf32>
    %677 = arith.addf %613, %676 : vector<2x128xf32>
    %678 = math.tanh %677 : vector<2x128xf32>
    %679 = arith.subf %427, %678 : vector<2x128xf32>
    %680 = arith.mulf %675, %679 : vector<2x128xf32>
    %681 = arith.addf %680, %678 : vector<2x128xf32>
    %682 = vector.extract_strided_slice %6 {offsets = [0, 0], sizes = [1, 128], strides = [1, 1]} : vector<4x128xf32> to vector<1x128xf32>
    %683 = vector.broadcast %682 : vector<1x128xf32> to vector<2x128xf32>
    %684 = arith.mulf %558, %683 : vector<2x128xf32>
    %685 = arith.addf %27, %684 : vector<2x128xf32>
    %686 = vector.extract_strided_slice %7 {offsets = [0, 0], sizes = [1, 128], strides = [1, 1]} : vector<4x128xf32> to vector<1x128xf32>
    %687 = vector.broadcast %686 : vector<1x128xf32> to vector<2x128xf32>
    %688 = arith.mulf %558, %687 : vector<2x128xf32>
    %689 = arith.addf %30, %688 : vector<2x128xf32>
    %690 = vector.extract_strided_slice %8 {offsets = [0, 0], sizes = [1, 128], strides = [1, 1]} : vector<4x128xf32> to vector<1x128xf32>
    %691 = vector.broadcast %690 : vector<1x128xf32> to vector<2x128xf32>
    %692 = arith.mulf %558, %691 : vector<2x128xf32>
    %693 = arith.addf %33, %692 : vector<2x128xf32>
    %694 = vector.extract_strided_slice %6 {offsets = [1, 0], sizes = [1, 128], strides = [1, 1]} : vector<4x128xf32> to vector<1x128xf32>
    %695 = vector.broadcast %694 : vector<1x128xf32> to vector<2x128xf32>
    %696 = arith.mulf %561, %695 : vector<2x128xf32>
    %697 = arith.addf %685, %696 : vector<2x128xf32>
    %698 = vector.extract_strided_slice %7 {offsets = [1, 0], sizes = [1, 128], strides = [1, 1]} : vector<4x128xf32> to vector<1x128xf32>
    %699 = vector.broadcast %698 : vector<1x128xf32> to vector<2x128xf32>
    %700 = arith.mulf %561, %699 : vector<2x128xf32>
    %701 = arith.addf %689, %700 : vector<2x128xf32>
    %702 = vector.extract_strided_slice %8 {offsets = [1, 0], sizes = [1, 128], strides = [1, 1]} : vector<4x128xf32> to vector<1x128xf32>
    %703 = vector.broadcast %702 : vector<1x128xf32> to vector<2x128xf32>
    %704 = arith.mulf %561, %703 : vector<2x128xf32>
    %705 = arith.addf %693, %704 : vector<2x128xf32>
    %706 = vector.extract_strided_slice %6 {offsets = [2, 0], sizes = [1, 128], strides = [1, 1]} : vector<4x128xf32> to vector<1x128xf32>
    %707 = vector.broadcast %706 : vector<1x128xf32> to vector<2x128xf32>
    %708 = arith.mulf %564, %707 : vector<2x128xf32>
    %709 = arith.addf %697, %708 : vector<2x128xf32>
    %710 = vector.extract_strided_slice %7 {offsets = [2, 0], sizes = [1, 128], strides = [1, 1]} : vector<4x128xf32> to vector<1x128xf32>
    %711 = vector.broadcast %710 : vector<1x128xf32> to vector<2x128xf32>
    %712 = arith.mulf %564, %711 : vector<2x128xf32>
    %713 = arith.addf %701, %712 : vector<2x128xf32>
    %714 = vector.extract_strided_slice %8 {offsets = [2, 0], sizes = [1, 128], strides = [1, 1]} : vector<4x128xf32> to vector<1x128xf32>
    %715 = vector.broadcast %714 : vector<1x128xf32> to vector<2x128xf32>
    %716 = arith.mulf %564, %715 : vector<2x128xf32>
    %717 = arith.addf %705, %716 : vector<2x128xf32>
    %718 = vector.extract_strided_slice %6 {offsets = [3, 0], sizes = [1, 128], strides = [1, 1]} : vector<4x128xf32> to vector<1x128xf32>
    %719 = vector.broadcast %718 : vector<1x128xf32> to vector<2x128xf32>
    %720 = arith.mulf %567, %719 : vector<2x128xf32>
    %721 = arith.addf %709, %720 : vector<2x128xf32>
    %722 = vector.extract_strided_slice %7 {offsets = [3, 0], sizes = [1, 128], strides = [1, 1]} : vector<4x128xf32> to vector<1x128xf32>
    %723 = vector.broadcast %722 : vector<1x128xf32> to vector<2x128xf32>
    %724 = arith.mulf %567, %723 : vector<2x128xf32>
    %725 = arith.addf %713, %724 : vector<2x128xf32>
    %726 = vector.extract_strided_slice %8 {offsets = [3, 0], sizes = [1, 128], strides = [1, 1]} : vector<4x128xf32> to vector<1x128xf32>
    %727 = vector.broadcast %726 : vector<1x128xf32> to vector<2x128xf32>
    %728 = arith.mulf %567, %727 : vector<2x128xf32>
    %729 = arith.addf %717, %728 : vector<2x128xf32>
    %730 = vector.extract_strided_slice %555 {offsets = [0, 0], sizes = [2, 1], strides = [1, 1]} : vector<2x128xf32> to vector<2x1xf32>
    %731 = vector.shape_cast %730 : vector<2x1xf32> to vector<2x1xf32>
    %732 = vector.broadcast %731 : vector<2x1xf32> to vector<2x128xf32>
    %733 = vector.extract_strided_slice %555 {offsets = [0, 1], sizes = [2, 1], strides = [1, 1]} : vector<2x128xf32> to vector<2x1xf32>
    %734 = vector.shape_cast %733 : vector<2x1xf32> to vector<2x1xf32>
    %735 = vector.broadcast %734 : vector<2x1xf32> to vector<2x128xf32>
    %736 = vector.extract_strided_slice %555 {offsets = [0, 2], sizes = [2, 1], strides = [1, 1]} : vector<2x128xf32> to vector<2x1xf32>
    %737 = vector.shape_cast %736 : vector<2x1xf32> to vector<2x1xf32>
    %738 = vector.broadcast %737 : vector<2x1xf32> to vector<2x128xf32>
    %739 = vector.extract_strided_slice %555 {offsets = [0, 3], sizes = [2, 1], strides = [1, 1]} : vector<2x128xf32> to vector<2x1xf32>
    %740 = vector.shape_cast %739 : vector<2x1xf32> to vector<2x1xf32>
    %741 = vector.broadcast %740 : vector<2x1xf32> to vector<2x128xf32>
    %742 = vector.extract_strided_slice %9 {offsets = [0, 0], sizes = [1, 128], strides = [1, 1]} : vector<4x128xf32> to vector<1x128xf32>
    %743 = vector.broadcast %742 : vector<1x128xf32> to vector<2x128xf32>
    %744 = arith.mulf %732, %743 : vector<2x128xf32>
    %745 = arith.addf %721, %744 : vector<2x128xf32>
    %746 = vector.extract_strided_slice %10 {offsets = [0, 0], sizes = [1, 128], strides = [1, 1]} : vector<4x128xf32> to vector<1x128xf32>
    %747 = vector.broadcast %746 : vector<1x128xf32> to vector<2x128xf32>
    %748 = arith.mulf %732, %747 : vector<2x128xf32>
    %749 = arith.addf %725, %748 : vector<2x128xf32>
    %750 = vector.extract_strided_slice %11 {offsets = [0, 0], sizes = [1, 128], strides = [1, 1]} : vector<4x128xf32> to vector<1x128xf32>
    %751 = vector.broadcast %750 : vector<1x128xf32> to vector<2x128xf32>
    %752 = arith.mulf %732, %751 : vector<2x128xf32>
    %753 = arith.addf %36, %752 : vector<2x128xf32>
    %754 = vector.extract_strided_slice %9 {offsets = [1, 0], sizes = [1, 128], strides = [1, 1]} : vector<4x128xf32> to vector<1x128xf32>
    %755 = vector.broadcast %754 : vector<1x128xf32> to vector<2x128xf32>
    %756 = arith.mulf %735, %755 : vector<2x128xf32>
    %757 = arith.addf %745, %756 : vector<2x128xf32>
    %758 = vector.extract_strided_slice %10 {offsets = [1, 0], sizes = [1, 128], strides = [1, 1]} : vector<4x128xf32> to vector<1x128xf32>
    %759 = vector.broadcast %758 : vector<1x128xf32> to vector<2x128xf32>
    %760 = arith.mulf %735, %759 : vector<2x128xf32>
    %761 = arith.addf %749, %760 : vector<2x128xf32>
    %762 = vector.extract_strided_slice %11 {offsets = [1, 0], sizes = [1, 128], strides = [1, 1]} : vector<4x128xf32> to vector<1x128xf32>
    %763 = vector.broadcast %762 : vector<1x128xf32> to vector<2x128xf32>
    %764 = arith.mulf %735, %763 : vector<2x128xf32>
    %765 = arith.addf %753, %764 : vector<2x128xf32>
    %766 = vector.extract_strided_slice %9 {offsets = [2, 0], sizes = [1, 128], strides = [1, 1]} : vector<4x128xf32> to vector<1x128xf32>
    %767 = vector.broadcast %766 : vector<1x128xf32> to vector<2x128xf32>
    %768 = arith.mulf %738, %767 : vector<2x128xf32>
    %769 = arith.addf %757, %768 : vector<2x128xf32>
    %770 = vector.extract_strided_slice %10 {offsets = [2, 0], sizes = [1, 128], strides = [1, 1]} : vector<4x128xf32> to vector<1x128xf32>
    %771 = vector.broadcast %770 : vector<1x128xf32> to vector<2x128xf32>
    %772 = arith.mulf %738, %771 : vector<2x128xf32>
    %773 = arith.addf %761, %772 : vector<2x128xf32>
    %774 = vector.extract_strided_slice %11 {offsets = [2, 0], sizes = [1, 128], strides = [1, 1]} : vector<4x128xf32> to vector<1x128xf32>
    %775 = vector.broadcast %774 : vector<1x128xf32> to vector<2x128xf32>
    %776 = arith.mulf %738, %775 : vector<2x128xf32>
    %777 = arith.addf %765, %776 : vector<2x128xf32>
    %778 = vector.extract_strided_slice %9 {offsets = [3, 0], sizes = [1, 128], strides = [1, 1]} : vector<4x128xf32> to vector<1x128xf32>
    %779 = vector.broadcast %778 : vector<1x128xf32> to vector<2x128xf32>
    %780 = arith.mulf %741, %779 : vector<2x128xf32>
    %781 = arith.addf %769, %780 : vector<2x128xf32>
    %782 = vector.extract_strided_slice %10 {offsets = [3, 0], sizes = [1, 128], strides = [1, 1]} : vector<4x128xf32> to vector<1x128xf32>
    %783 = vector.broadcast %782 : vector<1x128xf32> to vector<2x128xf32>
    %784 = arith.mulf %741, %783 : vector<2x128xf32>
    %785 = arith.addf %773, %784 : vector<2x128xf32>
    %786 = vector.extract_strided_slice %11 {offsets = [3, 0], sizes = [1, 128], strides = [1, 1]} : vector<4x128xf32> to vector<1x128xf32>
    %787 = vector.broadcast %786 : vector<1x128xf32> to vector<2x128xf32>
    %788 = arith.mulf %741, %787 : vector<2x128xf32>
    %789 = arith.addf %777, %788 : vector<2x128xf32>
    %cst_67 = arith.constant 5.000000e-01 : f32
    %790 = vector.broadcast %cst_67 : f32 to vector<2x128xf32>
    %791 = arith.mulf %790, %781 : vector<2x128xf32>
    %792 = math.tanh %791 : vector<2x128xf32>
    %cst_68 = arith.constant 5.000000e-01 : f32
    %793 = vector.broadcast %cst_68 : f32 to vector<2x128xf32>
    %794 = arith.mulf %793, %792 : vector<2x128xf32>
    %cst_69 = arith.constant 5.000000e-01 : f32
    %795 = vector.broadcast %cst_69 : f32 to vector<2x128xf32>
    %796 = arith.addf %794, %795 : vector<2x128xf32>
    %cst_70 = arith.constant 5.000000e-01 : f32
    %797 = vector.broadcast %cst_70 : f32 to vector<2x128xf32>
    %798 = arith.mulf %797, %785 : vector<2x128xf32>
    %799 = math.tanh %798 : vector<2x128xf32>
    %cst_71 = arith.constant 5.000000e-01 : f32
    %800 = vector.broadcast %cst_71 : f32 to vector<2x128xf32>
    %801 = arith.mulf %800, %799 : vector<2x128xf32>
    %cst_72 = arith.constant 5.000000e-01 : f32
    %802 = vector.broadcast %cst_72 : f32 to vector<2x128xf32>
    %803 = arith.addf %801, %802 : vector<2x128xf32>
    %804 = arith.mulf %796, %789 : vector<2x128xf32>
    %805 = arith.addf %729, %804 : vector<2x128xf32>
    %806 = math.tanh %805 : vector<2x128xf32>
    %807 = arith.subf %555, %806 : vector<2x128xf32>
    %808 = arith.mulf %803, %807 : vector<2x128xf32>
    %809 = arith.addf %808, %806 : vector<2x128xf32>
    %810 = vector.extract_strided_slice %681 {offsets = [0, 0], sizes = [2, 1], strides = [1, 1]} : vector<2x128xf32> to vector<2x1xf32>
    %811 = vector.shape_cast %810 : vector<2x1xf32> to vector<2x1xf32>
    %812 = vector.broadcast %811 : vector<2x1xf32> to vector<2x128xf32>
    %813 = vector.extract_strided_slice %681 {offsets = [0, 1], sizes = [2, 1], strides = [1, 1]} : vector<2x128xf32> to vector<2x1xf32>
    %814 = vector.shape_cast %813 : vector<2x1xf32> to vector<2x1xf32>
    %815 = vector.broadcast %814 : vector<2x1xf32> to vector<2x128xf32>
    %816 = vector.extract_strided_slice %681 {offsets = [0, 2], sizes = [2, 1], strides = [1, 1]} : vector<2x128xf32> to vector<2x1xf32>
    %817 = vector.shape_cast %816 : vector<2x1xf32> to vector<2x1xf32>
    %818 = vector.broadcast %817 : vector<2x1xf32> to vector<2x128xf32>
    %819 = vector.extract_strided_slice %681 {offsets = [0, 3], sizes = [2, 1], strides = [1, 1]} : vector<2x128xf32> to vector<2x1xf32>
    %820 = vector.shape_cast %819 : vector<2x1xf32> to vector<2x1xf32>
    %821 = vector.broadcast %820 : vector<2x1xf32> to vector<2x128xf32>
    %c0_73 = arith.constant 0 : index
    %c12 = arith.constant 12 : index
    %822 = vector.load %arg0[%c0_73, %c12] : memref<2x24xf32, #tpu.memory_space<vmem>>, vector<2x3xf32>
    %823 = vector.extract_strided_slice %822 {offsets = [0, 0], sizes = [2, 1], strides = [1, 1]} : vector<2x3xf32> to vector<2x1xf32>
    %824 = vector.shape_cast %823 : vector<2x1xf32> to vector<2x1xf32>
    %825 = vector.broadcast %824 : vector<2x1xf32> to vector<2x128xf32>
    %826 = vector.extract_strided_slice %822 {offsets = [0, 1], sizes = [2, 1], strides = [1, 1]} : vector<2x3xf32> to vector<2x1xf32>
    %827 = vector.shape_cast %826 : vector<2x1xf32> to vector<2x1xf32>
    %828 = vector.broadcast %827 : vector<2x1xf32> to vector<2x128xf32>
    %829 = vector.extract_strided_slice %822 {offsets = [0, 2], sizes = [2, 1], strides = [1, 1]} : vector<2x3xf32> to vector<2x1xf32>
    %830 = vector.shape_cast %829 : vector<2x1xf32> to vector<2x1xf32>
    %831 = vector.broadcast %830 : vector<2x1xf32> to vector<2x128xf32>
    %832 = vector.extract_strided_slice %0 {offsets = [0, 0], sizes = [1, 128], strides = [1, 1]} : vector<3x128xf32> to vector<1x128xf32>
    %833 = vector.broadcast %832 : vector<1x128xf32> to vector<2x128xf32>
    %834 = arith.mulf %825, %833 : vector<2x128xf32>
    %835 = arith.addf %15, %834 : vector<2x128xf32>
    %836 = vector.extract_strided_slice %1 {offsets = [0, 0], sizes = [1, 128], strides = [1, 1]} : vector<3x128xf32> to vector<1x128xf32>
    %837 = vector.broadcast %836 : vector<1x128xf32> to vector<2x128xf32>
    %838 = arith.mulf %825, %837 : vector<2x128xf32>
    %839 = arith.addf %18, %838 : vector<2x128xf32>
    %840 = vector.extract_strided_slice %2 {offsets = [0, 0], sizes = [1, 128], strides = [1, 1]} : vector<3x128xf32> to vector<1x128xf32>
    %841 = vector.broadcast %840 : vector<1x128xf32> to vector<2x128xf32>
    %842 = arith.mulf %825, %841 : vector<2x128xf32>
    %843 = arith.addf %21, %842 : vector<2x128xf32>
    %844 = vector.extract_strided_slice %0 {offsets = [1, 0], sizes = [1, 128], strides = [1, 1]} : vector<3x128xf32> to vector<1x128xf32>
    %845 = vector.broadcast %844 : vector<1x128xf32> to vector<2x128xf32>
    %846 = arith.mulf %828, %845 : vector<2x128xf32>
    %847 = arith.addf %835, %846 : vector<2x128xf32>
    %848 = vector.extract_strided_slice %1 {offsets = [1, 0], sizes = [1, 128], strides = [1, 1]} : vector<3x128xf32> to vector<1x128xf32>
    %849 = vector.broadcast %848 : vector<1x128xf32> to vector<2x128xf32>
    %850 = arith.mulf %828, %849 : vector<2x128xf32>
    %851 = arith.addf %839, %850 : vector<2x128xf32>
    %852 = vector.extract_strided_slice %2 {offsets = [1, 0], sizes = [1, 128], strides = [1, 1]} : vector<3x128xf32> to vector<1x128xf32>
    %853 = vector.broadcast %852 : vector<1x128xf32> to vector<2x128xf32>
    %854 = arith.mulf %828, %853 : vector<2x128xf32>
    %855 = arith.addf %843, %854 : vector<2x128xf32>
    %856 = vector.extract_strided_slice %0 {offsets = [2, 0], sizes = [1, 128], strides = [1, 1]} : vector<3x128xf32> to vector<1x128xf32>
    %857 = vector.broadcast %856 : vector<1x128xf32> to vector<2x128xf32>
    %858 = arith.mulf %831, %857 : vector<2x128xf32>
    %859 = arith.addf %847, %858 : vector<2x128xf32>
    %860 = vector.extract_strided_slice %1 {offsets = [2, 0], sizes = [1, 128], strides = [1, 1]} : vector<3x128xf32> to vector<1x128xf32>
    %861 = vector.broadcast %860 : vector<1x128xf32> to vector<2x128xf32>
    %862 = arith.mulf %831, %861 : vector<2x128xf32>
    %863 = arith.addf %851, %862 : vector<2x128xf32>
    %864 = vector.extract_strided_slice %2 {offsets = [2, 0], sizes = [1, 128], strides = [1, 1]} : vector<3x128xf32> to vector<1x128xf32>
    %865 = vector.broadcast %864 : vector<1x128xf32> to vector<2x128xf32>
    %866 = arith.mulf %831, %865 : vector<2x128xf32>
    %867 = arith.addf %855, %866 : vector<2x128xf32>
    %868 = vector.extract_strided_slice %3 {offsets = [0, 0], sizes = [1, 128], strides = [1, 1]} : vector<4x128xf32> to vector<1x128xf32>
    %869 = vector.broadcast %868 : vector<1x128xf32> to vector<2x128xf32>
    %870 = arith.mulf %812, %869 : vector<2x128xf32>
    %871 = arith.addf %859, %870 : vector<2x128xf32>
    %872 = vector.extract_strided_slice %4 {offsets = [0, 0], sizes = [1, 128], strides = [1, 1]} : vector<4x128xf32> to vector<1x128xf32>
    %873 = vector.broadcast %872 : vector<1x128xf32> to vector<2x128xf32>
    %874 = arith.mulf %812, %873 : vector<2x128xf32>
    %875 = arith.addf %863, %874 : vector<2x128xf32>
    %876 = vector.extract_strided_slice %5 {offsets = [0, 0], sizes = [1, 128], strides = [1, 1]} : vector<4x128xf32> to vector<1x128xf32>
    %877 = vector.broadcast %876 : vector<1x128xf32> to vector<2x128xf32>
    %878 = arith.mulf %812, %877 : vector<2x128xf32>
    %879 = arith.addf %24, %878 : vector<2x128xf32>
    %880 = vector.extract_strided_slice %3 {offsets = [1, 0], sizes = [1, 128], strides = [1, 1]} : vector<4x128xf32> to vector<1x128xf32>
    %881 = vector.broadcast %880 : vector<1x128xf32> to vector<2x128xf32>
    %882 = arith.mulf %815, %881 : vector<2x128xf32>
    %883 = arith.addf %871, %882 : vector<2x128xf32>
    %884 = vector.extract_strided_slice %4 {offsets = [1, 0], sizes = [1, 128], strides = [1, 1]} : vector<4x128xf32> to vector<1x128xf32>
    %885 = vector.broadcast %884 : vector<1x128xf32> to vector<2x128xf32>
    %886 = arith.mulf %815, %885 : vector<2x128xf32>
    %887 = arith.addf %875, %886 : vector<2x128xf32>
    %888 = vector.extract_strided_slice %5 {offsets = [1, 0], sizes = [1, 128], strides = [1, 1]} : vector<4x128xf32> to vector<1x128xf32>
    %889 = vector.broadcast %888 : vector<1x128xf32> to vector<2x128xf32>
    %890 = arith.mulf %815, %889 : vector<2x128xf32>
    %891 = arith.addf %879, %890 : vector<2x128xf32>
    %892 = vector.extract_strided_slice %3 {offsets = [2, 0], sizes = [1, 128], strides = [1, 1]} : vector<4x128xf32> to vector<1x128xf32>
    %893 = vector.broadcast %892 : vector<1x128xf32> to vector<2x128xf32>
    %894 = arith.mulf %818, %893 : vector<2x128xf32>
    %895 = arith.addf %883, %894 : vector<2x128xf32>
    %896 = vector.extract_strided_slice %4 {offsets = [2, 0], sizes = [1, 128], strides = [1, 1]} : vector<4x128xf32> to vector<1x128xf32>
    %897 = vector.broadcast %896 : vector<1x128xf32> to vector<2x128xf32>
    %898 = arith.mulf %818, %897 : vector<2x128xf32>
    %899 = arith.addf %887, %898 : vector<2x128xf32>
    %900 = vector.extract_strided_slice %5 {offsets = [2, 0], sizes = [1, 128], strides = [1, 1]} : vector<4x128xf32> to vector<1x128xf32>
    %901 = vector.broadcast %900 : vector<1x128xf32> to vector<2x128xf32>
    %902 = arith.mulf %818, %901 : vector<2x128xf32>
    %903 = arith.addf %891, %902 : vector<2x128xf32>
    %904 = vector.extract_strided_slice %3 {offsets = [3, 0], sizes = [1, 128], strides = [1, 1]} : vector<4x128xf32> to vector<1x128xf32>
    %905 = vector.broadcast %904 : vector<1x128xf32> to vector<2x128xf32>
    %906 = arith.mulf %821, %905 : vector<2x128xf32>
    %907 = arith.addf %895, %906 : vector<2x128xf32>
    %908 = vector.extract_strided_slice %4 {offsets = [3, 0], sizes = [1, 128], strides = [1, 1]} : vector<4x128xf32> to vector<1x128xf32>
    %909 = vector.broadcast %908 : vector<1x128xf32> to vector<2x128xf32>
    %910 = arith.mulf %821, %909 : vector<2x128xf32>
    %911 = arith.addf %899, %910 : vector<2x128xf32>
    %912 = vector.extract_strided_slice %5 {offsets = [3, 0], sizes = [1, 128], strides = [1, 1]} : vector<4x128xf32> to vector<1x128xf32>
    %913 = vector.broadcast %912 : vector<1x128xf32> to vector<2x128xf32>
    %914 = arith.mulf %821, %913 : vector<2x128xf32>
    %915 = arith.addf %903, %914 : vector<2x128xf32>
    %cst_74 = arith.constant 5.000000e-01 : f32
    %916 = vector.broadcast %cst_74 : f32 to vector<2x128xf32>
    %917 = arith.mulf %916, %907 : vector<2x128xf32>
    %918 = math.tanh %917 : vector<2x128xf32>
    %cst_75 = arith.constant 5.000000e-01 : f32
    %919 = vector.broadcast %cst_75 : f32 to vector<2x128xf32>
    %920 = arith.mulf %919, %918 : vector<2x128xf32>
    %cst_76 = arith.constant 5.000000e-01 : f32
    %921 = vector.broadcast %cst_76 : f32 to vector<2x128xf32>
    %922 = arith.addf %920, %921 : vector<2x128xf32>
    %cst_77 = arith.constant 5.000000e-01 : f32
    %923 = vector.broadcast %cst_77 : f32 to vector<2x128xf32>
    %924 = arith.mulf %923, %911 : vector<2x128xf32>
    %925 = math.tanh %924 : vector<2x128xf32>
    %cst_78 = arith.constant 5.000000e-01 : f32
    %926 = vector.broadcast %cst_78 : f32 to vector<2x128xf32>
    %927 = arith.mulf %926, %925 : vector<2x128xf32>
    %cst_79 = arith.constant 5.000000e-01 : f32
    %928 = vector.broadcast %cst_79 : f32 to vector<2x128xf32>
    %929 = arith.addf %927, %928 : vector<2x128xf32>
    %930 = arith.mulf %922, %915 : vector<2x128xf32>
    %931 = arith.addf %867, %930 : vector<2x128xf32>
    %932 = math.tanh %931 : vector<2x128xf32>
    %933 = arith.subf %681, %932 : vector<2x128xf32>
    %934 = arith.mulf %929, %933 : vector<2x128xf32>
    %935 = arith.addf %934, %932 : vector<2x128xf32>
    %936 = vector.extract_strided_slice %6 {offsets = [0, 0], sizes = [1, 128], strides = [1, 1]} : vector<4x128xf32> to vector<1x128xf32>
    %937 = vector.broadcast %936 : vector<1x128xf32> to vector<2x128xf32>
    %938 = arith.mulf %812, %937 : vector<2x128xf32>
    %939 = arith.addf %27, %938 : vector<2x128xf32>
    %940 = vector.extract_strided_slice %7 {offsets = [0, 0], sizes = [1, 128], strides = [1, 1]} : vector<4x128xf32> to vector<1x128xf32>
    %941 = vector.broadcast %940 : vector<1x128xf32> to vector<2x128xf32>
    %942 = arith.mulf %812, %941 : vector<2x128xf32>
    %943 = arith.addf %30, %942 : vector<2x128xf32>
    %944 = vector.extract_strided_slice %8 {offsets = [0, 0], sizes = [1, 128], strides = [1, 1]} : vector<4x128xf32> to vector<1x128xf32>
    %945 = vector.broadcast %944 : vector<1x128xf32> to vector<2x128xf32>
    %946 = arith.mulf %812, %945 : vector<2x128xf32>
    %947 = arith.addf %33, %946 : vector<2x128xf32>
    %948 = vector.extract_strided_slice %6 {offsets = [1, 0], sizes = [1, 128], strides = [1, 1]} : vector<4x128xf32> to vector<1x128xf32>
    %949 = vector.broadcast %948 : vector<1x128xf32> to vector<2x128xf32>
    %950 = arith.mulf %815, %949 : vector<2x128xf32>
    %951 = arith.addf %939, %950 : vector<2x128xf32>
    %952 = vector.extract_strided_slice %7 {offsets = [1, 0], sizes = [1, 128], strides = [1, 1]} : vector<4x128xf32> to vector<1x128xf32>
    %953 = vector.broadcast %952 : vector<1x128xf32> to vector<2x128xf32>
    %954 = arith.mulf %815, %953 : vector<2x128xf32>
    %955 = arith.addf %943, %954 : vector<2x128xf32>
    %956 = vector.extract_strided_slice %8 {offsets = [1, 0], sizes = [1, 128], strides = [1, 1]} : vector<4x128xf32> to vector<1x128xf32>
    %957 = vector.broadcast %956 : vector<1x128xf32> to vector<2x128xf32>
    %958 = arith.mulf %815, %957 : vector<2x128xf32>
    %959 = arith.addf %947, %958 : vector<2x128xf32>
    %960 = vector.extract_strided_slice %6 {offsets = [2, 0], sizes = [1, 128], strides = [1, 1]} : vector<4x128xf32> to vector<1x128xf32>
    %961 = vector.broadcast %960 : vector<1x128xf32> to vector<2x128xf32>
    %962 = arith.mulf %818, %961 : vector<2x128xf32>
    %963 = arith.addf %951, %962 : vector<2x128xf32>
    %964 = vector.extract_strided_slice %7 {offsets = [2, 0], sizes = [1, 128], strides = [1, 1]} : vector<4x128xf32> to vector<1x128xf32>
    %965 = vector.broadcast %964 : vector<1x128xf32> to vector<2x128xf32>
    %966 = arith.mulf %818, %965 : vector<2x128xf32>
    %967 = arith.addf %955, %966 : vector<2x128xf32>
    %968 = vector.extract_strided_slice %8 {offsets = [2, 0], sizes = [1, 128], strides = [1, 1]} : vector<4x128xf32> to vector<1x128xf32>
    %969 = vector.broadcast %968 : vector<1x128xf32> to vector<2x128xf32>
    %970 = arith.mulf %818, %969 : vector<2x128xf32>
    %971 = arith.addf %959, %970 : vector<2x128xf32>
    %972 = vector.extract_strided_slice %6 {offsets = [3, 0], sizes = [1, 128], strides = [1, 1]} : vector<4x128xf32> to vector<1x128xf32>
    %973 = vector.broadcast %972 : vector<1x128xf32> to vector<2x128xf32>
    %974 = arith.mulf %821, %973 : vector<2x128xf32>
    %975 = arith.addf %963, %974 : vector<2x128xf32>
    %976 = vector.extract_strided_slice %7 {offsets = [3, 0], sizes = [1, 128], strides = [1, 1]} : vector<4x128xf32> to vector<1x128xf32>
    %977 = vector.broadcast %976 : vector<1x128xf32> to vector<2x128xf32>
    %978 = arith.mulf %821, %977 : vector<2x128xf32>
    %979 = arith.addf %967, %978 : vector<2x128xf32>
    %980 = vector.extract_strided_slice %8 {offsets = [3, 0], sizes = [1, 128], strides = [1, 1]} : vector<4x128xf32> to vector<1x128xf32>
    %981 = vector.broadcast %980 : vector<1x128xf32> to vector<2x128xf32>
    %982 = arith.mulf %821, %981 : vector<2x128xf32>
    %983 = arith.addf %971, %982 : vector<2x128xf32>
    %984 = vector.extract_strided_slice %809 {offsets = [0, 0], sizes = [2, 1], strides = [1, 1]} : vector<2x128xf32> to vector<2x1xf32>
    %985 = vector.shape_cast %984 : vector<2x1xf32> to vector<2x1xf32>
    %986 = vector.broadcast %985 : vector<2x1xf32> to vector<2x128xf32>
    %987 = vector.extract_strided_slice %809 {offsets = [0, 1], sizes = [2, 1], strides = [1, 1]} : vector<2x128xf32> to vector<2x1xf32>
    %988 = vector.shape_cast %987 : vector<2x1xf32> to vector<2x1xf32>
    %989 = vector.broadcast %988 : vector<2x1xf32> to vector<2x128xf32>
    %990 = vector.extract_strided_slice %809 {offsets = [0, 2], sizes = [2, 1], strides = [1, 1]} : vector<2x128xf32> to vector<2x1xf32>
    %991 = vector.shape_cast %990 : vector<2x1xf32> to vector<2x1xf32>
    %992 = vector.broadcast %991 : vector<2x1xf32> to vector<2x128xf32>
    %993 = vector.extract_strided_slice %809 {offsets = [0, 3], sizes = [2, 1], strides = [1, 1]} : vector<2x128xf32> to vector<2x1xf32>
    %994 = vector.shape_cast %993 : vector<2x1xf32> to vector<2x1xf32>
    %995 = vector.broadcast %994 : vector<2x1xf32> to vector<2x128xf32>
    %996 = vector.extract_strided_slice %9 {offsets = [0, 0], sizes = [1, 128], strides = [1, 1]} : vector<4x128xf32> to vector<1x128xf32>
    %997 = vector.broadcast %996 : vector<1x128xf32> to vector<2x128xf32>
    %998 = arith.mulf %986, %997 : vector<2x128xf32>
    %999 = arith.addf %975, %998 : vector<2x128xf32>
    %1000 = vector.extract_strided_slice %10 {offsets = [0, 0], sizes = [1, 128], strides = [1, 1]} : vector<4x128xf32> to vector<1x128xf32>
    %1001 = vector.broadcast %1000 : vector<1x128xf32> to vector<2x128xf32>
    %1002 = arith.mulf %986, %1001 : vector<2x128xf32>
    %1003 = arith.addf %979, %1002 : vector<2x128xf32>
    %1004 = vector.extract_strided_slice %11 {offsets = [0, 0], sizes = [1, 128], strides = [1, 1]} : vector<4x128xf32> to vector<1x128xf32>
    %1005 = vector.broadcast %1004 : vector<1x128xf32> to vector<2x128xf32>
    %1006 = arith.mulf %986, %1005 : vector<2x128xf32>
    %1007 = arith.addf %36, %1006 : vector<2x128xf32>
    %1008 = vector.extract_strided_slice %9 {offsets = [1, 0], sizes = [1, 128], strides = [1, 1]} : vector<4x128xf32> to vector<1x128xf32>
    %1009 = vector.broadcast %1008 : vector<1x128xf32> to vector<2x128xf32>
    %1010 = arith.mulf %989, %1009 : vector<2x128xf32>
    %1011 = arith.addf %999, %1010 : vector<2x128xf32>
    %1012 = vector.extract_strided_slice %10 {offsets = [1, 0], sizes = [1, 128], strides = [1, 1]} : vector<4x128xf32> to vector<1x128xf32>
    %1013 = vector.broadcast %1012 : vector<1x128xf32> to vector<2x128xf32>
    %1014 = arith.mulf %989, %1013 : vector<2x128xf32>
    %1015 = arith.addf %1003, %1014 : vector<2x128xf32>
    %1016 = vector.extract_strided_slice %11 {offsets = [1, 0], sizes = [1, 128], strides = [1, 1]} : vector<4x128xf32> to vector<1x128xf32>
    %1017 = vector.broadcast %1016 : vector<1x128xf32> to vector<2x128xf32>
    %1018 = arith.mulf %989, %1017 : vector<2x128xf32>
    %1019 = arith.addf %1007, %1018 : vector<2x128xf32>
    %1020 = vector.extract_strided_slice %9 {offsets = [2, 0], sizes = [1, 128], strides = [1, 1]} : vector<4x128xf32> to vector<1x128xf32>
    %1021 = vector.broadcast %1020 : vector<1x128xf32> to vector<2x128xf32>
    %1022 = arith.mulf %992, %1021 : vector<2x128xf32>
    %1023 = arith.addf %1011, %1022 : vector<2x128xf32>
    %1024 = vector.extract_strided_slice %10 {offsets = [2, 0], sizes = [1, 128], strides = [1, 1]} : vector<4x128xf32> to vector<1x128xf32>
    %1025 = vector.broadcast %1024 : vector<1x128xf32> to vector<2x128xf32>
    %1026 = arith.mulf %992, %1025 : vector<2x128xf32>
    %1027 = arith.addf %1015, %1026 : vector<2x128xf32>
    %1028 = vector.extract_strided_slice %11 {offsets = [2, 0], sizes = [1, 128], strides = [1, 1]} : vector<4x128xf32> to vector<1x128xf32>
    %1029 = vector.broadcast %1028 : vector<1x128xf32> to vector<2x128xf32>
    %1030 = arith.mulf %992, %1029 : vector<2x128xf32>
    %1031 = arith.addf %1019, %1030 : vector<2x128xf32>
    %1032 = vector.extract_strided_slice %9 {offsets = [3, 0], sizes = [1, 128], strides = [1, 1]} : vector<4x128xf32> to vector<1x128xf32>
    %1033 = vector.broadcast %1032 : vector<1x128xf32> to vector<2x128xf32>
    %1034 = arith.mulf %995, %1033 : vector<2x128xf32>
    %1035 = arith.addf %1023, %1034 : vector<2x128xf32>
    %1036 = vector.extract_strided_slice %10 {offsets = [3, 0], sizes = [1, 128], strides = [1, 1]} : vector<4x128xf32> to vector<1x128xf32>
    %1037 = vector.broadcast %1036 : vector<1x128xf32> to vector<2x128xf32>
    %1038 = arith.mulf %995, %1037 : vector<2x128xf32>
    %1039 = arith.addf %1027, %1038 : vector<2x128xf32>
    %1040 = vector.extract_strided_slice %11 {offsets = [3, 0], sizes = [1, 128], strides = [1, 1]} : vector<4x128xf32> to vector<1x128xf32>
    %1041 = vector.broadcast %1040 : vector<1x128xf32> to vector<2x128xf32>
    %1042 = arith.mulf %995, %1041 : vector<2x128xf32>
    %1043 = arith.addf %1031, %1042 : vector<2x128xf32>
    %cst_80 = arith.constant 5.000000e-01 : f32
    %1044 = vector.broadcast %cst_80 : f32 to vector<2x128xf32>
    %1045 = arith.mulf %1044, %1035 : vector<2x128xf32>
    %1046 = math.tanh %1045 : vector<2x128xf32>
    %cst_81 = arith.constant 5.000000e-01 : f32
    %1047 = vector.broadcast %cst_81 : f32 to vector<2x128xf32>
    %1048 = arith.mulf %1047, %1046 : vector<2x128xf32>
    %cst_82 = arith.constant 5.000000e-01 : f32
    %1049 = vector.broadcast %cst_82 : f32 to vector<2x128xf32>
    %1050 = arith.addf %1048, %1049 : vector<2x128xf32>
    %cst_83 = arith.constant 5.000000e-01 : f32
    %1051 = vector.broadcast %cst_83 : f32 to vector<2x128xf32>
    %1052 = arith.mulf %1051, %1039 : vector<2x128xf32>
    %1053 = math.tanh %1052 : vector<2x128xf32>
    %cst_84 = arith.constant 5.000000e-01 : f32
    %1054 = vector.broadcast %cst_84 : f32 to vector<2x128xf32>
    %1055 = arith.mulf %1054, %1053 : vector<2x128xf32>
    %cst_85 = arith.constant 5.000000e-01 : f32
    %1056 = vector.broadcast %cst_85 : f32 to vector<2x128xf32>
    %1057 = arith.addf %1055, %1056 : vector<2x128xf32>
    %1058 = arith.mulf %1050, %1043 : vector<2x128xf32>
    %1059 = arith.addf %983, %1058 : vector<2x128xf32>
    %1060 = math.tanh %1059 : vector<2x128xf32>
    %1061 = arith.subf %809, %1060 : vector<2x128xf32>
    %1062 = arith.mulf %1057, %1061 : vector<2x128xf32>
    %1063 = arith.addf %1062, %1060 : vector<2x128xf32>
    %1064 = vector.extract_strided_slice %935 {offsets = [0, 0], sizes = [2, 1], strides = [1, 1]} : vector<2x128xf32> to vector<2x1xf32>
    %1065 = vector.shape_cast %1064 : vector<2x1xf32> to vector<2x1xf32>
    %1066 = vector.broadcast %1065 : vector<2x1xf32> to vector<2x128xf32>
    %1067 = vector.extract_strided_slice %935 {offsets = [0, 1], sizes = [2, 1], strides = [1, 1]} : vector<2x128xf32> to vector<2x1xf32>
    %1068 = vector.shape_cast %1067 : vector<2x1xf32> to vector<2x1xf32>
    %1069 = vector.broadcast %1068 : vector<2x1xf32> to vector<2x128xf32>
    %1070 = vector.extract_strided_slice %935 {offsets = [0, 2], sizes = [2, 1], strides = [1, 1]} : vector<2x128xf32> to vector<2x1xf32>
    %1071 = vector.shape_cast %1070 : vector<2x1xf32> to vector<2x1xf32>
    %1072 = vector.broadcast %1071 : vector<2x1xf32> to vector<2x128xf32>
    %1073 = vector.extract_strided_slice %935 {offsets = [0, 3], sizes = [2, 1], strides = [1, 1]} : vector<2x128xf32> to vector<2x1xf32>
    %1074 = vector.shape_cast %1073 : vector<2x1xf32> to vector<2x1xf32>
    %1075 = vector.broadcast %1074 : vector<2x1xf32> to vector<2x128xf32>
    %c0_86 = arith.constant 0 : index
    %c15 = arith.constant 15 : index
    %1076 = vector.load %arg0[%c0_86, %c15] : memref<2x24xf32, #tpu.memory_space<vmem>>, vector<2x3xf32>
    %1077 = vector.extract_strided_slice %1076 {offsets = [0, 0], sizes = [2, 1], strides = [1, 1]} : vector<2x3xf32> to vector<2x1xf32>
    %1078 = vector.shape_cast %1077 : vector<2x1xf32> to vector<2x1xf32>
    %1079 = vector.broadcast %1078 : vector<2x1xf32> to vector<2x128xf32>
    %1080 = vector.extract_strided_slice %1076 {offsets = [0, 1], sizes = [2, 1], strides = [1, 1]} : vector<2x3xf32> to vector<2x1xf32>
    %1081 = vector.shape_cast %1080 : vector<2x1xf32> to vector<2x1xf32>
    %1082 = vector.broadcast %1081 : vector<2x1xf32> to vector<2x128xf32>
    %1083 = vector.extract_strided_slice %1076 {offsets = [0, 2], sizes = [2, 1], strides = [1, 1]} : vector<2x3xf32> to vector<2x1xf32>
    %1084 = vector.shape_cast %1083 : vector<2x1xf32> to vector<2x1xf32>
    %1085 = vector.broadcast %1084 : vector<2x1xf32> to vector<2x128xf32>
    %1086 = vector.extract_strided_slice %0 {offsets = [0, 0], sizes = [1, 128], strides = [1, 1]} : vector<3x128xf32> to vector<1x128xf32>
    %1087 = vector.broadcast %1086 : vector<1x128xf32> to vector<2x128xf32>
    %1088 = arith.mulf %1079, %1087 : vector<2x128xf32>
    %1089 = arith.addf %15, %1088 : vector<2x128xf32>
    %1090 = vector.extract_strided_slice %1 {offsets = [0, 0], sizes = [1, 128], strides = [1, 1]} : vector<3x128xf32> to vector<1x128xf32>
    %1091 = vector.broadcast %1090 : vector<1x128xf32> to vector<2x128xf32>
    %1092 = arith.mulf %1079, %1091 : vector<2x128xf32>
    %1093 = arith.addf %18, %1092 : vector<2x128xf32>
    %1094 = vector.extract_strided_slice %2 {offsets = [0, 0], sizes = [1, 128], strides = [1, 1]} : vector<3x128xf32> to vector<1x128xf32>
    %1095 = vector.broadcast %1094 : vector<1x128xf32> to vector<2x128xf32>
    %1096 = arith.mulf %1079, %1095 : vector<2x128xf32>
    %1097 = arith.addf %21, %1096 : vector<2x128xf32>
    %1098 = vector.extract_strided_slice %0 {offsets = [1, 0], sizes = [1, 128], strides = [1, 1]} : vector<3x128xf32> to vector<1x128xf32>
    %1099 = vector.broadcast %1098 : vector<1x128xf32> to vector<2x128xf32>
    %1100 = arith.mulf %1082, %1099 : vector<2x128xf32>
    %1101 = arith.addf %1089, %1100 : vector<2x128xf32>
    %1102 = vector.extract_strided_slice %1 {offsets = [1, 0], sizes = [1, 128], strides = [1, 1]} : vector<3x128xf32> to vector<1x128xf32>
    %1103 = vector.broadcast %1102 : vector<1x128xf32> to vector<2x128xf32>
    %1104 = arith.mulf %1082, %1103 : vector<2x128xf32>
    %1105 = arith.addf %1093, %1104 : vector<2x128xf32>
    %1106 = vector.extract_strided_slice %2 {offsets = [1, 0], sizes = [1, 128], strides = [1, 1]} : vector<3x128xf32> to vector<1x128xf32>
    %1107 = vector.broadcast %1106 : vector<1x128xf32> to vector<2x128xf32>
    %1108 = arith.mulf %1082, %1107 : vector<2x128xf32>
    %1109 = arith.addf %1097, %1108 : vector<2x128xf32>
    %1110 = vector.extract_strided_slice %0 {offsets = [2, 0], sizes = [1, 128], strides = [1, 1]} : vector<3x128xf32> to vector<1x128xf32>
    %1111 = vector.broadcast %1110 : vector<1x128xf32> to vector<2x128xf32>
    %1112 = arith.mulf %1085, %1111 : vector<2x128xf32>
    %1113 = arith.addf %1101, %1112 : vector<2x128xf32>
    %1114 = vector.extract_strided_slice %1 {offsets = [2, 0], sizes = [1, 128], strides = [1, 1]} : vector<3x128xf32> to vector<1x128xf32>
    %1115 = vector.broadcast %1114 : vector<1x128xf32> to vector<2x128xf32>
    %1116 = arith.mulf %1085, %1115 : vector<2x128xf32>
    %1117 = arith.addf %1105, %1116 : vector<2x128xf32>
    %1118 = vector.extract_strided_slice %2 {offsets = [2, 0], sizes = [1, 128], strides = [1, 1]} : vector<3x128xf32> to vector<1x128xf32>
    %1119 = vector.broadcast %1118 : vector<1x128xf32> to vector<2x128xf32>
    %1120 = arith.mulf %1085, %1119 : vector<2x128xf32>
    %1121 = arith.addf %1109, %1120 : vector<2x128xf32>
    %1122 = vector.extract_strided_slice %3 {offsets = [0, 0], sizes = [1, 128], strides = [1, 1]} : vector<4x128xf32> to vector<1x128xf32>
    %1123 = vector.broadcast %1122 : vector<1x128xf32> to vector<2x128xf32>
    %1124 = arith.mulf %1066, %1123 : vector<2x128xf32>
    %1125 = arith.addf %1113, %1124 : vector<2x128xf32>
    %1126 = vector.extract_strided_slice %4 {offsets = [0, 0], sizes = [1, 128], strides = [1, 1]} : vector<4x128xf32> to vector<1x128xf32>
    %1127 = vector.broadcast %1126 : vector<1x128xf32> to vector<2x128xf32>
    %1128 = arith.mulf %1066, %1127 : vector<2x128xf32>
    %1129 = arith.addf %1117, %1128 : vector<2x128xf32>
    %1130 = vector.extract_strided_slice %5 {offsets = [0, 0], sizes = [1, 128], strides = [1, 1]} : vector<4x128xf32> to vector<1x128xf32>
    %1131 = vector.broadcast %1130 : vector<1x128xf32> to vector<2x128xf32>
    %1132 = arith.mulf %1066, %1131 : vector<2x128xf32>
    %1133 = arith.addf %24, %1132 : vector<2x128xf32>
    %1134 = vector.extract_strided_slice %3 {offsets = [1, 0], sizes = [1, 128], strides = [1, 1]} : vector<4x128xf32> to vector<1x128xf32>
    %1135 = vector.broadcast %1134 : vector<1x128xf32> to vector<2x128xf32>
    %1136 = arith.mulf %1069, %1135 : vector<2x128xf32>
    %1137 = arith.addf %1125, %1136 : vector<2x128xf32>
    %1138 = vector.extract_strided_slice %4 {offsets = [1, 0], sizes = [1, 128], strides = [1, 1]} : vector<4x128xf32> to vector<1x128xf32>
    %1139 = vector.broadcast %1138 : vector<1x128xf32> to vector<2x128xf32>
    %1140 = arith.mulf %1069, %1139 : vector<2x128xf32>
    %1141 = arith.addf %1129, %1140 : vector<2x128xf32>
    %1142 = vector.extract_strided_slice %5 {offsets = [1, 0], sizes = [1, 128], strides = [1, 1]} : vector<4x128xf32> to vector<1x128xf32>
    %1143 = vector.broadcast %1142 : vector<1x128xf32> to vector<2x128xf32>
    %1144 = arith.mulf %1069, %1143 : vector<2x128xf32>
    %1145 = arith.addf %1133, %1144 : vector<2x128xf32>
    %1146 = vector.extract_strided_slice %3 {offsets = [2, 0], sizes = [1, 128], strides = [1, 1]} : vector<4x128xf32> to vector<1x128xf32>
    %1147 = vector.broadcast %1146 : vector<1x128xf32> to vector<2x128xf32>
    %1148 = arith.mulf %1072, %1147 : vector<2x128xf32>
    %1149 = arith.addf %1137, %1148 : vector<2x128xf32>
    %1150 = vector.extract_strided_slice %4 {offsets = [2, 0], sizes = [1, 128], strides = [1, 1]} : vector<4x128xf32> to vector<1x128xf32>
    %1151 = vector.broadcast %1150 : vector<1x128xf32> to vector<2x128xf32>
    %1152 = arith.mulf %1072, %1151 : vector<2x128xf32>
    %1153 = arith.addf %1141, %1152 : vector<2x128xf32>
    %1154 = vector.extract_strided_slice %5 {offsets = [2, 0], sizes = [1, 128], strides = [1, 1]} : vector<4x128xf32> to vector<1x128xf32>
    %1155 = vector.broadcast %1154 : vector<1x128xf32> to vector<2x128xf32>
    %1156 = arith.mulf %1072, %1155 : vector<2x128xf32>
    %1157 = arith.addf %1145, %1156 : vector<2x128xf32>
    %1158 = vector.extract_strided_slice %3 {offsets = [3, 0], sizes = [1, 128], strides = [1, 1]} : vector<4x128xf32> to vector<1x128xf32>
    %1159 = vector.broadcast %1158 : vector<1x128xf32> to vector<2x128xf32>
    %1160 = arith.mulf %1075, %1159 : vector<2x128xf32>
    %1161 = arith.addf %1149, %1160 : vector<2x128xf32>
    %1162 = vector.extract_strided_slice %4 {offsets = [3, 0], sizes = [1, 128], strides = [1, 1]} : vector<4x128xf32> to vector<1x128xf32>
    %1163 = vector.broadcast %1162 : vector<1x128xf32> to vector<2x128xf32>
    %1164 = arith.mulf %1075, %1163 : vector<2x128xf32>
    %1165 = arith.addf %1153, %1164 : vector<2x128xf32>
    %1166 = vector.extract_strided_slice %5 {offsets = [3, 0], sizes = [1, 128], strides = [1, 1]} : vector<4x128xf32> to vector<1x128xf32>
    %1167 = vector.broadcast %1166 : vector<1x128xf32> to vector<2x128xf32>
    %1168 = arith.mulf %1075, %1167 : vector<2x128xf32>
    %1169 = arith.addf %1157, %1168 : vector<2x128xf32>
    %cst_87 = arith.constant 5.000000e-01 : f32
    %1170 = vector.broadcast %cst_87 : f32 to vector<2x128xf32>
    %1171 = arith.mulf %1170, %1161 : vector<2x128xf32>
    %1172 = math.tanh %1171 : vector<2x128xf32>
    %cst_88 = arith.constant 5.000000e-01 : f32
    %1173 = vector.broadcast %cst_88 : f32 to vector<2x128xf32>
    %1174 = arith.mulf %1173, %1172 : vector<2x128xf32>
    %cst_89 = arith.constant 5.000000e-01 : f32
    %1175 = vector.broadcast %cst_89 : f32 to vector<2x128xf32>
    %1176 = arith.addf %1174, %1175 : vector<2x128xf32>
    %cst_90 = arith.constant 5.000000e-01 : f32
    %1177 = vector.broadcast %cst_90 : f32 to vector<2x128xf32>
    %1178 = arith.mulf %1177, %1165 : vector<2x128xf32>
    %1179 = math.tanh %1178 : vector<2x128xf32>
    %cst_91 = arith.constant 5.000000e-01 : f32
    %1180 = vector.broadcast %cst_91 : f32 to vector<2x128xf32>
    %1181 = arith.mulf %1180, %1179 : vector<2x128xf32>
    %cst_92 = arith.constant 5.000000e-01 : f32
    %1182 = vector.broadcast %cst_92 : f32 to vector<2x128xf32>
    %1183 = arith.addf %1181, %1182 : vector<2x128xf32>
    %1184 = arith.mulf %1176, %1169 : vector<2x128xf32>
    %1185 = arith.addf %1121, %1184 : vector<2x128xf32>
    %1186 = math.tanh %1185 : vector<2x128xf32>
    %1187 = arith.subf %935, %1186 : vector<2x128xf32>
    %1188 = arith.mulf %1183, %1187 : vector<2x128xf32>
    %1189 = arith.addf %1188, %1186 : vector<2x128xf32>
    %1190 = vector.extract_strided_slice %6 {offsets = [0, 0], sizes = [1, 128], strides = [1, 1]} : vector<4x128xf32> to vector<1x128xf32>
    %1191 = vector.broadcast %1190 : vector<1x128xf32> to vector<2x128xf32>
    %1192 = arith.mulf %1066, %1191 : vector<2x128xf32>
    %1193 = arith.addf %27, %1192 : vector<2x128xf32>
    %1194 = vector.extract_strided_slice %7 {offsets = [0, 0], sizes = [1, 128], strides = [1, 1]} : vector<4x128xf32> to vector<1x128xf32>
    %1195 = vector.broadcast %1194 : vector<1x128xf32> to vector<2x128xf32>
    %1196 = arith.mulf %1066, %1195 : vector<2x128xf32>
    %1197 = arith.addf %30, %1196 : vector<2x128xf32>
    %1198 = vector.extract_strided_slice %8 {offsets = [0, 0], sizes = [1, 128], strides = [1, 1]} : vector<4x128xf32> to vector<1x128xf32>
    %1199 = vector.broadcast %1198 : vector<1x128xf32> to vector<2x128xf32>
    %1200 = arith.mulf %1066, %1199 : vector<2x128xf32>
    %1201 = arith.addf %33, %1200 : vector<2x128xf32>
    %1202 = vector.extract_strided_slice %6 {offsets = [1, 0], sizes = [1, 128], strides = [1, 1]} : vector<4x128xf32> to vector<1x128xf32>
    %1203 = vector.broadcast %1202 : vector<1x128xf32> to vector<2x128xf32>
    %1204 = arith.mulf %1069, %1203 : vector<2x128xf32>
    %1205 = arith.addf %1193, %1204 : vector<2x128xf32>
    %1206 = vector.extract_strided_slice %7 {offsets = [1, 0], sizes = [1, 128], strides = [1, 1]} : vector<4x128xf32> to vector<1x128xf32>
    %1207 = vector.broadcast %1206 : vector<1x128xf32> to vector<2x128xf32>
    %1208 = arith.mulf %1069, %1207 : vector<2x128xf32>
    %1209 = arith.addf %1197, %1208 : vector<2x128xf32>
    %1210 = vector.extract_strided_slice %8 {offsets = [1, 0], sizes = [1, 128], strides = [1, 1]} : vector<4x128xf32> to vector<1x128xf32>
    %1211 = vector.broadcast %1210 : vector<1x128xf32> to vector<2x128xf32>
    %1212 = arith.mulf %1069, %1211 : vector<2x128xf32>
    %1213 = arith.addf %1201, %1212 : vector<2x128xf32>
    %1214 = vector.extract_strided_slice %6 {offsets = [2, 0], sizes = [1, 128], strides = [1, 1]} : vector<4x128xf32> to vector<1x128xf32>
    %1215 = vector.broadcast %1214 : vector<1x128xf32> to vector<2x128xf32>
    %1216 = arith.mulf %1072, %1215 : vector<2x128xf32>
    %1217 = arith.addf %1205, %1216 : vector<2x128xf32>
    %1218 = vector.extract_strided_slice %7 {offsets = [2, 0], sizes = [1, 128], strides = [1, 1]} : vector<4x128xf32> to vector<1x128xf32>
    %1219 = vector.broadcast %1218 : vector<1x128xf32> to vector<2x128xf32>
    %1220 = arith.mulf %1072, %1219 : vector<2x128xf32>
    %1221 = arith.addf %1209, %1220 : vector<2x128xf32>
    %1222 = vector.extract_strided_slice %8 {offsets = [2, 0], sizes = [1, 128], strides = [1, 1]} : vector<4x128xf32> to vector<1x128xf32>
    %1223 = vector.broadcast %1222 : vector<1x128xf32> to vector<2x128xf32>
    %1224 = arith.mulf %1072, %1223 : vector<2x128xf32>
    %1225 = arith.addf %1213, %1224 : vector<2x128xf32>
    %1226 = vector.extract_strided_slice %6 {offsets = [3, 0], sizes = [1, 128], strides = [1, 1]} : vector<4x128xf32> to vector<1x128xf32>
    %1227 = vector.broadcast %1226 : vector<1x128xf32> to vector<2x128xf32>
    %1228 = arith.mulf %1075, %1227 : vector<2x128xf32>
    %1229 = arith.addf %1217, %1228 : vector<2x128xf32>
    %1230 = vector.extract_strided_slice %7 {offsets = [3, 0], sizes = [1, 128], strides = [1, 1]} : vector<4x128xf32> to vector<1x128xf32>
    %1231 = vector.broadcast %1230 : vector<1x128xf32> to vector<2x128xf32>
    %1232 = arith.mulf %1075, %1231 : vector<2x128xf32>
    %1233 = arith.addf %1221, %1232 : vector<2x128xf32>
    %1234 = vector.extract_strided_slice %8 {offsets = [3, 0], sizes = [1, 128], strides = [1, 1]} : vector<4x128xf32> to vector<1x128xf32>
    %1235 = vector.broadcast %1234 : vector<1x128xf32> to vector<2x128xf32>
    %1236 = arith.mulf %1075, %1235 : vector<2x128xf32>
    %1237 = arith.addf %1225, %1236 : vector<2x128xf32>
    %1238 = vector.extract_strided_slice %1063 {offsets = [0, 0], sizes = [2, 1], strides = [1, 1]} : vector<2x128xf32> to vector<2x1xf32>
    %1239 = vector.shape_cast %1238 : vector<2x1xf32> to vector<2x1xf32>
    %1240 = vector.broadcast %1239 : vector<2x1xf32> to vector<2x128xf32>
    %1241 = vector.extract_strided_slice %1063 {offsets = [0, 1], sizes = [2, 1], strides = [1, 1]} : vector<2x128xf32> to vector<2x1xf32>
    %1242 = vector.shape_cast %1241 : vector<2x1xf32> to vector<2x1xf32>
    %1243 = vector.broadcast %1242 : vector<2x1xf32> to vector<2x128xf32>
    %1244 = vector.extract_strided_slice %1063 {offsets = [0, 2], sizes = [2, 1], strides = [1, 1]} : vector<2x128xf32> to vector<2x1xf32>
    %1245 = vector.shape_cast %1244 : vector<2x1xf32> to vector<2x1xf32>
    %1246 = vector.broadcast %1245 : vector<2x1xf32> to vector<2x128xf32>
    %1247 = vector.extract_strided_slice %1063 {offsets = [0, 3], sizes = [2, 1], strides = [1, 1]} : vector<2x128xf32> to vector<2x1xf32>
    %1248 = vector.shape_cast %1247 : vector<2x1xf32> to vector<2x1xf32>
    %1249 = vector.broadcast %1248 : vector<2x1xf32> to vector<2x128xf32>
    %1250 = vector.extract_strided_slice %9 {offsets = [0, 0], sizes = [1, 128], strides = [1, 1]} : vector<4x128xf32> to vector<1x128xf32>
    %1251 = vector.broadcast %1250 : vector<1x128xf32> to vector<2x128xf32>
    %1252 = arith.mulf %1240, %1251 : vector<2x128xf32>
    %1253 = arith.addf %1229, %1252 : vector<2x128xf32>
    %1254 = vector.extract_strided_slice %10 {offsets = [0, 0], sizes = [1, 128], strides = [1, 1]} : vector<4x128xf32> to vector<1x128xf32>
    %1255 = vector.broadcast %1254 : vector<1x128xf32> to vector<2x128xf32>
    %1256 = arith.mulf %1240, %1255 : vector<2x128xf32>
    %1257 = arith.addf %1233, %1256 : vector<2x128xf32>
    %1258 = vector.extract_strided_slice %11 {offsets = [0, 0], sizes = [1, 128], strides = [1, 1]} : vector<4x128xf32> to vector<1x128xf32>
    %1259 = vector.broadcast %1258 : vector<1x128xf32> to vector<2x128xf32>
    %1260 = arith.mulf %1240, %1259 : vector<2x128xf32>
    %1261 = arith.addf %36, %1260 : vector<2x128xf32>
    %1262 = vector.extract_strided_slice %9 {offsets = [1, 0], sizes = [1, 128], strides = [1, 1]} : vector<4x128xf32> to vector<1x128xf32>
    %1263 = vector.broadcast %1262 : vector<1x128xf32> to vector<2x128xf32>
    %1264 = arith.mulf %1243, %1263 : vector<2x128xf32>
    %1265 = arith.addf %1253, %1264 : vector<2x128xf32>
    %1266 = vector.extract_strided_slice %10 {offsets = [1, 0], sizes = [1, 128], strides = [1, 1]} : vector<4x128xf32> to vector<1x128xf32>
    %1267 = vector.broadcast %1266 : vector<1x128xf32> to vector<2x128xf32>
    %1268 = arith.mulf %1243, %1267 : vector<2x128xf32>
    %1269 = arith.addf %1257, %1268 : vector<2x128xf32>
    %1270 = vector.extract_strided_slice %11 {offsets = [1, 0], sizes = [1, 128], strides = [1, 1]} : vector<4x128xf32> to vector<1x128xf32>
    %1271 = vector.broadcast %1270 : vector<1x128xf32> to vector<2x128xf32>
    %1272 = arith.mulf %1243, %1271 : vector<2x128xf32>
    %1273 = arith.addf %1261, %1272 : vector<2x128xf32>
    %1274 = vector.extract_strided_slice %9 {offsets = [2, 0], sizes = [1, 128], strides = [1, 1]} : vector<4x128xf32> to vector<1x128xf32>
    %1275 = vector.broadcast %1274 : vector<1x128xf32> to vector<2x128xf32>
    %1276 = arith.mulf %1246, %1275 : vector<2x128xf32>
    %1277 = arith.addf %1265, %1276 : vector<2x128xf32>
    %1278 = vector.extract_strided_slice %10 {offsets = [2, 0], sizes = [1, 128], strides = [1, 1]} : vector<4x128xf32> to vector<1x128xf32>
    %1279 = vector.broadcast %1278 : vector<1x128xf32> to vector<2x128xf32>
    %1280 = arith.mulf %1246, %1279 : vector<2x128xf32>
    %1281 = arith.addf %1269, %1280 : vector<2x128xf32>
    %1282 = vector.extract_strided_slice %11 {offsets = [2, 0], sizes = [1, 128], strides = [1, 1]} : vector<4x128xf32> to vector<1x128xf32>
    %1283 = vector.broadcast %1282 : vector<1x128xf32> to vector<2x128xf32>
    %1284 = arith.mulf %1246, %1283 : vector<2x128xf32>
    %1285 = arith.addf %1273, %1284 : vector<2x128xf32>
    %1286 = vector.extract_strided_slice %9 {offsets = [3, 0], sizes = [1, 128], strides = [1, 1]} : vector<4x128xf32> to vector<1x128xf32>
    %1287 = vector.broadcast %1286 : vector<1x128xf32> to vector<2x128xf32>
    %1288 = arith.mulf %1249, %1287 : vector<2x128xf32>
    %1289 = arith.addf %1277, %1288 : vector<2x128xf32>
    %1290 = vector.extract_strided_slice %10 {offsets = [3, 0], sizes = [1, 128], strides = [1, 1]} : vector<4x128xf32> to vector<1x128xf32>
    %1291 = vector.broadcast %1290 : vector<1x128xf32> to vector<2x128xf32>
    %1292 = arith.mulf %1249, %1291 : vector<2x128xf32>
    %1293 = arith.addf %1281, %1292 : vector<2x128xf32>
    %1294 = vector.extract_strided_slice %11 {offsets = [3, 0], sizes = [1, 128], strides = [1, 1]} : vector<4x128xf32> to vector<1x128xf32>
    %1295 = vector.broadcast %1294 : vector<1x128xf32> to vector<2x128xf32>
    %1296 = arith.mulf %1249, %1295 : vector<2x128xf32>
    %1297 = arith.addf %1285, %1296 : vector<2x128xf32>
    %cst_93 = arith.constant 5.000000e-01 : f32
    %1298 = vector.broadcast %cst_93 : f32 to vector<2x128xf32>
    %1299 = arith.mulf %1298, %1289 : vector<2x128xf32>
    %1300 = math.tanh %1299 : vector<2x128xf32>
    %cst_94 = arith.constant 5.000000e-01 : f32
    %1301 = vector.broadcast %cst_94 : f32 to vector<2x128xf32>
    %1302 = arith.mulf %1301, %1300 : vector<2x128xf32>
    %cst_95 = arith.constant 5.000000e-01 : f32
    %1303 = vector.broadcast %cst_95 : f32 to vector<2x128xf32>
    %1304 = arith.addf %1302, %1303 : vector<2x128xf32>
    %cst_96 = arith.constant 5.000000e-01 : f32
    %1305 = vector.broadcast %cst_96 : f32 to vector<2x128xf32>
    %1306 = arith.mulf %1305, %1293 : vector<2x128xf32>
    %1307 = math.tanh %1306 : vector<2x128xf32>
    %cst_97 = arith.constant 5.000000e-01 : f32
    %1308 = vector.broadcast %cst_97 : f32 to vector<2x128xf32>
    %1309 = arith.mulf %1308, %1307 : vector<2x128xf32>
    %cst_98 = arith.constant 5.000000e-01 : f32
    %1310 = vector.broadcast %cst_98 : f32 to vector<2x128xf32>
    %1311 = arith.addf %1309, %1310 : vector<2x128xf32>
    %1312 = arith.mulf %1304, %1297 : vector<2x128xf32>
    %1313 = arith.addf %1237, %1312 : vector<2x128xf32>
    %1314 = math.tanh %1313 : vector<2x128xf32>
    %1315 = arith.subf %1063, %1314 : vector<2x128xf32>
    %1316 = arith.mulf %1311, %1315 : vector<2x128xf32>
    %1317 = arith.addf %1316, %1314 : vector<2x128xf32>
    %1318 = vector.extract_strided_slice %1189 {offsets = [0, 0], sizes = [2, 1], strides = [1, 1]} : vector<2x128xf32> to vector<2x1xf32>
    %1319 = vector.shape_cast %1318 : vector<2x1xf32> to vector<2x1xf32>
    %1320 = vector.broadcast %1319 : vector<2x1xf32> to vector<2x128xf32>
    %1321 = vector.extract_strided_slice %1189 {offsets = [0, 1], sizes = [2, 1], strides = [1, 1]} : vector<2x128xf32> to vector<2x1xf32>
    %1322 = vector.shape_cast %1321 : vector<2x1xf32> to vector<2x1xf32>
    %1323 = vector.broadcast %1322 : vector<2x1xf32> to vector<2x128xf32>
    %1324 = vector.extract_strided_slice %1189 {offsets = [0, 2], sizes = [2, 1], strides = [1, 1]} : vector<2x128xf32> to vector<2x1xf32>
    %1325 = vector.shape_cast %1324 : vector<2x1xf32> to vector<2x1xf32>
    %1326 = vector.broadcast %1325 : vector<2x1xf32> to vector<2x128xf32>
    %1327 = vector.extract_strided_slice %1189 {offsets = [0, 3], sizes = [2, 1], strides = [1, 1]} : vector<2x128xf32> to vector<2x1xf32>
    %1328 = vector.shape_cast %1327 : vector<2x1xf32> to vector<2x1xf32>
    %1329 = vector.broadcast %1328 : vector<2x1xf32> to vector<2x128xf32>
    %c0_99 = arith.constant 0 : index
    %c18 = arith.constant 18 : index
    %1330 = vector.load %arg0[%c0_99, %c18] : memref<2x24xf32, #tpu.memory_space<vmem>>, vector<2x3xf32>
    %1331 = vector.extract_strided_slice %1330 {offsets = [0, 0], sizes = [2, 1], strides = [1, 1]} : vector<2x3xf32> to vector<2x1xf32>
    %1332 = vector.shape_cast %1331 : vector<2x1xf32> to vector<2x1xf32>
    %1333 = vector.broadcast %1332 : vector<2x1xf32> to vector<2x128xf32>
    %1334 = vector.extract_strided_slice %1330 {offsets = [0, 1], sizes = [2, 1], strides = [1, 1]} : vector<2x3xf32> to vector<2x1xf32>
    %1335 = vector.shape_cast %1334 : vector<2x1xf32> to vector<2x1xf32>
    %1336 = vector.broadcast %1335 : vector<2x1xf32> to vector<2x128xf32>
    %1337 = vector.extract_strided_slice %1330 {offsets = [0, 2], sizes = [2, 1], strides = [1, 1]} : vector<2x3xf32> to vector<2x1xf32>
    %1338 = vector.shape_cast %1337 : vector<2x1xf32> to vector<2x1xf32>
    %1339 = vector.broadcast %1338 : vector<2x1xf32> to vector<2x128xf32>
    %1340 = vector.extract_strided_slice %0 {offsets = [0, 0], sizes = [1, 128], strides = [1, 1]} : vector<3x128xf32> to vector<1x128xf32>
    %1341 = vector.broadcast %1340 : vector<1x128xf32> to vector<2x128xf32>
    %1342 = arith.mulf %1333, %1341 : vector<2x128xf32>
    %1343 = arith.addf %15, %1342 : vector<2x128xf32>
    %1344 = vector.extract_strided_slice %1 {offsets = [0, 0], sizes = [1, 128], strides = [1, 1]} : vector<3x128xf32> to vector<1x128xf32>
    %1345 = vector.broadcast %1344 : vector<1x128xf32> to vector<2x128xf32>
    %1346 = arith.mulf %1333, %1345 : vector<2x128xf32>
    %1347 = arith.addf %18, %1346 : vector<2x128xf32>
    %1348 = vector.extract_strided_slice %2 {offsets = [0, 0], sizes = [1, 128], strides = [1, 1]} : vector<3x128xf32> to vector<1x128xf32>
    %1349 = vector.broadcast %1348 : vector<1x128xf32> to vector<2x128xf32>
    %1350 = arith.mulf %1333, %1349 : vector<2x128xf32>
    %1351 = arith.addf %21, %1350 : vector<2x128xf32>
    %1352 = vector.extract_strided_slice %0 {offsets = [1, 0], sizes = [1, 128], strides = [1, 1]} : vector<3x128xf32> to vector<1x128xf32>
    %1353 = vector.broadcast %1352 : vector<1x128xf32> to vector<2x128xf32>
    %1354 = arith.mulf %1336, %1353 : vector<2x128xf32>
    %1355 = arith.addf %1343, %1354 : vector<2x128xf32>
    %1356 = vector.extract_strided_slice %1 {offsets = [1, 0], sizes = [1, 128], strides = [1, 1]} : vector<3x128xf32> to vector<1x128xf32>
    %1357 = vector.broadcast %1356 : vector<1x128xf32> to vector<2x128xf32>
    %1358 = arith.mulf %1336, %1357 : vector<2x128xf32>
    %1359 = arith.addf %1347, %1358 : vector<2x128xf32>
    %1360 = vector.extract_strided_slice %2 {offsets = [1, 0], sizes = [1, 128], strides = [1, 1]} : vector<3x128xf32> to vector<1x128xf32>
    %1361 = vector.broadcast %1360 : vector<1x128xf32> to vector<2x128xf32>
    %1362 = arith.mulf %1336, %1361 : vector<2x128xf32>
    %1363 = arith.addf %1351, %1362 : vector<2x128xf32>
    %1364 = vector.extract_strided_slice %0 {offsets = [2, 0], sizes = [1, 128], strides = [1, 1]} : vector<3x128xf32> to vector<1x128xf32>
    %1365 = vector.broadcast %1364 : vector<1x128xf32> to vector<2x128xf32>
    %1366 = arith.mulf %1339, %1365 : vector<2x128xf32>
    %1367 = arith.addf %1355, %1366 : vector<2x128xf32>
    %1368 = vector.extract_strided_slice %1 {offsets = [2, 0], sizes = [1, 128], strides = [1, 1]} : vector<3x128xf32> to vector<1x128xf32>
    %1369 = vector.broadcast %1368 : vector<1x128xf32> to vector<2x128xf32>
    %1370 = arith.mulf %1339, %1369 : vector<2x128xf32>
    %1371 = arith.addf %1359, %1370 : vector<2x128xf32>
    %1372 = vector.extract_strided_slice %2 {offsets = [2, 0], sizes = [1, 128], strides = [1, 1]} : vector<3x128xf32> to vector<1x128xf32>
    %1373 = vector.broadcast %1372 : vector<1x128xf32> to vector<2x128xf32>
    %1374 = arith.mulf %1339, %1373 : vector<2x128xf32>
    %1375 = arith.addf %1363, %1374 : vector<2x128xf32>
    %1376 = vector.extract_strided_slice %3 {offsets = [0, 0], sizes = [1, 128], strides = [1, 1]} : vector<4x128xf32> to vector<1x128xf32>
    %1377 = vector.broadcast %1376 : vector<1x128xf32> to vector<2x128xf32>
    %1378 = arith.mulf %1320, %1377 : vector<2x128xf32>
    %1379 = arith.addf %1367, %1378 : vector<2x128xf32>
    %1380 = vector.extract_strided_slice %4 {offsets = [0, 0], sizes = [1, 128], strides = [1, 1]} : vector<4x128xf32> to vector<1x128xf32>
    %1381 = vector.broadcast %1380 : vector<1x128xf32> to vector<2x128xf32>
    %1382 = arith.mulf %1320, %1381 : vector<2x128xf32>
    %1383 = arith.addf %1371, %1382 : vector<2x128xf32>
    %1384 = vector.extract_strided_slice %5 {offsets = [0, 0], sizes = [1, 128], strides = [1, 1]} : vector<4x128xf32> to vector<1x128xf32>
    %1385 = vector.broadcast %1384 : vector<1x128xf32> to vector<2x128xf32>
    %1386 = arith.mulf %1320, %1385 : vector<2x128xf32>
    %1387 = arith.addf %24, %1386 : vector<2x128xf32>
    %1388 = vector.extract_strided_slice %3 {offsets = [1, 0], sizes = [1, 128], strides = [1, 1]} : vector<4x128xf32> to vector<1x128xf32>
    %1389 = vector.broadcast %1388 : vector<1x128xf32> to vector<2x128xf32>
    %1390 = arith.mulf %1323, %1389 : vector<2x128xf32>
    %1391 = arith.addf %1379, %1390 : vector<2x128xf32>
    %1392 = vector.extract_strided_slice %4 {offsets = [1, 0], sizes = [1, 128], strides = [1, 1]} : vector<4x128xf32> to vector<1x128xf32>
    %1393 = vector.broadcast %1392 : vector<1x128xf32> to vector<2x128xf32>
    %1394 = arith.mulf %1323, %1393 : vector<2x128xf32>
    %1395 = arith.addf %1383, %1394 : vector<2x128xf32>
    %1396 = vector.extract_strided_slice %5 {offsets = [1, 0], sizes = [1, 128], strides = [1, 1]} : vector<4x128xf32> to vector<1x128xf32>
    %1397 = vector.broadcast %1396 : vector<1x128xf32> to vector<2x128xf32>
    %1398 = arith.mulf %1323, %1397 : vector<2x128xf32>
    %1399 = arith.addf %1387, %1398 : vector<2x128xf32>
    %1400 = vector.extract_strided_slice %3 {offsets = [2, 0], sizes = [1, 128], strides = [1, 1]} : vector<4x128xf32> to vector<1x128xf32>
    %1401 = vector.broadcast %1400 : vector<1x128xf32> to vector<2x128xf32>
    %1402 = arith.mulf %1326, %1401 : vector<2x128xf32>
    %1403 = arith.addf %1391, %1402 : vector<2x128xf32>
    %1404 = vector.extract_strided_slice %4 {offsets = [2, 0], sizes = [1, 128], strides = [1, 1]} : vector<4x128xf32> to vector<1x128xf32>
    %1405 = vector.broadcast %1404 : vector<1x128xf32> to vector<2x128xf32>
    %1406 = arith.mulf %1326, %1405 : vector<2x128xf32>
    %1407 = arith.addf %1395, %1406 : vector<2x128xf32>
    %1408 = vector.extract_strided_slice %5 {offsets = [2, 0], sizes = [1, 128], strides = [1, 1]} : vector<4x128xf32> to vector<1x128xf32>
    %1409 = vector.broadcast %1408 : vector<1x128xf32> to vector<2x128xf32>
    %1410 = arith.mulf %1326, %1409 : vector<2x128xf32>
    %1411 = arith.addf %1399, %1410 : vector<2x128xf32>
    %1412 = vector.extract_strided_slice %3 {offsets = [3, 0], sizes = [1, 128], strides = [1, 1]} : vector<4x128xf32> to vector<1x128xf32>
    %1413 = vector.broadcast %1412 : vector<1x128xf32> to vector<2x128xf32>
    %1414 = arith.mulf %1329, %1413 : vector<2x128xf32>
    %1415 = arith.addf %1403, %1414 : vector<2x128xf32>
    %1416 = vector.extract_strided_slice %4 {offsets = [3, 0], sizes = [1, 128], strides = [1, 1]} : vector<4x128xf32> to vector<1x128xf32>
    %1417 = vector.broadcast %1416 : vector<1x128xf32> to vector<2x128xf32>
    %1418 = arith.mulf %1329, %1417 : vector<2x128xf32>
    %1419 = arith.addf %1407, %1418 : vector<2x128xf32>
    %1420 = vector.extract_strided_slice %5 {offsets = [3, 0], sizes = [1, 128], strides = [1, 1]} : vector<4x128xf32> to vector<1x128xf32>
    %1421 = vector.broadcast %1420 : vector<1x128xf32> to vector<2x128xf32>
    %1422 = arith.mulf %1329, %1421 : vector<2x128xf32>
    %1423 = arith.addf %1411, %1422 : vector<2x128xf32>
    %cst_100 = arith.constant 5.000000e-01 : f32
    %1424 = vector.broadcast %cst_100 : f32 to vector<2x128xf32>
    %1425 = arith.mulf %1424, %1415 : vector<2x128xf32>
    %1426 = math.tanh %1425 : vector<2x128xf32>
    %cst_101 = arith.constant 5.000000e-01 : f32
    %1427 = vector.broadcast %cst_101 : f32 to vector<2x128xf32>
    %1428 = arith.mulf %1427, %1426 : vector<2x128xf32>
    %cst_102 = arith.constant 5.000000e-01 : f32
    %1429 = vector.broadcast %cst_102 : f32 to vector<2x128xf32>
    %1430 = arith.addf %1428, %1429 : vector<2x128xf32>
    %cst_103 = arith.constant 5.000000e-01 : f32
    %1431 = vector.broadcast %cst_103 : f32 to vector<2x128xf32>
    %1432 = arith.mulf %1431, %1419 : vector<2x128xf32>
    %1433 = math.tanh %1432 : vector<2x128xf32>
    %cst_104 = arith.constant 5.000000e-01 : f32
    %1434 = vector.broadcast %cst_104 : f32 to vector<2x128xf32>
    %1435 = arith.mulf %1434, %1433 : vector<2x128xf32>
    %cst_105 = arith.constant 5.000000e-01 : f32
    %1436 = vector.broadcast %cst_105 : f32 to vector<2x128xf32>
    %1437 = arith.addf %1435, %1436 : vector<2x128xf32>
    %1438 = arith.mulf %1430, %1423 : vector<2x128xf32>
    %1439 = arith.addf %1375, %1438 : vector<2x128xf32>
    %1440 = math.tanh %1439 : vector<2x128xf32>
    %1441 = arith.subf %1189, %1440 : vector<2x128xf32>
    %1442 = arith.mulf %1437, %1441 : vector<2x128xf32>
    %1443 = arith.addf %1442, %1440 : vector<2x128xf32>
    %1444 = vector.extract_strided_slice %6 {offsets = [0, 0], sizes = [1, 128], strides = [1, 1]} : vector<4x128xf32> to vector<1x128xf32>
    %1445 = vector.broadcast %1444 : vector<1x128xf32> to vector<2x128xf32>
    %1446 = arith.mulf %1320, %1445 : vector<2x128xf32>
    %1447 = arith.addf %27, %1446 : vector<2x128xf32>
    %1448 = vector.extract_strided_slice %7 {offsets = [0, 0], sizes = [1, 128], strides = [1, 1]} : vector<4x128xf32> to vector<1x128xf32>
    %1449 = vector.broadcast %1448 : vector<1x128xf32> to vector<2x128xf32>
    %1450 = arith.mulf %1320, %1449 : vector<2x128xf32>
    %1451 = arith.addf %30, %1450 : vector<2x128xf32>
    %1452 = vector.extract_strided_slice %8 {offsets = [0, 0], sizes = [1, 128], strides = [1, 1]} : vector<4x128xf32> to vector<1x128xf32>
    %1453 = vector.broadcast %1452 : vector<1x128xf32> to vector<2x128xf32>
    %1454 = arith.mulf %1320, %1453 : vector<2x128xf32>
    %1455 = arith.addf %33, %1454 : vector<2x128xf32>
    %1456 = vector.extract_strided_slice %6 {offsets = [1, 0], sizes = [1, 128], strides = [1, 1]} : vector<4x128xf32> to vector<1x128xf32>
    %1457 = vector.broadcast %1456 : vector<1x128xf32> to vector<2x128xf32>
    %1458 = arith.mulf %1323, %1457 : vector<2x128xf32>
    %1459 = arith.addf %1447, %1458 : vector<2x128xf32>
    %1460 = vector.extract_strided_slice %7 {offsets = [1, 0], sizes = [1, 128], strides = [1, 1]} : vector<4x128xf32> to vector<1x128xf32>
    %1461 = vector.broadcast %1460 : vector<1x128xf32> to vector<2x128xf32>
    %1462 = arith.mulf %1323, %1461 : vector<2x128xf32>
    %1463 = arith.addf %1451, %1462 : vector<2x128xf32>
    %1464 = vector.extract_strided_slice %8 {offsets = [1, 0], sizes = [1, 128], strides = [1, 1]} : vector<4x128xf32> to vector<1x128xf32>
    %1465 = vector.broadcast %1464 : vector<1x128xf32> to vector<2x128xf32>
    %1466 = arith.mulf %1323, %1465 : vector<2x128xf32>
    %1467 = arith.addf %1455, %1466 : vector<2x128xf32>
    %1468 = vector.extract_strided_slice %6 {offsets = [2, 0], sizes = [1, 128], strides = [1, 1]} : vector<4x128xf32> to vector<1x128xf32>
    %1469 = vector.broadcast %1468 : vector<1x128xf32> to vector<2x128xf32>
    %1470 = arith.mulf %1326, %1469 : vector<2x128xf32>
    %1471 = arith.addf %1459, %1470 : vector<2x128xf32>
    %1472 = vector.extract_strided_slice %7 {offsets = [2, 0], sizes = [1, 128], strides = [1, 1]} : vector<4x128xf32> to vector<1x128xf32>
    %1473 = vector.broadcast %1472 : vector<1x128xf32> to vector<2x128xf32>
    %1474 = arith.mulf %1326, %1473 : vector<2x128xf32>
    %1475 = arith.addf %1463, %1474 : vector<2x128xf32>
    %1476 = vector.extract_strided_slice %8 {offsets = [2, 0], sizes = [1, 128], strides = [1, 1]} : vector<4x128xf32> to vector<1x128xf32>
    %1477 = vector.broadcast %1476 : vector<1x128xf32> to vector<2x128xf32>
    %1478 = arith.mulf %1326, %1477 : vector<2x128xf32>
    %1479 = arith.addf %1467, %1478 : vector<2x128xf32>
    %1480 = vector.extract_strided_slice %6 {offsets = [3, 0], sizes = [1, 128], strides = [1, 1]} : vector<4x128xf32> to vector<1x128xf32>
    %1481 = vector.broadcast %1480 : vector<1x128xf32> to vector<2x128xf32>
    %1482 = arith.mulf %1329, %1481 : vector<2x128xf32>
    %1483 = arith.addf %1471, %1482 : vector<2x128xf32>
    %1484 = vector.extract_strided_slice %7 {offsets = [3, 0], sizes = [1, 128], strides = [1, 1]} : vector<4x128xf32> to vector<1x128xf32>
    %1485 = vector.broadcast %1484 : vector<1x128xf32> to vector<2x128xf32>
    %1486 = arith.mulf %1329, %1485 : vector<2x128xf32>
    %1487 = arith.addf %1475, %1486 : vector<2x128xf32>
    %1488 = vector.extract_strided_slice %8 {offsets = [3, 0], sizes = [1, 128], strides = [1, 1]} : vector<4x128xf32> to vector<1x128xf32>
    %1489 = vector.broadcast %1488 : vector<1x128xf32> to vector<2x128xf32>
    %1490 = arith.mulf %1329, %1489 : vector<2x128xf32>
    %1491 = arith.addf %1479, %1490 : vector<2x128xf32>
    %1492 = vector.extract_strided_slice %1317 {offsets = [0, 0], sizes = [2, 1], strides = [1, 1]} : vector<2x128xf32> to vector<2x1xf32>
    %1493 = vector.shape_cast %1492 : vector<2x1xf32> to vector<2x1xf32>
    %1494 = vector.broadcast %1493 : vector<2x1xf32> to vector<2x128xf32>
    %1495 = vector.extract_strided_slice %1317 {offsets = [0, 1], sizes = [2, 1], strides = [1, 1]} : vector<2x128xf32> to vector<2x1xf32>
    %1496 = vector.shape_cast %1495 : vector<2x1xf32> to vector<2x1xf32>
    %1497 = vector.broadcast %1496 : vector<2x1xf32> to vector<2x128xf32>
    %1498 = vector.extract_strided_slice %1317 {offsets = [0, 2], sizes = [2, 1], strides = [1, 1]} : vector<2x128xf32> to vector<2x1xf32>
    %1499 = vector.shape_cast %1498 : vector<2x1xf32> to vector<2x1xf32>
    %1500 = vector.broadcast %1499 : vector<2x1xf32> to vector<2x128xf32>
    %1501 = vector.extract_strided_slice %1317 {offsets = [0, 3], sizes = [2, 1], strides = [1, 1]} : vector<2x128xf32> to vector<2x1xf32>
    %1502 = vector.shape_cast %1501 : vector<2x1xf32> to vector<2x1xf32>
    %1503 = vector.broadcast %1502 : vector<2x1xf32> to vector<2x128xf32>
    %1504 = vector.extract_strided_slice %9 {offsets = [0, 0], sizes = [1, 128], strides = [1, 1]} : vector<4x128xf32> to vector<1x128xf32>
    %1505 = vector.broadcast %1504 : vector<1x128xf32> to vector<2x128xf32>
    %1506 = arith.mulf %1494, %1505 : vector<2x128xf32>
    %1507 = arith.addf %1483, %1506 : vector<2x128xf32>
    %1508 = vector.extract_strided_slice %10 {offsets = [0, 0], sizes = [1, 128], strides = [1, 1]} : vector<4x128xf32> to vector<1x128xf32>
    %1509 = vector.broadcast %1508 : vector<1x128xf32> to vector<2x128xf32>
    %1510 = arith.mulf %1494, %1509 : vector<2x128xf32>
    %1511 = arith.addf %1487, %1510 : vector<2x128xf32>
    %1512 = vector.extract_strided_slice %11 {offsets = [0, 0], sizes = [1, 128], strides = [1, 1]} : vector<4x128xf32> to vector<1x128xf32>
    %1513 = vector.broadcast %1512 : vector<1x128xf32> to vector<2x128xf32>
    %1514 = arith.mulf %1494, %1513 : vector<2x128xf32>
    %1515 = arith.addf %36, %1514 : vector<2x128xf32>
    %1516 = vector.extract_strided_slice %9 {offsets = [1, 0], sizes = [1, 128], strides = [1, 1]} : vector<4x128xf32> to vector<1x128xf32>
    %1517 = vector.broadcast %1516 : vector<1x128xf32> to vector<2x128xf32>
    %1518 = arith.mulf %1497, %1517 : vector<2x128xf32>
    %1519 = arith.addf %1507, %1518 : vector<2x128xf32>
    %1520 = vector.extract_strided_slice %10 {offsets = [1, 0], sizes = [1, 128], strides = [1, 1]} : vector<4x128xf32> to vector<1x128xf32>
    %1521 = vector.broadcast %1520 : vector<1x128xf32> to vector<2x128xf32>
    %1522 = arith.mulf %1497, %1521 : vector<2x128xf32>
    %1523 = arith.addf %1511, %1522 : vector<2x128xf32>
    %1524 = vector.extract_strided_slice %11 {offsets = [1, 0], sizes = [1, 128], strides = [1, 1]} : vector<4x128xf32> to vector<1x128xf32>
    %1525 = vector.broadcast %1524 : vector<1x128xf32> to vector<2x128xf32>
    %1526 = arith.mulf %1497, %1525 : vector<2x128xf32>
    %1527 = arith.addf %1515, %1526 : vector<2x128xf32>
    %1528 = vector.extract_strided_slice %9 {offsets = [2, 0], sizes = [1, 128], strides = [1, 1]} : vector<4x128xf32> to vector<1x128xf32>
    %1529 = vector.broadcast %1528 : vector<1x128xf32> to vector<2x128xf32>
    %1530 = arith.mulf %1500, %1529 : vector<2x128xf32>
    %1531 = arith.addf %1519, %1530 : vector<2x128xf32>
    %1532 = vector.extract_strided_slice %10 {offsets = [2, 0], sizes = [1, 128], strides = [1, 1]} : vector<4x128xf32> to vector<1x128xf32>
    %1533 = vector.broadcast %1532 : vector<1x128xf32> to vector<2x128xf32>
    %1534 = arith.mulf %1500, %1533 : vector<2x128xf32>
    %1535 = arith.addf %1523, %1534 : vector<2x128xf32>
    %1536 = vector.extract_strided_slice %11 {offsets = [2, 0], sizes = [1, 128], strides = [1, 1]} : vector<4x128xf32> to vector<1x128xf32>
    %1537 = vector.broadcast %1536 : vector<1x128xf32> to vector<2x128xf32>
    %1538 = arith.mulf %1500, %1537 : vector<2x128xf32>
    %1539 = arith.addf %1527, %1538 : vector<2x128xf32>
    %1540 = vector.extract_strided_slice %9 {offsets = [3, 0], sizes = [1, 128], strides = [1, 1]} : vector<4x128xf32> to vector<1x128xf32>
    %1541 = vector.broadcast %1540 : vector<1x128xf32> to vector<2x128xf32>
    %1542 = arith.mulf %1503, %1541 : vector<2x128xf32>
    %1543 = arith.addf %1531, %1542 : vector<2x128xf32>
    %1544 = vector.extract_strided_slice %10 {offsets = [3, 0], sizes = [1, 128], strides = [1, 1]} : vector<4x128xf32> to vector<1x128xf32>
    %1545 = vector.broadcast %1544 : vector<1x128xf32> to vector<2x128xf32>
    %1546 = arith.mulf %1503, %1545 : vector<2x128xf32>
    %1547 = arith.addf %1535, %1546 : vector<2x128xf32>
    %1548 = vector.extract_strided_slice %11 {offsets = [3, 0], sizes = [1, 128], strides = [1, 1]} : vector<4x128xf32> to vector<1x128xf32>
    %1549 = vector.broadcast %1548 : vector<1x128xf32> to vector<2x128xf32>
    %1550 = arith.mulf %1503, %1549 : vector<2x128xf32>
    %1551 = arith.addf %1539, %1550 : vector<2x128xf32>
    %cst_106 = arith.constant 5.000000e-01 : f32
    %1552 = vector.broadcast %cst_106 : f32 to vector<2x128xf32>
    %1553 = arith.mulf %1552, %1543 : vector<2x128xf32>
    %1554 = math.tanh %1553 : vector<2x128xf32>
    %cst_107 = arith.constant 5.000000e-01 : f32
    %1555 = vector.broadcast %cst_107 : f32 to vector<2x128xf32>
    %1556 = arith.mulf %1555, %1554 : vector<2x128xf32>
    %cst_108 = arith.constant 5.000000e-01 : f32
    %1557 = vector.broadcast %cst_108 : f32 to vector<2x128xf32>
    %1558 = arith.addf %1556, %1557 : vector<2x128xf32>
    %cst_109 = arith.constant 5.000000e-01 : f32
    %1559 = vector.broadcast %cst_109 : f32 to vector<2x128xf32>
    %1560 = arith.mulf %1559, %1547 : vector<2x128xf32>
    %1561 = math.tanh %1560 : vector<2x128xf32>
    %cst_110 = arith.constant 5.000000e-01 : f32
    %1562 = vector.broadcast %cst_110 : f32 to vector<2x128xf32>
    %1563 = arith.mulf %1562, %1561 : vector<2x128xf32>
    %cst_111 = arith.constant 5.000000e-01 : f32
    %1564 = vector.broadcast %cst_111 : f32 to vector<2x128xf32>
    %1565 = arith.addf %1563, %1564 : vector<2x128xf32>
    %1566 = arith.mulf %1558, %1551 : vector<2x128xf32>
    %1567 = arith.addf %1491, %1566 : vector<2x128xf32>
    %1568 = math.tanh %1567 : vector<2x128xf32>
    %1569 = arith.subf %1317, %1568 : vector<2x128xf32>
    %1570 = arith.mulf %1565, %1569 : vector<2x128xf32>
    %1571 = arith.addf %1570, %1568 : vector<2x128xf32>
    %1572 = vector.extract_strided_slice %1443 {offsets = [0, 0], sizes = [2, 1], strides = [1, 1]} : vector<2x128xf32> to vector<2x1xf32>
    %1573 = vector.shape_cast %1572 : vector<2x1xf32> to vector<2x1xf32>
    %1574 = vector.broadcast %1573 : vector<2x1xf32> to vector<2x128xf32>
    %1575 = vector.extract_strided_slice %1443 {offsets = [0, 1], sizes = [2, 1], strides = [1, 1]} : vector<2x128xf32> to vector<2x1xf32>
    %1576 = vector.shape_cast %1575 : vector<2x1xf32> to vector<2x1xf32>
    %1577 = vector.broadcast %1576 : vector<2x1xf32> to vector<2x128xf32>
    %1578 = vector.extract_strided_slice %1443 {offsets = [0, 2], sizes = [2, 1], strides = [1, 1]} : vector<2x128xf32> to vector<2x1xf32>
    %1579 = vector.shape_cast %1578 : vector<2x1xf32> to vector<2x1xf32>
    %1580 = vector.broadcast %1579 : vector<2x1xf32> to vector<2x128xf32>
    %1581 = vector.extract_strided_slice %1443 {offsets = [0, 3], sizes = [2, 1], strides = [1, 1]} : vector<2x128xf32> to vector<2x1xf32>
    %1582 = vector.shape_cast %1581 : vector<2x1xf32> to vector<2x1xf32>
    %1583 = vector.broadcast %1582 : vector<2x1xf32> to vector<2x128xf32>
    %c0_112 = arith.constant 0 : index
    %c21_113 = arith.constant 21 : index
    %1584 = vector.load %arg0[%c0_112, %c21_113] : memref<2x24xf32, #tpu.memory_space<vmem>>, vector<2x3xf32>
    %1585 = vector.extract_strided_slice %1584 {offsets = [0, 0], sizes = [2, 1], strides = [1, 1]} : vector<2x3xf32> to vector<2x1xf32>
    %1586 = vector.shape_cast %1585 : vector<2x1xf32> to vector<2x1xf32>
    %1587 = vector.broadcast %1586 : vector<2x1xf32> to vector<2x128xf32>
    %1588 = vector.extract_strided_slice %1584 {offsets = [0, 1], sizes = [2, 1], strides = [1, 1]} : vector<2x3xf32> to vector<2x1xf32>
    %1589 = vector.shape_cast %1588 : vector<2x1xf32> to vector<2x1xf32>
    %1590 = vector.broadcast %1589 : vector<2x1xf32> to vector<2x128xf32>
    %1591 = vector.extract_strided_slice %1584 {offsets = [0, 2], sizes = [2, 1], strides = [1, 1]} : vector<2x3xf32> to vector<2x1xf32>
    %1592 = vector.shape_cast %1591 : vector<2x1xf32> to vector<2x1xf32>
    %1593 = vector.broadcast %1592 : vector<2x1xf32> to vector<2x128xf32>
    %1594 = vector.extract_strided_slice %0 {offsets = [0, 0], sizes = [1, 128], strides = [1, 1]} : vector<3x128xf32> to vector<1x128xf32>
    %1595 = vector.broadcast %1594 : vector<1x128xf32> to vector<2x128xf32>
    %1596 = arith.mulf %1587, %1595 : vector<2x128xf32>
    %1597 = arith.addf %15, %1596 : vector<2x128xf32>
    %1598 = vector.extract_strided_slice %1 {offsets = [0, 0], sizes = [1, 128], strides = [1, 1]} : vector<3x128xf32> to vector<1x128xf32>
    %1599 = vector.broadcast %1598 : vector<1x128xf32> to vector<2x128xf32>
    %1600 = arith.mulf %1587, %1599 : vector<2x128xf32>
    %1601 = arith.addf %18, %1600 : vector<2x128xf32>
    %1602 = vector.extract_strided_slice %2 {offsets = [0, 0], sizes = [1, 128], strides = [1, 1]} : vector<3x128xf32> to vector<1x128xf32>
    %1603 = vector.broadcast %1602 : vector<1x128xf32> to vector<2x128xf32>
    %1604 = arith.mulf %1587, %1603 : vector<2x128xf32>
    %1605 = arith.addf %21, %1604 : vector<2x128xf32>
    %1606 = vector.extract_strided_slice %0 {offsets = [1, 0], sizes = [1, 128], strides = [1, 1]} : vector<3x128xf32> to vector<1x128xf32>
    %1607 = vector.broadcast %1606 : vector<1x128xf32> to vector<2x128xf32>
    %1608 = arith.mulf %1590, %1607 : vector<2x128xf32>
    %1609 = arith.addf %1597, %1608 : vector<2x128xf32>
    %1610 = vector.extract_strided_slice %1 {offsets = [1, 0], sizes = [1, 128], strides = [1, 1]} : vector<3x128xf32> to vector<1x128xf32>
    %1611 = vector.broadcast %1610 : vector<1x128xf32> to vector<2x128xf32>
    %1612 = arith.mulf %1590, %1611 : vector<2x128xf32>
    %1613 = arith.addf %1601, %1612 : vector<2x128xf32>
    %1614 = vector.extract_strided_slice %2 {offsets = [1, 0], sizes = [1, 128], strides = [1, 1]} : vector<3x128xf32> to vector<1x128xf32>
    %1615 = vector.broadcast %1614 : vector<1x128xf32> to vector<2x128xf32>
    %1616 = arith.mulf %1590, %1615 : vector<2x128xf32>
    %1617 = arith.addf %1605, %1616 : vector<2x128xf32>
    %1618 = vector.extract_strided_slice %0 {offsets = [2, 0], sizes = [1, 128], strides = [1, 1]} : vector<3x128xf32> to vector<1x128xf32>
    %1619 = vector.broadcast %1618 : vector<1x128xf32> to vector<2x128xf32>
    %1620 = arith.mulf %1593, %1619 : vector<2x128xf32>
    %1621 = arith.addf %1609, %1620 : vector<2x128xf32>
    %1622 = vector.extract_strided_slice %1 {offsets = [2, 0], sizes = [1, 128], strides = [1, 1]} : vector<3x128xf32> to vector<1x128xf32>
    %1623 = vector.broadcast %1622 : vector<1x128xf32> to vector<2x128xf32>
    %1624 = arith.mulf %1593, %1623 : vector<2x128xf32>
    %1625 = arith.addf %1613, %1624 : vector<2x128xf32>
    %1626 = vector.extract_strided_slice %2 {offsets = [2, 0], sizes = [1, 128], strides = [1, 1]} : vector<3x128xf32> to vector<1x128xf32>
    %1627 = vector.broadcast %1626 : vector<1x128xf32> to vector<2x128xf32>
    %1628 = arith.mulf %1593, %1627 : vector<2x128xf32>
    %1629 = arith.addf %1617, %1628 : vector<2x128xf32>
    %1630 = vector.extract_strided_slice %3 {offsets = [0, 0], sizes = [1, 128], strides = [1, 1]} : vector<4x128xf32> to vector<1x128xf32>
    %1631 = vector.broadcast %1630 : vector<1x128xf32> to vector<2x128xf32>
    %1632 = arith.mulf %1574, %1631 : vector<2x128xf32>
    %1633 = arith.addf %1621, %1632 : vector<2x128xf32>
    %1634 = vector.extract_strided_slice %4 {offsets = [0, 0], sizes = [1, 128], strides = [1, 1]} : vector<4x128xf32> to vector<1x128xf32>
    %1635 = vector.broadcast %1634 : vector<1x128xf32> to vector<2x128xf32>
    %1636 = arith.mulf %1574, %1635 : vector<2x128xf32>
    %1637 = arith.addf %1625, %1636 : vector<2x128xf32>
    %1638 = vector.extract_strided_slice %5 {offsets = [0, 0], sizes = [1, 128], strides = [1, 1]} : vector<4x128xf32> to vector<1x128xf32>
    %1639 = vector.broadcast %1638 : vector<1x128xf32> to vector<2x128xf32>
    %1640 = arith.mulf %1574, %1639 : vector<2x128xf32>
    %1641 = arith.addf %24, %1640 : vector<2x128xf32>
    %1642 = vector.extract_strided_slice %3 {offsets = [1, 0], sizes = [1, 128], strides = [1, 1]} : vector<4x128xf32> to vector<1x128xf32>
    %1643 = vector.broadcast %1642 : vector<1x128xf32> to vector<2x128xf32>
    %1644 = arith.mulf %1577, %1643 : vector<2x128xf32>
    %1645 = arith.addf %1633, %1644 : vector<2x128xf32>
    %1646 = vector.extract_strided_slice %4 {offsets = [1, 0], sizes = [1, 128], strides = [1, 1]} : vector<4x128xf32> to vector<1x128xf32>
    %1647 = vector.broadcast %1646 : vector<1x128xf32> to vector<2x128xf32>
    %1648 = arith.mulf %1577, %1647 : vector<2x128xf32>
    %1649 = arith.addf %1637, %1648 : vector<2x128xf32>
    %1650 = vector.extract_strided_slice %5 {offsets = [1, 0], sizes = [1, 128], strides = [1, 1]} : vector<4x128xf32> to vector<1x128xf32>
    %1651 = vector.broadcast %1650 : vector<1x128xf32> to vector<2x128xf32>
    %1652 = arith.mulf %1577, %1651 : vector<2x128xf32>
    %1653 = arith.addf %1641, %1652 : vector<2x128xf32>
    %1654 = vector.extract_strided_slice %3 {offsets = [2, 0], sizes = [1, 128], strides = [1, 1]} : vector<4x128xf32> to vector<1x128xf32>
    %1655 = vector.broadcast %1654 : vector<1x128xf32> to vector<2x128xf32>
    %1656 = arith.mulf %1580, %1655 : vector<2x128xf32>
    %1657 = arith.addf %1645, %1656 : vector<2x128xf32>
    %1658 = vector.extract_strided_slice %4 {offsets = [2, 0], sizes = [1, 128], strides = [1, 1]} : vector<4x128xf32> to vector<1x128xf32>
    %1659 = vector.broadcast %1658 : vector<1x128xf32> to vector<2x128xf32>
    %1660 = arith.mulf %1580, %1659 : vector<2x128xf32>
    %1661 = arith.addf %1649, %1660 : vector<2x128xf32>
    %1662 = vector.extract_strided_slice %5 {offsets = [2, 0], sizes = [1, 128], strides = [1, 1]} : vector<4x128xf32> to vector<1x128xf32>
    %1663 = vector.broadcast %1662 : vector<1x128xf32> to vector<2x128xf32>
    %1664 = arith.mulf %1580, %1663 : vector<2x128xf32>
    %1665 = arith.addf %1653, %1664 : vector<2x128xf32>
    %1666 = vector.extract_strided_slice %3 {offsets = [3, 0], sizes = [1, 128], strides = [1, 1]} : vector<4x128xf32> to vector<1x128xf32>
    %1667 = vector.broadcast %1666 : vector<1x128xf32> to vector<2x128xf32>
    %1668 = arith.mulf %1583, %1667 : vector<2x128xf32>
    %1669 = arith.addf %1657, %1668 : vector<2x128xf32>
    %1670 = vector.extract_strided_slice %4 {offsets = [3, 0], sizes = [1, 128], strides = [1, 1]} : vector<4x128xf32> to vector<1x128xf32>
    %1671 = vector.broadcast %1670 : vector<1x128xf32> to vector<2x128xf32>
    %1672 = arith.mulf %1583, %1671 : vector<2x128xf32>
    %1673 = arith.addf %1661, %1672 : vector<2x128xf32>
    %1674 = vector.extract_strided_slice %5 {offsets = [3, 0], sizes = [1, 128], strides = [1, 1]} : vector<4x128xf32> to vector<1x128xf32>
    %1675 = vector.broadcast %1674 : vector<1x128xf32> to vector<2x128xf32>
    %1676 = arith.mulf %1583, %1675 : vector<2x128xf32>
    %1677 = arith.addf %1665, %1676 : vector<2x128xf32>
    %cst_114 = arith.constant 5.000000e-01 : f32
    %1678 = vector.broadcast %cst_114 : f32 to vector<2x128xf32>
    %1679 = arith.mulf %1678, %1669 : vector<2x128xf32>
    %1680 = math.tanh %1679 : vector<2x128xf32>
    %cst_115 = arith.constant 5.000000e-01 : f32
    %1681 = vector.broadcast %cst_115 : f32 to vector<2x128xf32>
    %1682 = arith.mulf %1681, %1680 : vector<2x128xf32>
    %cst_116 = arith.constant 5.000000e-01 : f32
    %1683 = vector.broadcast %cst_116 : f32 to vector<2x128xf32>
    %1684 = arith.addf %1682, %1683 : vector<2x128xf32>
    %cst_117 = arith.constant 5.000000e-01 : f32
    %1685 = vector.broadcast %cst_117 : f32 to vector<2x128xf32>
    %1686 = arith.mulf %1685, %1673 : vector<2x128xf32>
    %1687 = math.tanh %1686 : vector<2x128xf32>
    %cst_118 = arith.constant 5.000000e-01 : f32
    %1688 = vector.broadcast %cst_118 : f32 to vector<2x128xf32>
    %1689 = arith.mulf %1688, %1687 : vector<2x128xf32>
    %cst_119 = arith.constant 5.000000e-01 : f32
    %1690 = vector.broadcast %cst_119 : f32 to vector<2x128xf32>
    %1691 = arith.addf %1689, %1690 : vector<2x128xf32>
    %1692 = arith.mulf %1684, %1677 : vector<2x128xf32>
    %1693 = arith.addf %1629, %1692 : vector<2x128xf32>
    %1694 = math.tanh %1693 : vector<2x128xf32>
    %1695 = arith.subf %1443, %1694 : vector<2x128xf32>
    %1696 = arith.mulf %1691, %1695 : vector<2x128xf32>
    %1697 = arith.addf %1696, %1694 : vector<2x128xf32>
    %1698 = vector.extract_strided_slice %6 {offsets = [0, 0], sizes = [1, 128], strides = [1, 1]} : vector<4x128xf32> to vector<1x128xf32>
    %1699 = vector.broadcast %1698 : vector<1x128xf32> to vector<2x128xf32>
    %1700 = arith.mulf %1574, %1699 : vector<2x128xf32>
    %1701 = arith.addf %27, %1700 : vector<2x128xf32>
    %1702 = vector.extract_strided_slice %7 {offsets = [0, 0], sizes = [1, 128], strides = [1, 1]} : vector<4x128xf32> to vector<1x128xf32>
    %1703 = vector.broadcast %1702 : vector<1x128xf32> to vector<2x128xf32>
    %1704 = arith.mulf %1574, %1703 : vector<2x128xf32>
    %1705 = arith.addf %30, %1704 : vector<2x128xf32>
    %1706 = vector.extract_strided_slice %8 {offsets = [0, 0], sizes = [1, 128], strides = [1, 1]} : vector<4x128xf32> to vector<1x128xf32>
    %1707 = vector.broadcast %1706 : vector<1x128xf32> to vector<2x128xf32>
    %1708 = arith.mulf %1574, %1707 : vector<2x128xf32>
    %1709 = arith.addf %33, %1708 : vector<2x128xf32>
    %1710 = vector.extract_strided_slice %6 {offsets = [1, 0], sizes = [1, 128], strides = [1, 1]} : vector<4x128xf32> to vector<1x128xf32>
    %1711 = vector.broadcast %1710 : vector<1x128xf32> to vector<2x128xf32>
    %1712 = arith.mulf %1577, %1711 : vector<2x128xf32>
    %1713 = arith.addf %1701, %1712 : vector<2x128xf32>
    %1714 = vector.extract_strided_slice %7 {offsets = [1, 0], sizes = [1, 128], strides = [1, 1]} : vector<4x128xf32> to vector<1x128xf32>
    %1715 = vector.broadcast %1714 : vector<1x128xf32> to vector<2x128xf32>
    %1716 = arith.mulf %1577, %1715 : vector<2x128xf32>
    %1717 = arith.addf %1705, %1716 : vector<2x128xf32>
    %1718 = vector.extract_strided_slice %8 {offsets = [1, 0], sizes = [1, 128], strides = [1, 1]} : vector<4x128xf32> to vector<1x128xf32>
    %1719 = vector.broadcast %1718 : vector<1x128xf32> to vector<2x128xf32>
    %1720 = arith.mulf %1577, %1719 : vector<2x128xf32>
    %1721 = arith.addf %1709, %1720 : vector<2x128xf32>
    %1722 = vector.extract_strided_slice %6 {offsets = [2, 0], sizes = [1, 128], strides = [1, 1]} : vector<4x128xf32> to vector<1x128xf32>
    %1723 = vector.broadcast %1722 : vector<1x128xf32> to vector<2x128xf32>
    %1724 = arith.mulf %1580, %1723 : vector<2x128xf32>
    %1725 = arith.addf %1713, %1724 : vector<2x128xf32>
    %1726 = vector.extract_strided_slice %7 {offsets = [2, 0], sizes = [1, 128], strides = [1, 1]} : vector<4x128xf32> to vector<1x128xf32>
    %1727 = vector.broadcast %1726 : vector<1x128xf32> to vector<2x128xf32>
    %1728 = arith.mulf %1580, %1727 : vector<2x128xf32>
    %1729 = arith.addf %1717, %1728 : vector<2x128xf32>
    %1730 = vector.extract_strided_slice %8 {offsets = [2, 0], sizes = [1, 128], strides = [1, 1]} : vector<4x128xf32> to vector<1x128xf32>
    %1731 = vector.broadcast %1730 : vector<1x128xf32> to vector<2x128xf32>
    %1732 = arith.mulf %1580, %1731 : vector<2x128xf32>
    %1733 = arith.addf %1721, %1732 : vector<2x128xf32>
    %1734 = vector.extract_strided_slice %6 {offsets = [3, 0], sizes = [1, 128], strides = [1, 1]} : vector<4x128xf32> to vector<1x128xf32>
    %1735 = vector.broadcast %1734 : vector<1x128xf32> to vector<2x128xf32>
    %1736 = arith.mulf %1583, %1735 : vector<2x128xf32>
    %1737 = arith.addf %1725, %1736 : vector<2x128xf32>
    %1738 = vector.extract_strided_slice %7 {offsets = [3, 0], sizes = [1, 128], strides = [1, 1]} : vector<4x128xf32> to vector<1x128xf32>
    %1739 = vector.broadcast %1738 : vector<1x128xf32> to vector<2x128xf32>
    %1740 = arith.mulf %1583, %1739 : vector<2x128xf32>
    %1741 = arith.addf %1729, %1740 : vector<2x128xf32>
    %1742 = vector.extract_strided_slice %8 {offsets = [3, 0], sizes = [1, 128], strides = [1, 1]} : vector<4x128xf32> to vector<1x128xf32>
    %1743 = vector.broadcast %1742 : vector<1x128xf32> to vector<2x128xf32>
    %1744 = arith.mulf %1583, %1743 : vector<2x128xf32>
    %1745 = arith.addf %1733, %1744 : vector<2x128xf32>
    %1746 = vector.extract_strided_slice %1571 {offsets = [0, 0], sizes = [2, 1], strides = [1, 1]} : vector<2x128xf32> to vector<2x1xf32>
    %1747 = vector.shape_cast %1746 : vector<2x1xf32> to vector<2x1xf32>
    %1748 = vector.broadcast %1747 : vector<2x1xf32> to vector<2x128xf32>
    %1749 = vector.extract_strided_slice %1571 {offsets = [0, 1], sizes = [2, 1], strides = [1, 1]} : vector<2x128xf32> to vector<2x1xf32>
    %1750 = vector.shape_cast %1749 : vector<2x1xf32> to vector<2x1xf32>
    %1751 = vector.broadcast %1750 : vector<2x1xf32> to vector<2x128xf32>
    %1752 = vector.extract_strided_slice %1571 {offsets = [0, 2], sizes = [2, 1], strides = [1, 1]} : vector<2x128xf32> to vector<2x1xf32>
    %1753 = vector.shape_cast %1752 : vector<2x1xf32> to vector<2x1xf32>
    %1754 = vector.broadcast %1753 : vector<2x1xf32> to vector<2x128xf32>
    %1755 = vector.extract_strided_slice %1571 {offsets = [0, 3], sizes = [2, 1], strides = [1, 1]} : vector<2x128xf32> to vector<2x1xf32>
    %1756 = vector.shape_cast %1755 : vector<2x1xf32> to vector<2x1xf32>
    %1757 = vector.broadcast %1756 : vector<2x1xf32> to vector<2x128xf32>
    %1758 = vector.extract_strided_slice %9 {offsets = [0, 0], sizes = [1, 128], strides = [1, 1]} : vector<4x128xf32> to vector<1x128xf32>
    %1759 = vector.broadcast %1758 : vector<1x128xf32> to vector<2x128xf32>
    %1760 = arith.mulf %1748, %1759 : vector<2x128xf32>
    %1761 = arith.addf %1737, %1760 : vector<2x128xf32>
    %1762 = vector.extract_strided_slice %10 {offsets = [0, 0], sizes = [1, 128], strides = [1, 1]} : vector<4x128xf32> to vector<1x128xf32>
    %1763 = vector.broadcast %1762 : vector<1x128xf32> to vector<2x128xf32>
    %1764 = arith.mulf %1748, %1763 : vector<2x128xf32>
    %1765 = arith.addf %1741, %1764 : vector<2x128xf32>
    %1766 = vector.extract_strided_slice %11 {offsets = [0, 0], sizes = [1, 128], strides = [1, 1]} : vector<4x128xf32> to vector<1x128xf32>
    %1767 = vector.broadcast %1766 : vector<1x128xf32> to vector<2x128xf32>
    %1768 = arith.mulf %1748, %1767 : vector<2x128xf32>
    %1769 = arith.addf %36, %1768 : vector<2x128xf32>
    %1770 = vector.extract_strided_slice %9 {offsets = [1, 0], sizes = [1, 128], strides = [1, 1]} : vector<4x128xf32> to vector<1x128xf32>
    %1771 = vector.broadcast %1770 : vector<1x128xf32> to vector<2x128xf32>
    %1772 = arith.mulf %1751, %1771 : vector<2x128xf32>
    %1773 = arith.addf %1761, %1772 : vector<2x128xf32>
    %1774 = vector.extract_strided_slice %10 {offsets = [1, 0], sizes = [1, 128], strides = [1, 1]} : vector<4x128xf32> to vector<1x128xf32>
    %1775 = vector.broadcast %1774 : vector<1x128xf32> to vector<2x128xf32>
    %1776 = arith.mulf %1751, %1775 : vector<2x128xf32>
    %1777 = arith.addf %1765, %1776 : vector<2x128xf32>
    %1778 = vector.extract_strided_slice %11 {offsets = [1, 0], sizes = [1, 128], strides = [1, 1]} : vector<4x128xf32> to vector<1x128xf32>
    %1779 = vector.broadcast %1778 : vector<1x128xf32> to vector<2x128xf32>
    %1780 = arith.mulf %1751, %1779 : vector<2x128xf32>
    %1781 = arith.addf %1769, %1780 : vector<2x128xf32>
    %1782 = vector.extract_strided_slice %9 {offsets = [2, 0], sizes = [1, 128], strides = [1, 1]} : vector<4x128xf32> to vector<1x128xf32>
    %1783 = vector.broadcast %1782 : vector<1x128xf32> to vector<2x128xf32>
    %1784 = arith.mulf %1754, %1783 : vector<2x128xf32>
    %1785 = arith.addf %1773, %1784 : vector<2x128xf32>
    %1786 = vector.extract_strided_slice %10 {offsets = [2, 0], sizes = [1, 128], strides = [1, 1]} : vector<4x128xf32> to vector<1x128xf32>
    %1787 = vector.broadcast %1786 : vector<1x128xf32> to vector<2x128xf32>
    %1788 = arith.mulf %1754, %1787 : vector<2x128xf32>
    %1789 = arith.addf %1777, %1788 : vector<2x128xf32>
    %1790 = vector.extract_strided_slice %11 {offsets = [2, 0], sizes = [1, 128], strides = [1, 1]} : vector<4x128xf32> to vector<1x128xf32>
    %1791 = vector.broadcast %1790 : vector<1x128xf32> to vector<2x128xf32>
    %1792 = arith.mulf %1754, %1791 : vector<2x128xf32>
    %1793 = arith.addf %1781, %1792 : vector<2x128xf32>
    %1794 = vector.extract_strided_slice %9 {offsets = [3, 0], sizes = [1, 128], strides = [1, 1]} : vector<4x128xf32> to vector<1x128xf32>
    %1795 = vector.broadcast %1794 : vector<1x128xf32> to vector<2x128xf32>
    %1796 = arith.mulf %1757, %1795 : vector<2x128xf32>
    %1797 = arith.addf %1785, %1796 : vector<2x128xf32>
    %1798 = vector.extract_strided_slice %10 {offsets = [3, 0], sizes = [1, 128], strides = [1, 1]} : vector<4x128xf32> to vector<1x128xf32>
    %1799 = vector.broadcast %1798 : vector<1x128xf32> to vector<2x128xf32>
    %1800 = arith.mulf %1757, %1799 : vector<2x128xf32>
    %1801 = arith.addf %1789, %1800 : vector<2x128xf32>
    %1802 = vector.extract_strided_slice %11 {offsets = [3, 0], sizes = [1, 128], strides = [1, 1]} : vector<4x128xf32> to vector<1x128xf32>
    %1803 = vector.broadcast %1802 : vector<1x128xf32> to vector<2x128xf32>
    %1804 = arith.mulf %1757, %1803 : vector<2x128xf32>
    %1805 = arith.addf %1793, %1804 : vector<2x128xf32>
    %cst_120 = arith.constant 5.000000e-01 : f32
    %1806 = vector.broadcast %cst_120 : f32 to vector<2x128xf32>
    %1807 = arith.mulf %1806, %1797 : vector<2x128xf32>
    %1808 = math.tanh %1807 : vector<2x128xf32>
    %cst_121 = arith.constant 5.000000e-01 : f32
    %1809 = vector.broadcast %cst_121 : f32 to vector<2x128xf32>
    %1810 = arith.mulf %1809, %1808 : vector<2x128xf32>
    %cst_122 = arith.constant 5.000000e-01 : f32
    %1811 = vector.broadcast %cst_122 : f32 to vector<2x128xf32>
    %1812 = arith.addf %1810, %1811 : vector<2x128xf32>
    %cst_123 = arith.constant 5.000000e-01 : f32
    %1813 = vector.broadcast %cst_123 : f32 to vector<2x128xf32>
    %1814 = arith.mulf %1813, %1801 : vector<2x128xf32>
    %1815 = math.tanh %1814 : vector<2x128xf32>
    %cst_124 = arith.constant 5.000000e-01 : f32
    %1816 = vector.broadcast %cst_124 : f32 to vector<2x128xf32>
    %1817 = arith.mulf %1816, %1815 : vector<2x128xf32>
    %cst_125 = arith.constant 5.000000e-01 : f32
    %1818 = vector.broadcast %cst_125 : f32 to vector<2x128xf32>
    %1819 = arith.addf %1817, %1818 : vector<2x128xf32>
    %1820 = arith.mulf %1812, %1805 : vector<2x128xf32>
    %1821 = arith.addf %1745, %1820 : vector<2x128xf32>
    %1822 = math.tanh %1821 : vector<2x128xf32>
    %1823 = arith.subf %1571, %1822 : vector<2x128xf32>
    %1824 = arith.mulf %1819, %1823 : vector<2x128xf32>
    %1825 = arith.addf %1824, %1822 : vector<2x128xf32>
    %1826 = vector.extract_strided_slice %1697 {offsets = [0, 0], sizes = [2, 1], strides = [1, 1]} : vector<2x128xf32> to vector<2x1xf32>
    %1827 = vector.shape_cast %1826 : vector<2x1xf32> to vector<2x1xf32>
    %1828 = vector.broadcast %1827 : vector<2x1xf32> to vector<2x128xf32>
    %1829 = vector.extract_strided_slice %1697 {offsets = [0, 1], sizes = [2, 1], strides = [1, 1]} : vector<2x128xf32> to vector<2x1xf32>
    %1830 = vector.shape_cast %1829 : vector<2x1xf32> to vector<2x1xf32>
    %1831 = vector.broadcast %1830 : vector<2x1xf32> to vector<2x128xf32>
    %1832 = vector.extract_strided_slice %1697 {offsets = [0, 2], sizes = [2, 1], strides = [1, 1]} : vector<2x128xf32> to vector<2x1xf32>
    %1833 = vector.shape_cast %1832 : vector<2x1xf32> to vector<2x1xf32>
    %1834 = vector.broadcast %1833 : vector<2x1xf32> to vector<2x128xf32>
    %1835 = vector.extract_strided_slice %1697 {offsets = [0, 3], sizes = [2, 1], strides = [1, 1]} : vector<2x128xf32> to vector<2x1xf32>
    %1836 = vector.shape_cast %1835 : vector<2x1xf32> to vector<2x1xf32>
    %1837 = vector.broadcast %1836 : vector<2x1xf32> to vector<2x128xf32>
    %1838 = vector.extract_strided_slice %6 {offsets = [0, 0], sizes = [1, 128], strides = [1, 1]} : vector<4x128xf32> to vector<1x128xf32>
    %1839 = vector.broadcast %1838 : vector<1x128xf32> to vector<2x128xf32>
    %1840 = arith.mulf %1828, %1839 : vector<2x128xf32>
    %1841 = arith.addf %27, %1840 : vector<2x128xf32>
    %1842 = vector.extract_strided_slice %7 {offsets = [0, 0], sizes = [1, 128], strides = [1, 1]} : vector<4x128xf32> to vector<1x128xf32>
    %1843 = vector.broadcast %1842 : vector<1x128xf32> to vector<2x128xf32>
    %1844 = arith.mulf %1828, %1843 : vector<2x128xf32>
    %1845 = arith.addf %30, %1844 : vector<2x128xf32>
    %1846 = vector.extract_strided_slice %8 {offsets = [0, 0], sizes = [1, 128], strides = [1, 1]} : vector<4x128xf32> to vector<1x128xf32>
    %1847 = vector.broadcast %1846 : vector<1x128xf32> to vector<2x128xf32>
    %1848 = arith.mulf %1828, %1847 : vector<2x128xf32>
    %1849 = arith.addf %33, %1848 : vector<2x128xf32>
    %1850 = vector.extract_strided_slice %6 {offsets = [1, 0], sizes = [1, 128], strides = [1, 1]} : vector<4x128xf32> to vector<1x128xf32>
    %1851 = vector.broadcast %1850 : vector<1x128xf32> to vector<2x128xf32>
    %1852 = arith.mulf %1831, %1851 : vector<2x128xf32>
    %1853 = arith.addf %1841, %1852 : vector<2x128xf32>
    %1854 = vector.extract_strided_slice %7 {offsets = [1, 0], sizes = [1, 128], strides = [1, 1]} : vector<4x128xf32> to vector<1x128xf32>
    %1855 = vector.broadcast %1854 : vector<1x128xf32> to vector<2x128xf32>
    %1856 = arith.mulf %1831, %1855 : vector<2x128xf32>
    %1857 = arith.addf %1845, %1856 : vector<2x128xf32>
    %1858 = vector.extract_strided_slice %8 {offsets = [1, 0], sizes = [1, 128], strides = [1, 1]} : vector<4x128xf32> to vector<1x128xf32>
    %1859 = vector.broadcast %1858 : vector<1x128xf32> to vector<2x128xf32>
    %1860 = arith.mulf %1831, %1859 : vector<2x128xf32>
    %1861 = arith.addf %1849, %1860 : vector<2x128xf32>
    %1862 = vector.extract_strided_slice %6 {offsets = [2, 0], sizes = [1, 128], strides = [1, 1]} : vector<4x128xf32> to vector<1x128xf32>
    %1863 = vector.broadcast %1862 : vector<1x128xf32> to vector<2x128xf32>
    %1864 = arith.mulf %1834, %1863 : vector<2x128xf32>
    %1865 = arith.addf %1853, %1864 : vector<2x128xf32>
    %1866 = vector.extract_strided_slice %7 {offsets = [2, 0], sizes = [1, 128], strides = [1, 1]} : vector<4x128xf32> to vector<1x128xf32>
    %1867 = vector.broadcast %1866 : vector<1x128xf32> to vector<2x128xf32>
    %1868 = arith.mulf %1834, %1867 : vector<2x128xf32>
    %1869 = arith.addf %1857, %1868 : vector<2x128xf32>
    %1870 = vector.extract_strided_slice %8 {offsets = [2, 0], sizes = [1, 128], strides = [1, 1]} : vector<4x128xf32> to vector<1x128xf32>
    %1871 = vector.broadcast %1870 : vector<1x128xf32> to vector<2x128xf32>
    %1872 = arith.mulf %1834, %1871 : vector<2x128xf32>
    %1873 = arith.addf %1861, %1872 : vector<2x128xf32>
    %1874 = vector.extract_strided_slice %6 {offsets = [3, 0], sizes = [1, 128], strides = [1, 1]} : vector<4x128xf32> to vector<1x128xf32>
    %1875 = vector.broadcast %1874 : vector<1x128xf32> to vector<2x128xf32>
    %1876 = arith.mulf %1837, %1875 : vector<2x128xf32>
    %1877 = arith.addf %1865, %1876 : vector<2x128xf32>
    %1878 = vector.extract_strided_slice %7 {offsets = [3, 0], sizes = [1, 128], strides = [1, 1]} : vector<4x128xf32> to vector<1x128xf32>
    %1879 = vector.broadcast %1878 : vector<1x128xf32> to vector<2x128xf32>
    %1880 = arith.mulf %1837, %1879 : vector<2x128xf32>
    %1881 = arith.addf %1869, %1880 : vector<2x128xf32>
    %1882 = vector.extract_strided_slice %8 {offsets = [3, 0], sizes = [1, 128], strides = [1, 1]} : vector<4x128xf32> to vector<1x128xf32>
    %1883 = vector.broadcast %1882 : vector<1x128xf32> to vector<2x128xf32>
    %1884 = arith.mulf %1837, %1883 : vector<2x128xf32>
    %1885 = arith.addf %1873, %1884 : vector<2x128xf32>
    %1886 = vector.extract_strided_slice %1825 {offsets = [0, 0], sizes = [2, 1], strides = [1, 1]} : vector<2x128xf32> to vector<2x1xf32>
    %1887 = vector.shape_cast %1886 : vector<2x1xf32> to vector<2x1xf32>
    %1888 = vector.broadcast %1887 : vector<2x1xf32> to vector<2x128xf32>
    %1889 = vector.extract_strided_slice %1825 {offsets = [0, 1], sizes = [2, 1], strides = [1, 1]} : vector<2x128xf32> to vector<2x1xf32>
    %1890 = vector.shape_cast %1889 : vector<2x1xf32> to vector<2x1xf32>
    %1891 = vector.broadcast %1890 : vector<2x1xf32> to vector<2x128xf32>
    %1892 = vector.extract_strided_slice %1825 {offsets = [0, 2], sizes = [2, 1], strides = [1, 1]} : vector<2x128xf32> to vector<2x1xf32>
    %1893 = vector.shape_cast %1892 : vector<2x1xf32> to vector<2x1xf32>
    %1894 = vector.broadcast %1893 : vector<2x1xf32> to vector<2x128xf32>
    %1895 = vector.extract_strided_slice %1825 {offsets = [0, 3], sizes = [2, 1], strides = [1, 1]} : vector<2x128xf32> to vector<2x1xf32>
    %1896 = vector.shape_cast %1895 : vector<2x1xf32> to vector<2x1xf32>
    %1897 = vector.broadcast %1896 : vector<2x1xf32> to vector<2x128xf32>
    %1898 = vector.extract_strided_slice %9 {offsets = [0, 0], sizes = [1, 128], strides = [1, 1]} : vector<4x128xf32> to vector<1x128xf32>
    %1899 = vector.broadcast %1898 : vector<1x128xf32> to vector<2x128xf32>
    %1900 = arith.mulf %1888, %1899 : vector<2x128xf32>
    %1901 = arith.addf %1877, %1900 : vector<2x128xf32>
    %1902 = vector.extract_strided_slice %10 {offsets = [0, 0], sizes = [1, 128], strides = [1, 1]} : vector<4x128xf32> to vector<1x128xf32>
    %1903 = vector.broadcast %1902 : vector<1x128xf32> to vector<2x128xf32>
    %1904 = arith.mulf %1888, %1903 : vector<2x128xf32>
    %1905 = arith.addf %1881, %1904 : vector<2x128xf32>
    %1906 = vector.extract_strided_slice %11 {offsets = [0, 0], sizes = [1, 128], strides = [1, 1]} : vector<4x128xf32> to vector<1x128xf32>
    %1907 = vector.broadcast %1906 : vector<1x128xf32> to vector<2x128xf32>
    %1908 = arith.mulf %1888, %1907 : vector<2x128xf32>
    %1909 = arith.addf %36, %1908 : vector<2x128xf32>
    %1910 = vector.extract_strided_slice %9 {offsets = [1, 0], sizes = [1, 128], strides = [1, 1]} : vector<4x128xf32> to vector<1x128xf32>
    %1911 = vector.broadcast %1910 : vector<1x128xf32> to vector<2x128xf32>
    %1912 = arith.mulf %1891, %1911 : vector<2x128xf32>
    %1913 = arith.addf %1901, %1912 : vector<2x128xf32>
    %1914 = vector.extract_strided_slice %10 {offsets = [1, 0], sizes = [1, 128], strides = [1, 1]} : vector<4x128xf32> to vector<1x128xf32>
    %1915 = vector.broadcast %1914 : vector<1x128xf32> to vector<2x128xf32>
    %1916 = arith.mulf %1891, %1915 : vector<2x128xf32>
    %1917 = arith.addf %1905, %1916 : vector<2x128xf32>
    %1918 = vector.extract_strided_slice %11 {offsets = [1, 0], sizes = [1, 128], strides = [1, 1]} : vector<4x128xf32> to vector<1x128xf32>
    %1919 = vector.broadcast %1918 : vector<1x128xf32> to vector<2x128xf32>
    %1920 = arith.mulf %1891, %1919 : vector<2x128xf32>
    %1921 = arith.addf %1909, %1920 : vector<2x128xf32>
    %1922 = vector.extract_strided_slice %9 {offsets = [2, 0], sizes = [1, 128], strides = [1, 1]} : vector<4x128xf32> to vector<1x128xf32>
    %1923 = vector.broadcast %1922 : vector<1x128xf32> to vector<2x128xf32>
    %1924 = arith.mulf %1894, %1923 : vector<2x128xf32>
    %1925 = arith.addf %1913, %1924 : vector<2x128xf32>
    %1926 = vector.extract_strided_slice %10 {offsets = [2, 0], sizes = [1, 128], strides = [1, 1]} : vector<4x128xf32> to vector<1x128xf32>
    %1927 = vector.broadcast %1926 : vector<1x128xf32> to vector<2x128xf32>
    %1928 = arith.mulf %1894, %1927 : vector<2x128xf32>
    %1929 = arith.addf %1917, %1928 : vector<2x128xf32>
    %1930 = vector.extract_strided_slice %11 {offsets = [2, 0], sizes = [1, 128], strides = [1, 1]} : vector<4x128xf32> to vector<1x128xf32>
    %1931 = vector.broadcast %1930 : vector<1x128xf32> to vector<2x128xf32>
    %1932 = arith.mulf %1894, %1931 : vector<2x128xf32>
    %1933 = arith.addf %1921, %1932 : vector<2x128xf32>
    %1934 = vector.extract_strided_slice %9 {offsets = [3, 0], sizes = [1, 128], strides = [1, 1]} : vector<4x128xf32> to vector<1x128xf32>
    %1935 = vector.broadcast %1934 : vector<1x128xf32> to vector<2x128xf32>
    %1936 = arith.mulf %1897, %1935 : vector<2x128xf32>
    %1937 = arith.addf %1925, %1936 : vector<2x128xf32>
    %1938 = vector.extract_strided_slice %10 {offsets = [3, 0], sizes = [1, 128], strides = [1, 1]} : vector<4x128xf32> to vector<1x128xf32>
    %1939 = vector.broadcast %1938 : vector<1x128xf32> to vector<2x128xf32>
    %1940 = arith.mulf %1897, %1939 : vector<2x128xf32>
    %1941 = arith.addf %1929, %1940 : vector<2x128xf32>
    %1942 = vector.extract_strided_slice %11 {offsets = [3, 0], sizes = [1, 128], strides = [1, 1]} : vector<4x128xf32> to vector<1x128xf32>
    %1943 = vector.broadcast %1942 : vector<1x128xf32> to vector<2x128xf32>
    %1944 = arith.mulf %1897, %1943 : vector<2x128xf32>
    %1945 = arith.addf %1933, %1944 : vector<2x128xf32>
    %cst_126 = arith.constant 5.000000e-01 : f32
    %1946 = vector.broadcast %cst_126 : f32 to vector<2x128xf32>
    %1947 = arith.mulf %1946, %1937 : vector<2x128xf32>
    %1948 = math.tanh %1947 : vector<2x128xf32>
    %cst_127 = arith.constant 5.000000e-01 : f32
    %1949 = vector.broadcast %cst_127 : f32 to vector<2x128xf32>
    %1950 = arith.mulf %1949, %1948 : vector<2x128xf32>
    %cst_128 = arith.constant 5.000000e-01 : f32
    %1951 = vector.broadcast %cst_128 : f32 to vector<2x128xf32>
    %1952 = arith.addf %1950, %1951 : vector<2x128xf32>
    %cst_129 = arith.constant 5.000000e-01 : f32
    %1953 = vector.broadcast %cst_129 : f32 to vector<2x128xf32>
    %1954 = arith.mulf %1953, %1941 : vector<2x128xf32>
    %1955 = math.tanh %1954 : vector<2x128xf32>
    %cst_130 = arith.constant 5.000000e-01 : f32
    %1956 = vector.broadcast %cst_130 : f32 to vector<2x128xf32>
    %1957 = arith.mulf %1956, %1955 : vector<2x128xf32>
    %cst_131 = arith.constant 5.000000e-01 : f32
    %1958 = vector.broadcast %cst_131 : f32 to vector<2x128xf32>
    %1959 = arith.addf %1957, %1958 : vector<2x128xf32>
    %1960 = arith.mulf %1952, %1945 : vector<2x128xf32>
    %1961 = arith.addf %1885, %1960 : vector<2x128xf32>
    %1962 = math.tanh %1961 : vector<2x128xf32>
    %1963 = arith.subf %1825, %1962 : vector<2x128xf32>
    %1964 = arith.mulf %1959, %1963 : vector<2x128xf32>
    %1965 = arith.addf %1964, %1962 : vector<2x128xf32>
    %1966 = vector.extract_strided_slice %1965 {offsets = [0, 0], sizes = [2, 1], strides = [1, 1]} : vector<2x128xf32> to vector<2x1xf32>
    %1967 = vector.shape_cast %1966 : vector<2x1xf32> to vector<2x1xf32>
    %1968 = vector.broadcast %1967 : vector<2x1xf32> to vector<2x128xf32>
    %1969 = vector.extract_strided_slice %1965 {offsets = [0, 1], sizes = [2, 1], strides = [1, 1]} : vector<2x128xf32> to vector<2x1xf32>
    %1970 = vector.shape_cast %1969 : vector<2x1xf32> to vector<2x1xf32>
    %1971 = vector.broadcast %1970 : vector<2x1xf32> to vector<2x128xf32>
    %1972 = vector.extract_strided_slice %1965 {offsets = [0, 2], sizes = [2, 1], strides = [1, 1]} : vector<2x128xf32> to vector<2x1xf32>
    %1973 = vector.shape_cast %1972 : vector<2x1xf32> to vector<2x1xf32>
    %1974 = vector.broadcast %1973 : vector<2x1xf32> to vector<2x128xf32>
    %1975 = vector.extract_strided_slice %1965 {offsets = [0, 3], sizes = [2, 1], strides = [1, 1]} : vector<2x128xf32> to vector<2x1xf32>
    %1976 = vector.shape_cast %1975 : vector<2x1xf32> to vector<2x1xf32>
    %1977 = vector.broadcast %1976 : vector<2x1xf32> to vector<2x128xf32>
    %1978 = vector.extract_strided_slice %12 {offsets = [0, 0], sizes = [1, 128], strides = [1, 1]} : vector<4x128xf32> to vector<1x128xf32>
    %1979 = vector.broadcast %1978 : vector<1x128xf32> to vector<2x128xf32>
    %1980 = arith.mulf %1968, %1979 : vector<2x128xf32>
    %1981 = arith.addf %39, %1980 : vector<2x128xf32>
    %1982 = vector.extract_strided_slice %12 {offsets = [1, 0], sizes = [1, 128], strides = [1, 1]} : vector<4x128xf32> to vector<1x128xf32>
    %1983 = vector.broadcast %1982 : vector<1x128xf32> to vector<2x128xf32>
    %1984 = arith.mulf %1971, %1983 : vector<2x128xf32>
    %1985 = arith.addf %1981, %1984 : vector<2x128xf32>
    %1986 = vector.extract_strided_slice %12 {offsets = [2, 0], sizes = [1, 128], strides = [1, 1]} : vector<4x128xf32> to vector<1x128xf32>
    %1987 = vector.broadcast %1986 : vector<1x128xf32> to vector<2x128xf32>
    %1988 = arith.mulf %1974, %1987 : vector<2x128xf32>
    %1989 = arith.addf %1985, %1988 : vector<2x128xf32>
    %1990 = vector.extract_strided_slice %12 {offsets = [3, 0], sizes = [1, 128], strides = [1, 1]} : vector<4x128xf32> to vector<1x128xf32>
    %1991 = vector.broadcast %1990 : vector<1x128xf32> to vector<2x128xf32>
    %1992 = arith.mulf %1977, %1991 : vector<2x128xf32>
    %1993 = arith.addf %1989, %1992 : vector<2x128xf32>
    %1994 = vector.extract_strided_slice %1993 {offsets = [0, 0], sizes = [2, 18], strides = [1, 1]} : vector<2x128xf32> to vector<2x18xf32>
    %c0_132 = arith.constant 0 : index
    %c0_133 = arith.constant 0 : index
    %1995 = vector.load %arg2[%c0_132, %c0_133] : memref<2x18xf32, #tpu.memory_space<vmem>>, vector<2x18xf32>
    tpu.vector_store %arg2[%c0_132, %c0_133], %1994 {strides = array<i32>} : memref<2x18xf32, #tpu.memory_space<vmem>>, vector<2x18xf32>,
    return
  }
}

</mosaic_0001>

<llo_original>
// kernel: my_gru_forward.1
$region0: #{my_gru_forward.1}
  #allocation0 [shape = 'u32[]', space=smem, size = 0x4, offset = 0x4, fixed_abs, tag = 'smem constant byte address 0x4 - core index']
  #allocation1 [shape = 'u32[144,128]{1,0:T(1,128)}', space=vmem, size = 0x12000, scoped, tag = 'internal scratch']
  %s0 = inlined_call_operand.vmem [shape: f32[2,24], index: 0, kind: input, shape index: {}]
  %s1 = inlined_call_operand.vmem [shape: f32[64,128], index: 1, kind: input, shape index: {}]
  %s2 = inlined_call_operand.hbm [shape: f32[2,18], index: 2, kind: output, shape index: {}]
  %s3 = sld [smem:[#allocation0]]
  $region18: #{my_gru_forward.1} parent=0
    _
  %s5 = ssub.s32 1, %s3
  %s6 = scalar_select 0, %s5, %s3
  $region1: #{my_gru_forward.1} parent=0
    #allocation2 [shape = 'u8[1024]{0}', space=vmem, size = 0x400, scoped, tag = 'output window, operand 0, single buffered']
    #allocation3 [shape = 's32[1]{0}', space=sflag, size = 0x4, scoped, tag = 'scoped memory for my_gru_forward.1']
    %7 = vsyncpa [#allocation3], 0
    // Predicated region
    $region2: #{my_gru_forward.1} parent=1 // pred_check
      _
    $region3: #{my_gru_forward.1} parent=1 // pred_check_branch
      %9 = sbr.rel (0) target = $region5
    $region4: #{my_gru_forward.1} parent=1 // pred_region
      _
    $region5: #{my_gru_forward.1} parent=1 // pred_fallthru
      _
    // Predicated region
    $region6: #{my_gru_forward.1} parent=1 // pred_check
      _
    $region7: #{my_gru_forward.1} parent=1 // pred_check_branch
      %11 = sbr.rel (0) target = $region9
    $region8: #{my_gru_forward.1} parent=1 // pred_region
      _
    $region9: #{my_gru_forward.1} parent=1 // pred_fallthru
      _
    %v12 = vld [vmem:[%s1] sm:$0x7]
    %v13 = vld [vmem:[%s1 + $0x3] sm:$0x7]
    %v14 = vld [vmem:[%s1 + $0x6] sm:$0x7]
    %v15 = vld [vmem:[%s1 + $0x9] sm:$0xf]
    %v16 = vld [vmem:[%s1 + $0xd] sm:$0xf]
    %v17 = vld [vmem:[%s1 + $0x11] sm:$0xf]
    %v18 = vld [vmem:[%s1 + $0x15] sm:$0xf]
    %v19 = vld [vmem:[%s1 + $0x19] sm:$0xf]
    %v20 = vld [vmem:[%s1 + $0x1d] sm:$0xf]
    %v21 = vld [vmem:[%s1 + $0x21] sm:$0xf]
    %v22 = vld [vmem:[%s1 + $0x25] sm:$0xf]
    %v23 = vld [vmem:[%s1 + $0x29] sm:$0xf]
    %v24 = vld [vmem:[%s1 + $0x35] sm:$0xf]
    %v25 = vld [vmem:[%s1 + $0x2d] sm:$0x1]
    %v26 = vlaneseq
    %v27 = vshrl.u32 %v26, 7
    %v28 = vsub.s32 0, %v27
    %v29 = vrot.slane %v25, %v28
    %v30 = vld [vmem:[%s1 + $0x2e] sm:$0x1]
    %v31 = vlaneseq
    %v32 = vshrl.u32 %v31, 7
    %v33 = vsub.s32 0, %v32
    %v34 = vrot.slane %v30, %v33
    %v35 = vld [vmem:[%s1 + $0x2f] sm:$0x1]
    %v36 = vlaneseq
    %v37 = vshrl.u32 %v36, 7
    %v38 = vsub.s32 0, %v37
    %v39 = vrot.slane %v35, %v38
    %v40 = vld [vmem:[%s1 + $0x30] sm:$0x1]
    %v41 = vlaneseq
    %v42 = vshrl.u32 %v41, 7
    %v43 = vsub.s32 0, %v42
    %v44 = vrot.slane %v40, %v43
    %v45 = vld [vmem:[%s1 + $0x31] sm:$0x1]
    %v46 = vlaneseq
    %v47 = vshrl.u32 %v46, 7
    %v48 = vsub.s32 0, %v47
    %v49 = vrot.slane %v45, %v48
    %v50 = vld [vmem:[%s1 + $0x32] sm:$0x1]
    %v51 = vlaneseq
    %v52 = vshrl.u32 %v51, 7
    %v53 = vsub.s32 0, %v52
    %v54 = vrot.slane %v50, %v53
    %v55 = vld [vmem:[%s1 + $0x33] sm:$0x1]
    %v56 = vlaneseq
    %v57 = vshrl.u32 %v56, 7
    %v58 = vsub.s32 0, %v57
    %v59 = vrot.slane %v55, %v58
    %v60 = vld [vmem:[%s1 + $0x34] sm:$0x1]
    %v61 = vlaneseq
    %v62 = vshrl.u32 %v61, 7
    %v63 = vsub.s32 0, %v62
    %v64 = vrot.slane %v60, %v63
    %v65 = vld [vmem:[%s1 + $0x39] sm:$0x1]
    %v66 = vlaneseq
    %v67 = vshrl.u32 %v66, 7
    %v68 = vsub.s32 0, %v67
    %v69 = vrot.slane %v65, %v68
    %v70 = vld [vmem:[%s0] sm:$0x3]
    %72 = vset.pattern.permute.xlu0 0
    %73 = vperm.xlu0 %72, %v70
    %v74 = vpop.permute.xlu0 %73
    %76 = vset.pattern.permute.xlu0 1
    %77 = vperm.xlu0 %76, %v70
    %v78 = vpop.permute.xlu0 %77
    %80 = vset.pattern.permute.xlu0 2
    %81 = vperm.xlu0 %80, %v70
    %v82 = vpop.permute.xlu0 %81
    %v84 = vlaneseq
    %v85 = vshrl.u32 %v84, 7
    %v86 = vsub.s32 0, %v85
    %v87 = vrot.slane %v12, %v86
    %v88 = vmul.f32 %v74, %v87
    %v89 = vadd.f32 %v29, %v88
    %v90 = vlaneseq
    %v91 = vshrl.u32 %v90, 7
    %v92 = vsub.s32 0, %v91
    %v93 = vrot.slane %v13, %v92
    %v94 = vmul.f32 %v74, %v93
    %v95 = vadd.f32 %v34, %v94
    %v96 = vlaneseq
    %v97 = vshrl.u32 %v96, 7
    %v98 = vsub.s32 0, %v97
    %v99 = vrot.slane %v14, %v98
    %v100 = vmul.f32 %v74, %v99
    %v101 = vadd.f32 %v39, %v100
    %v102 = vlaneseq
    %v103 = vshrl.u32 %v102, 7
    %v104 = vsub.s32 1, %v103
    %v105 = vrot.slane %v12, %v104
    %v106 = vmul.f32 %v78, %v105
    %v107 = vadd.f32 %v89, %v106
    %v108 = vlaneseq
    %v109 = vshrl.u32 %v108, 7
    %v110 = vsub.s32 1, %v109
    %v111 = vrot.slane %v13, %v110
    %v112 = vmul.f32 %v78, %v111
    %v113 = vadd.f32 %v95, %v112
    %v114 = vlaneseq
    %v115 = vshrl.u32 %v114, 7
    %v116 = vsub.s32 1, %v115
    %v117 = vrot.slane %v14, %v116
    %v118 = vmul.f32 %v78, %v117
    %v119 = vadd.f32 %v101, %v118
    %v120 = vlaneseq
    %v121 = vshrl.u32 %v120, 7
    %v122 = vsub.s32 2, %v121
    %v123 = vrot.slane %v12, %v122
    %v124 = vmul.f32 %v82, %v123
    %v125 = vadd.f32 %v107, %v124
    %v126 = vlaneseq
    %v127 = vshrl.u32 %v126, 7
    %v128 = vsub.s32 2, %v127
    %v129 = vrot.slane %v13, %v128
    %v130 = vmul.f32 %v82, %v129
    %v131 = vadd.f32 %v113, %v130
    %v132 = vlaneseq
    %v133 = vshrl.u32 %v132, 7
    %v134 = vsub.s32 2, %v133
    %v135 = vrot.slane %v14, %v134
    %v136 = vmul.f32 %v82, %v135
    %v137 = vadd.f32 %v119, %v136
    %v138 = vmul.f32 %v125, 0.5
    %v139 = vtanh.pop %v138
    %v140 = vmul.f32 %v139, 0.5
    %v141 = vadd.f32 %v140, 0.5
    %v142 = vmul.f32 %v131, 0.5
    %v143 = vtanh.pop %v142
    %v144 = vmul.f32 %v143, 0.5
    %v145 = vadd.f32 %v144, 0.5
    %v146 = vmul.f32 %v141, %v44
    %v147 = vadd.f32 %v137, %v146
    %v148 = vtanh.pop %v147
    %v149 = vsub.f32 0.0, %v148
    %v150 = vmul.f32 %v145, %v149
    %v151 = vadd.f32 %v150, %v148
    %153 = vset.pattern.permute.xlu0 0
    %154 = vperm.xlu0 %153, %v151
    %v155 = vpop.permute.xlu0 %154
    %157 = vset.pattern.permute.xlu0 1
    %158 = vperm.xlu0 %157, %v151
    %v159 = vpop.permute.xlu0 %158
    %161 = vset.pattern.permute.xlu0 2
    %162 = vperm.xlu0 %161, %v151
    %v163 = vpop.permute.xlu0 %162
    %165 = vset.pattern.permute.xlu0 3
    %166 = vperm.xlu0 %165, %v151
    %v167 = vpop.permute.xlu0 %166
    %169 = vset.pattern.permute.xlu0 3
    %170 = vperm.xlu0 %169, %v70
    %v171 = vpop.permute.xlu0 %170
    %173 = vset.pattern.permute.xlu0 4
    %174 = vperm.xlu0 %173, %v70
    %v175 = vpop.permute.xlu0 %174
    %177 = vset.pattern.permute.xlu0 5
    %178 = vperm.xlu0 %177, %v70
    %v179 = vpop.permute.xlu0 %178
    %v181 = vmul.f32 %v171, %v87
    %v182 = vadd.f32 %v29, %v181
    %v183 = vmul.f32 %v171, %v93
    %v184 = vadd.f32 %v34, %v183
    %v185 = vmul.f32 %v171, %v99
    %v186 = vadd.f32 %v39, %v185
    %v187 = vmul.f32 %v175, %v105
    %v188 = vadd.f32 %v182, %v187
    %v189 = vmul.f32 %v175, %v111
    %v190 = vadd.f32 %v184, %v189
    %v191 = vmul.f32 %v175, %v117
    %v192 = vadd.f32 %v186, %v191
    %v193 = vmul.f32 %v179, %v123
    %v194 = vadd.f32 %v188, %v193
    %v195 = vmul.f32 %v179, %v129
    %v196 = vadd.f32 %v190, %v195
    %v197 = vmul.f32 %v179, %v135
    %v198 = vadd.f32 %v192, %v197
    %v199 = vlaneseq
    %v200 = vshrl.u32 %v199, 7
    %v201 = vsub.s32 0, %v200
    %v202 = vrot.slane %v15, %v201
    %v203 = vmul.f32 %v155, %v202
    %v204 = vadd.f32 %v194, %v203
    %v205 = vlaneseq
    %v206 = vshrl.u32 %v205, 7
    %v207 = vsub.s32 0, %v206
    %v208 = vrot.slane %v16, %v207
    %v209 = vmul.f32 %v155, %v208
    %v210 = vadd.f32 %v196, %v209
    %v211 = vlaneseq
    %v212 = vshrl.u32 %v211, 7
    %v213 = vsub.s32 0, %v212
    %v214 = vrot.slane %v17, %v213
    %v215 = vmul.f32 %v155, %v214
    %v216 = vadd.f32 %v44, %v215
    %v217 = vlaneseq
    %v218 = vshrl.u32 %v217, 7
    %v219 = vsub.s32 1, %v218
    %v220 = vrot.slane %v15, %v219
    %v221 = vmul.f32 %v159, %v220
    %v222 = vadd.f32 %v204, %v221
    %v223 = vlaneseq
    %v224 = vshrl.u32 %v223, 7
    %v225 = vsub.s32 1, %v224
    %v226 = vrot.slane %v16, %v225
    %v227 = vmul.f32 %v159, %v226
    %v228 = vadd.f32 %v210, %v227
    %v229 = vlaneseq
    %v230 = vshrl.u32 %v229, 7
    %v231 = vsub.s32 1, %v230
    %v232 = vrot.slane %v17, %v231
    %v233 = vmul.f32 %v159, %v232
    %v234 = vadd.f32 %v216, %v233
    %v235 = vlaneseq
    %v236 = vshrl.u32 %v235, 7
    %v237 = vsub.s32 2, %v236
    %v238 = vrot.slane %v15, %v237
    %v239 = vmul.f32 %v163, %v238
    %v240 = vadd.f32 %v222, %v239
    %v241 = vlaneseq
    %v242 = vshrl.u32 %v241, 7
    %v243 = vsub.s32 2, %v242
    %v244 = vrot.slane %v16, %v243
    %v245 = vmul.f32 %v163, %v244
    %v246 = vadd.f32 %v228, %v245
    %v247 = vlaneseq
    %v248 = vshrl.u32 %v247, 7
    %v249 = vsub.s32 2, %v248
    %v250 = vrot.slane %v17, %v249
    %v251 = vmul.f32 %v163, %v250
    %v252 = vadd.f32 %v234, %v251
    %v253 = vlaneseq
    %v254 = vshrl.u32 %v253, 7
    %v255 = vsub.s32 3, %v254
    %v256 = vrot.slane %v15, %v255
    %v257 = vmul.f32 %v167, %v256
    %v258 = vadd.f32 %v240, %v257
    %v259 = vlaneseq
    %v260 = vshrl.u32 %v259, 7
    %v261 = vsub.s32 3, %v260
    %v262 = vrot.slane %v16, %v261
    %v263 = vmul.f32 %v167, %v262
    %v264 = vadd.f32 %v246, %v263
    %v265 = vlaneseq
    %v266 = vshrl.u32 %v265, 7
    %v267 = vsub.s32 3, %v266
    %v268 = vrot.slane %v17, %v267
    %v269 = vmul.f32 %v167, %v268
    %v270 = vadd.f32 %v252, %v269
    %v271 = vmul.f32 %v258, 0.5
    %v272 = vtanh.pop %v271
    %v273 = vmul.f32 %v272, 0.5
    %v274 = vadd.f32 %v273, 0.5
    %v275 = vmul.f32 %v264, 0.5
    %v276 = vtanh.pop %v275
    %v277 = vmul.f32 %v276, 0.5
    %v278 = vadd.f32 %v277, 0.5
    %v279 = vmul.f32 %v274, %v270
    %v280 = vadd.f32 %v198, %v279
    %v281 = vtanh.pop %v280
    %v282 = vsub.f32 %v151, %v281
    %v283 = vmul.f32 %v278, %v282
    %v284 = vadd.f32 %v283, %v281
    %v285 = vlaneseq
    %v286 = vshrl.u32 %v285, 7
    %v287 = vsub.s32 0, %v286
    %v288 = vrot.slane %v18, %v287
    %v289 = vmul.f32 %v155, %v288
    %v290 = vadd.f32 %v49, %v289
    %v291 = vlaneseq
    %v292 = vshrl.u32 %v291, 7
    %v293 = vsub.s32 0, %v292
    %v294 = vrot.slane %v19, %v293
    %v295 = vmul.f32 %v155, %v294
    %v296 = vadd.f32 %v54, %v295
    %v297 = vlaneseq
    %v298 = vshrl.u32 %v297, 7
    %v299 = vsub.s32 0, %v298
    %v300 = vrot.slane %v20, %v299
    %v301 = vmul.f32 %v155, %v300
    %v302 = vadd.f32 %v59, %v301
    %v303 = vlaneseq
    %v304 = vshrl.u32 %v303, 7
    %v305 = vsub.s32 1, %v304
    %v306 = vrot.slane %v18, %v305
    %v307 = vmul.f32 %v159, %v306
    %v308 = vadd.f32 %v290, %v307
    %v309 = vlaneseq
    %v310 = vshrl.u32 %v309, 7
    %v311 = vsub.s32 1, %v310
    %v312 = vrot.slane %v19, %v311
    %v313 = vmul.f32 %v159, %v312
    %v314 = vadd.f32 %v296, %v313
    %v315 = vlaneseq
    %v316 = vshrl.u32 %v315, 7
    %v317 = vsub.s32 1, %v316
    %v318 = vrot.slane %v20, %v317
    %v319 = vmul.f32 %v159, %v318
    %v320 = vadd.f32 %v302, %v319
    %v321 = vlaneseq
    %v322 = vshrl.u32 %v321, 7
    %v323 = vsub.s32 2, %v322
    %v324 = vrot.slane %v18, %v323
    %v325 = vmul.f32 %v163, %v324
    %v326 = vadd.f32 %v308, %v325
    %v327 = vlaneseq
    %v328 = vshrl.u32 %v327, 7
    %v329 = vsub.s32 2, %v328
    %v330 = vrot.slane %v19, %v329
    %v331 = vmul.f32 %v163, %v330
    %v332 = vadd.f32 %v314, %v331
    %v333 = vlaneseq
    %v334 = vshrl.u32 %v333, 7
    %v335 = vsub.s32 2, %v334
    %v336 = vrot.slane %v20, %v335
    %v337 = vmul.f32 %v163, %v336
    %v338 = vadd.f32 %v320, %v337
    %v339 = vlaneseq
    %v340 = vshrl.u32 %v339, 7
    %v341 = vsub.s32 3, %v340
    %v342 = vrot.slane %v18, %v341
    %v343 = vmul.f32 %v167, %v342
    %v344 = vadd.f32 %v326, %v343
    %v345 = vlaneseq
    %v346 = vshrl.u32 %v345, 7
    %v347 = vsub.s32 3, %v346
    %v348 = vrot.slane %v19, %v347
    %v349 = vmul.f32 %v167, %v348
    %v350 = vadd.f32 %v332, %v349
    %v351 = vlaneseq
    %v352 = vshrl.u32 %v351, 7
    %v353 = vsub.s32 3, %v352
    %v354 = vrot.slane %v20, %v353
    %v355 = vmul.f32 %v167, %v354
    %v356 = vadd.f32 %v338, %v355
    %v357 = vmul.f32 %v344, 0.5
    %v358 = vtanh.pop %v357
    %v359 = vmul.f32 %v358, 0.5
    %v360 = vadd.f32 %v359, 0.5
    %v361 = vmul.f32 %v350, 0.5
    %v362 = vtanh.pop %v361
    %v363 = vmul.f32 %v362, 0.5
    %v364 = vadd.f32 %v363, 0.5
    %v365 = vmul.f32 %v360, %v64
    %v366 = vadd.f32 %v356, %v365
    %v367 = vtanh.pop %v366
    %v368 = vsub.f32 0.0, %v367
    %v369 = vmul.f32 %v364, %v368
    %v370 = vadd.f32 %v369, %v367
    %372 = vset.pattern.permute.xlu0 0
    %373 = vperm.xlu0 %372, %v284
    %v374 = vpop.permute.xlu0 %373
    %376 = vset.pattern.permute.xlu0 1
    %377 = vperm.xlu0 %376, %v284
    %v378 = vpop.permute.xlu0 %377
    %380 = vset.pattern.permute.xlu0 2
    %381 = vperm.xlu0 %380, %v284
    %v382 = vpop.permute.xlu0 %381
    %384 = vset.pattern.permute.xlu0 3
    %385 = vperm.xlu0 %384, %v284
    %v386 = vpop.permute.xlu0 %385
    %388 = vset.pattern.permute.xlu0 6
    %389 = vperm.xlu0 %388, %v70
    %v390 = vpop.permute.xlu0 %389
    %392 = vset.pattern.permute.xlu0 7
    %393 = vperm.xlu0 %392, %v70
    %v394 = vpop.permute.xlu0 %393
    %396 = vset.pattern.permute.xlu0 8
    %397 = vperm.xlu0 %396, %v70
    %v398 = vpop.permute.xlu0 %397
    %v400 = vmul.f32 %v390, %v87
    %v401 = vadd.f32 %v29, %v400
    %v402 = vmul.f32 %v390, %v93
    %v403 = vadd.f32 %v34, %v402
    %v404 = vmul.f32 %v390, %v99
    %v405 = vadd.f32 %v39, %v404
    %v406 = vmul.f32 %v394, %v105
    %v407 = vadd.f32 %v401, %v406
    %v408 = vmul.f32 %v394, %v111
    %v409 = vadd.f32 %v403, %v408
    %v410 = vmul.f32 %v394, %v117
    %v411 = vadd.f32 %v405, %v410
    %v412 = vmul.f32 %v398, %v123
    %v413 = vadd.f32 %v407, %v412
    %v414 = vmul.f32 %v398, %v129
    %v415 = vadd.f32 %v409, %v414
    %v416 = vmul.f32 %v398, %v135
    %v417 = vadd.f32 %v411, %v416
    %v418 = vmul.f32 %v374, %v202
    %v419 = vadd.f32 %v413, %v418
    %v420 = vmul.f32 %v374, %v208
    %v421 = vadd.f32 %v415, %v420
    %v422 = vmul.f32 %v374, %v214
    %v423 = vadd.f32 %v44, %v422
    %v424 = vmul.f32 %v378, %v220
    %v425 = vadd.f32 %v419, %v424
    %v426 = vmul.f32 %v378, %v226
    %v427 = vadd.f32 %v421, %v426
    %v428 = vmul.f32 %v378, %v232
    %v429 = vadd.f32 %v423, %v428
    %v430 = vmul.f32 %v382, %v238
    %v431 = vadd.f32 %v425, %v430
    %v432 = vmul.f32 %v382, %v244
    %v433 = vadd.f32 %v427, %v432
    %v434 = vmul.f32 %v382, %v250
    %v435 = vadd.f32 %v429, %v434
    %v436 = vmul.f32 %v386, %v256
    %v437 = vadd.f32 %v431, %v436
    %v438 = vmul.f32 %v386, %v262
    %v439 = vadd.f32 %v433, %v438
    %v440 = vmul.f32 %v386, %v268
    %v441 = vadd.f32 %v435, %v440
    %v442 = vmul.f32 %v437, 0.5
    %v443 = vtanh.pop %v442
    %v444 = vmul.f32 %v443, 0.5
    %v445 = vadd.f32 %v444, 0.5
    %v446 = vmul.f32 %v439, 0.5
    %v447 = vtanh.pop %v446
    %v448 = vmul.f32 %v447, 0.5
    %v449 = vadd.f32 %v448, 0.5
    %v450 = vmul.f32 %v445, %v441
    %v451 = vadd.f32 %v417, %v450
    %v452 = vtanh.pop %v451
    %v453 = vsub.f32 %v284, %v452
    %v454 = vmul.f32 %v449, %v453
    %v455 = vadd.f32 %v454, %v452
    %v456 = vmul.f32 %v374, %v288
    %v457 = vadd.f32 %v49, %v456
    %v458 = vmul.f32 %v374, %v294
    %v459 = vadd.f32 %v54, %v458
    %v460 = vmul.f32 %v374, %v300
    %v461 = vadd.f32 %v59, %v460
    %v462 = vmul.f32 %v378, %v306
    %v463 = vadd.f32 %v457, %v462
    %v464 = vmul.f32 %v378, %v312
    %v465 = vadd.f32 %v459, %v464
    %v466 = vmul.f32 %v378, %v318
    %v467 = vadd.f32 %v461, %v466
    %v468 = vmul.f32 %v382, %v324
    %v469 = vadd.f32 %v463, %v468
    %v470 = vmul.f32 %v382, %v330
    %v471 = vadd.f32 %v465, %v470
    %v472 = vmul.f32 %v382, %v336
    %v473 = vadd.f32 %v467, %v472
    %v474 = vmul.f32 %v386, %v342
    %v475 = vadd.f32 %v469, %v474
    %v476 = vmul.f32 %v386, %v348
    %v477 = vadd.f32 %v471, %v476
    %v478 = vmul.f32 %v386, %v354
    %v479 = vadd.f32 %v473, %v478
    %481 = vset.pattern.permute.xlu0 0
    %482 = vperm.xlu0 %481, %v370
    %v483 = vpop.permute.xlu0 %482
    %485 = vset.pattern.permute.xlu0 1
    %486 = vperm.xlu0 %485, %v370
    %v487 = vpop.permute.xlu0 %486
    %489 = vset.pattern.permute.xlu0 2
    %490 = vperm.xlu0 %489, %v370
    %v491 = vpop.permute.xlu0 %490
    %493 = vset.pattern.permute.xlu0 3
    %494 = vperm.xlu0 %493, %v370
    %v495 = vpop.permute.xlu0 %494
    %v497 = vlaneseq
    %v498 = vshrl.u32 %v497, 7
    %v499 = vsub.s32 0, %v498
    %v500 = vrot.slane %v21, %v499
    %v501 = vmul.f32 %v483, %v500
    %v502 = vadd.f32 %v475, %v501
    %v503 = vlaneseq
    %v504 = vshrl.u32 %v503, 7
    %v505 = vsub.s32 0, %v504
    %v506 = vrot.slane %v22, %v505
    %v507 = vmul.f32 %v483, %v506
    %v508 = vadd.f32 %v477, %v507
    %v509 = vlaneseq
    %v510 = vshrl.u32 %v509, 7
    %v511 = vsub.s32 0, %v510
    %v512 = vrot.slane %v23, %v511
    %v513 = vmul.f32 %v483, %v512
    %v514 = vadd.f32 %v64, %v513
    %v515 = vlaneseq
    %v516 = vshrl.u32 %v515, 7
    %v517 = vsub.s32 1, %v516
    %v518 = vrot.slane %v21, %v517
    %v519 = vmul.f32 %v487, %v518
    %v520 = vadd.f32 %v502, %v519
    %v521 = vlaneseq
    %v522 = vshrl.u32 %v521, 7
    %v523 = vsub.s32 1, %v522
    %v524 = vrot.slane %v22, %v523
    %v525 = vmul.f32 %v487, %v524
    %v526 = vadd.f32 %v508, %v525
    %v527 = vlaneseq
    %v528 = vshrl.u32 %v527, 7
    %v529 = vsub.s32 1, %v528
    %v530 = vrot.slane %v23, %v529
    %v531 = vmul.f32 %v487, %v530
    %v532 = vadd.f32 %v514, %v531
    %v533 = vlaneseq
    %v534 = vshrl.u32 %v533, 7
    %v535 = vsub.s32 2, %v534
    %v536 = vrot.slane %v21, %v535
    %v537 = vmul.f32 %v491, %v536
    %v538 = vadd.f32 %v520, %v537
    %v539 = vlaneseq
    %v540 = vshrl.u32 %v539, 7
    %v541 = vsub.s32 2, %v540
    %v542 = vrot.slane %v22, %v541
    %v543 = vmul.f32 %v491, %v542
    %v544 = vadd.f32 %v526, %v543
    %v545 = vlaneseq
    %v546 = vshrl.u32 %v545, 7
    %v547 = vsub.s32 2, %v546
    %v548 = vrot.slane %v23, %v547
    %v549 = vmul.f32 %v491, %v548
    %v550 = vadd.f32 %v532, %v549
    %v551 = vlaneseq
    %v552 = vshrl.u32 %v551, 7
    %v553 = vsub.s32 3, %v552
    %v554 = vrot.slane %v21, %v553
    %v555 = vmul.f32 %v495, %v554
    %v556 = vadd.f32 %v538, %v555
    %v557 = vlaneseq
    %v558 = vshrl.u32 %v557, 7
    %v559 = vsub.s32 3, %v558
    %v560 = vrot.slane %v22, %v559
    %v561 = vmul.f32 %v495, %v560
    %v562 = vadd.f32 %v544, %v561
    %v563 = vlaneseq
    %v564 = vshrl.u32 %v563, 7
    %v565 = vsub.s32 3, %v564
    %v566 = vrot.slane %v23, %v565
    %v567 = vmul.f32 %v495, %v566
    %v568 = vadd.f32 %v550, %v567
    %v569 = vmul.f32 %v556, 0.5
    %v570 = vtanh.pop %v569
    %v571 = vmul.f32 %v570, 0.5
    %v572 = vadd.f32 %v571, 0.5
    %v573 = vmul.f32 %v562, 0.5
    %v574 = vtanh.pop %v573
    %v575 = vmul.f32 %v574, 0.5
    %v576 = vadd.f32 %v575, 0.5
    %v577 = vmul.f32 %v572, %v568
    %v578 = vadd.f32 %v479, %v577
    %v579 = vtanh.pop %v578
    %v580 = vsub.f32 %v370, %v579
    %v581 = vmul.f32 %v576, %v580
    %v582 = vadd.f32 %v581, %v579
    %584 = vset.pattern.permute.xlu0 0
    %585 = vperm.xlu0 %584, %v455
    %v586 = vpop.permute.xlu0 %585
    %588 = vset.pattern.permute.xlu0 1
    %589 = vperm.xlu0 %588, %v455
    %v590 = vpop.permute.xlu0 %589
    %592 = vset.pattern.permute.xlu0 2
    %593 = vperm.xlu0 %592, %v455
    %v594 = vpop.permute.xlu0 %593
    %596 = vset.pattern.permute.xlu0 3
    %597 = vperm.xlu0 %596, %v455
    %v598 = vpop.permute.xlu0 %597
    %600 = vset.pattern.permute.xlu0 9
    %601 = vperm.xlu0 %600, %v70
    %v602 = vpop.permute.xlu0 %601
    %604 = vset.pattern.permute.xlu0 10
    %605 = vperm.xlu0 %604, %v70
    %v606 = vpop.permute.xlu0 %605
    %608 = vset.pattern.permute.xlu0 11
    %609 = vperm.xlu0 %608, %v70
    %v610 = vpop.permute.xlu0 %609
    %v612 = vmul.f32 %v602, %v87
    %v613 = vadd.f32 %v29, %v612
    %v614 = vmul.f32 %v602, %v93
    %v615 = vadd.f32 %v34, %v614
    %v616 = vmul.f32 %v602, %v99
    %v617 = vadd.f32 %v39, %v616
    %v618 = vmul.f32 %v606, %v105
    %v619 = vadd.f32 %v613, %v618
    %v620 = vmul.f32 %v606, %v111
    %v621 = vadd.f32 %v615, %v620
    %v622 = vmul.f32 %v606, %v117
    %v623 = vadd.f32 %v617, %v622
    %v624 = vmul.f32 %v610, %v123
    %v625 = vadd.f32 %v619, %v624
    %v626 = vmul.f32 %v610, %v129
    %v627 = vadd.f32 %v621, %v626
    %v628 = vmul.f32 %v610, %v135
    %v629 = vadd.f32 %v623, %v628
    %v630 = vmul.f32 %v586, %v202
    %v631 = vadd.f32 %v625, %v630
    %v632 = vmul.f32 %v586, %v208
    %v633 = vadd.f32 %v627, %v632
    %v634 = vmul.f32 %v586, %v214
    %v635 = vadd.f32 %v44, %v634
    %v636 = vmul.f32 %v590, %v220
    %v637 = vadd.f32 %v631, %v636
    %v638 = vmul.f32 %v590, %v226
    %v639 = vadd.f32 %v633, %v638
    %v640 = vmul.f32 %v590, %v232
    %v641 = vadd.f32 %v635, %v640
    %v642 = vmul.f32 %v594, %v238
    %v643 = vadd.f32 %v637, %v642
    %v644 = vmul.f32 %v594, %v244
    %v645 = vadd.f32 %v639, %v644
    %v646 = vmul.f32 %v594, %v250
    %v647 = vadd.f32 %v641, %v646
    %v648 = vmul.f32 %v598, %v256
    %v649 = vadd.f32 %v643, %v648
    %v650 = vmul.f32 %v598, %v262
    %v651 = vadd.f32 %v645, %v650
    %v652 = vmul.f32 %v598, %v268
    %v653 = vadd.f32 %v647, %v652
    %v654 = vmul.f32 %v649, 0.5
    %v655 = vtanh.pop %v654
    %v656 = vmul.f32 %v655, 0.5
    %v657 = vadd.f32 %v656, 0.5
    %v658 = vmul.f32 %v651, 0.5
    %v659 = vtanh.pop %v658
    %v660 = vmul.f32 %v659, 0.5
    %v661 = vadd.f32 %v660, 0.5
    %v662 = vmul.f32 %v657, %v653
    %v663 = vadd.f32 %v629, %v662
    %v664 = vtanh.pop %v663
    %v665 = vsub.f32 %v455, %v664
    %v666 = vmul.f32 %v661, %v665
    %v667 = vadd.f32 %v666, %v664
    %v668 = vmul.f32 %v586, %v288
    %v669 = vadd.f32 %v49, %v668
    %v670 = vmul.f32 %v586, %v294
    %v671 = vadd.f32 %v54, %v670
    %v672 = vmul.f32 %v586, %v300
    %v673 = vadd.f32 %v59, %v672
    %v674 = vmul.f32 %v590, %v306
    %v675 = vadd.f32 %v669, %v674
    %v676 = vmul.f32 %v590, %v312
    %v677 = vadd.f32 %v671, %v676
    %v678 = vmul.f32 %v590, %v318
    %v679 = vadd.f32 %v673, %v678
    %v680 = vmul.f32 %v594, %v324
    %v681 = vadd.f32 %v675, %v680
    %v682 = vmul.f32 %v594, %v330
    %v683 = vadd.f32 %v677, %v682
    %v684 = vmul.f32 %v594, %v336
    %v685 = vadd.f32 %v679, %v684
    %v686 = vmul.f32 %v598, %v342
    %v687 = vadd.f32 %v681, %v686
    %v688 = vmul.f32 %v598, %v348
    %v689 = vadd.f32 %v683, %v688
    %v690 = vmul.f32 %v598, %v354
    %v691 = vadd.f32 %v685, %v690
    %693 = vset.pattern.permute.xlu0 0
    %694 = vperm.xlu0 %693, %v582
    %v695 = vpop.permute.xlu0 %694
    %697 = vset.pattern.permute.xlu0 1
    %698 = vperm.xlu0 %697, %v582
    %v699 = vpop.permute.xlu0 %698
    %701 = vset.pattern.permute.xlu0 2
    %702 = vperm.xlu0 %701, %v582
    %v703 = vpop.permute.xlu0 %702
    %705 = vset.pattern.permute.xlu0 3
    %706 = vperm.xlu0 %705, %v582
    %v707 = vpop.permute.xlu0 %706
    %v709 = vmul.f32 %v695, %v500
    %v710 = vadd.f32 %v687, %v709
    %v711 = vmul.f32 %v695, %v506
    %v712 = vadd.f32 %v689, %v711
    %v713 = vmul.f32 %v695, %v512
    %v714 = vadd.f32 %v64, %v713
    %v715 = vmul.f32 %v699, %v518
    %v716 = vadd.f32 %v710, %v715
    %v717 = vmul.f32 %v699, %v524
    %v718 = vadd.f32 %v712, %v717
    %v719 = vmul.f32 %v699, %v530
    %v720 = vadd.f32 %v714, %v719
    %v721 = vmul.f32 %v703, %v536
    %v722 = vadd.f32 %v716, %v721
    %v723 = vmul.f32 %v703, %v542
    %v724 = vadd.f32 %v718, %v723
    %v725 = vmul.f32 %v703, %v548
    %v726 = vadd.f32 %v720, %v725
    %v727 = vmul.f32 %v707, %v554
    %v728 = vadd.f32 %v722, %v727
    %v729 = vmul.f32 %v707, %v560
    %v730 = vadd.f32 %v724, %v729
    %v731 = vmul.f32 %v707, %v566
    %v732 = vadd.f32 %v726, %v731
    %v733 = vmul.f32 %v728, 0.5
    %v734 = vtanh.pop %v733
    %v735 = vmul.f32 %v734, 0.5
    %v736 = vadd.f32 %v735, 0.5
    %v737 = vmul.f32 %v730, 0.5
    %v738 = vtanh.pop %v737
    %v739 = vmul.f32 %v738, 0.5
    %v740 = vadd.f32 %v739, 0.5
    %v741 = vmul.f32 %v736, %v732
    %v742 = vadd.f32 %v691, %v741
    %v743 = vtanh.pop %v742
    %v744 = vsub.f32 %v582, %v743
    %v745 = vmul.f32 %v740, %v744
    %v746 = vadd.f32 %v745, %v743
    %748 = vset.pattern.permute.xlu0 0
    %749 = vperm.xlu0 %748, %v667
    %v750 = vpop.permute.xlu0 %749
    %752 = vset.pattern.permute.xlu0 1
    %753 = vperm.xlu0 %752, %v667
    %v754 = vpop.permute.xlu0 %753
    %756 = vset.pattern.permute.xlu0 2
    %757 = vperm.xlu0 %756, %v667
    %v758 = vpop.permute.xlu0 %757
    %760 = vset.pattern.permute.xlu0 3
    %761 = vperm.xlu0 %760, %v667
    %v762 = vpop.permute.xlu0 %761
    %764 = vset.pattern.permute.xlu0 12
    %765 = vperm.xlu0 %764, %v70
    %v766 = vpop.permute.xlu0 %765
    %768 = vset.pattern.permute.xlu0 13
    %769 = vperm.xlu0 %768, %v70
    %v770 = vpop.permute.xlu0 %769
    %772 = vset.pattern.permute.xlu0 14
    %773 = vperm.xlu0 %772, %v70
    %v774 = vpop.permute.xlu0 %773
    %v776 = vmul.f32 %v766, %v87
    %v777 = vadd.f32 %v29, %v776
    %v778 = vmul.f32 %v766, %v93
    %v779 = vadd.f32 %v34, %v778
    %v780 = vmul.f32 %v766, %v99
    %v781 = vadd.f32 %v39, %v780
    %v782 = vmul.f32 %v770, %v105
    %v783 = vadd.f32 %v777, %v782
    %v784 = vmul.f32 %v770, %v111
    %v785 = vadd.f32 %v779, %v784
    %v786 = vmul.f32 %v770, %v117
    %v787 = vadd.f32 %v781, %v786
    %v788 = vmul.f32 %v774, %v123
    %v789 = vadd.f32 %v783, %v788
    %v790 = vmul.f32 %v774, %v129
    %v791 = vadd.f32 %v785, %v790
    %v792 = vmul.f32 %v774, %v135
    %v793 = vadd.f32 %v787, %v792
    %v794 = vmul.f32 %v750, %v202
    %v795 = vadd.f32 %v789, %v794
    %v796 = vmul.f32 %v750, %v208
    %v797 = vadd.f32 %v791, %v796
    %v798 = vmul.f32 %v750, %v214
    %v799 = vadd.f32 %v44, %v798
    %v800 = vmul.f32 %v754, %v220
    %v801 = vadd.f32 %v795, %v800
    %v802 = vmul.f32 %v754, %v226
    %v803 = vadd.f32 %v797, %v802
    %v804 = vmul.f32 %v754, %v232
    %v805 = vadd.f32 %v799, %v804
    %v806 = vmul.f32 %v758, %v238
    %v807 = vadd.f32 %v801, %v806
    %v808 = vmul.f32 %v758, %v244
    %v809 = vadd.f32 %v803, %v808
    %v810 = vmul.f32 %v758, %v250
    %v811 = vadd.f32 %v805, %v810
    %v812 = vmul.f32 %v762, %v256
    %v813 = vadd.f32 %v807, %v812
    %v814 = vmul.f32 %v762, %v262
    %v815 = vadd.f32 %v809, %v814
    %v816 = vmul.f32 %v762, %v268
    %v817 = vadd.f32 %v811, %v816
    %v818 = vmul.f32 %v813, 0.5
    %v819 = vtanh.pop %v818
    %v820 = vmul.f32 %v819, 0.5
    %v821 = vadd.f32 %v820, 0.5
    %v822 = vmul.f32 %v815, 0.5
    %v823 = vtanh.pop %v822
    %v824 = vmul.f32 %v823, 0.5
    %v825 = vadd.f32 %v824, 0.5
    %v826 = vmul.f32 %v821, %v817
    %v827 = vadd.f32 %v793, %v826
    %v828 = vtanh.pop %v827
    %v829 = vsub.f32 %v667, %v828
    %v830 = vmul.f32 %v825, %v829
    %v831 = vadd.f32 %v830, %v828
    %v832 = vmul.f32 %v750, %v288
    %v833 = vadd.f32 %v49, %v832
    %v834 = vmul.f32 %v750, %v294
    %v835 = vadd.f32 %v54, %v834
    %v836 = vmul.f32 %v750, %v300
    %v837 = vadd.f32 %v59, %v836
    %v838 = vmul.f32 %v754, %v306
    %v839 = vadd.f32 %v833, %v838
    %v840 = vmul.f32 %v754, %v312
    %v841 = vadd.f32 %v835, %v840
    %v842 = vmul.f32 %v754, %v318
    %v843 = vadd.f32 %v837, %v842
    %v844 = vmul.f32 %v758, %v324
    %v845 = vadd.f32 %v839, %v844
    %v846 = vmul.f32 %v758, %v330
    %v847 = vadd.f32 %v841, %v846
    %v848 = vmul.f32 %v758, %v336
    %v849 = vadd.f32 %v843, %v848
    %v850 = vmul.f32 %v762, %v342
    %v851 = vadd.f32 %v845, %v850
    %v852 = vmul.f32 %v762, %v348
    %v853 = vadd.f32 %v847, %v852
    %v854 = vmul.f32 %v762, %v354
    %v855 = vadd.f32 %v849, %v854
    %857 = vset.pattern.permute.xlu0 0
    %858 = vperm.xlu0 %857, %v746
    %v859 = vpop.permute.xlu0 %858
    %861 = vset.pattern.permute.xlu0 1
    %862 = vperm.xlu0 %861, %v746
    %v863 = vpop.permute.xlu0 %862
    %865 = vset.pattern.permute.xlu0 2
    %866 = vperm.xlu0 %865, %v746
    %v867 = vpop.permute.xlu0 %866
    %869 = vset.pattern.permute.xlu0 3
    %870 = vperm.xlu0 %869, %v746
    %v871 = vpop.permute.xlu0 %870
    %v873 = vmul.f32 %v859, %v500
    %v874 = vadd.f32 %v851, %v873
    %v875 = vmul.f32 %v859, %v506
    %v876 = vadd.f32 %v853, %v875
    %v877 = vmul.f32 %v859, %v512
    %v878 = vadd.f32 %v64, %v877
    %v879 = vmul.f32 %v863, %v518
    %v880 = vadd.f32 %v874, %v879
    %v881 = vmul.f32 %v863, %v524
    %v882 = vadd.f32 %v876, %v881
    %v883 = vmul.f32 %v863, %v530
    %v884 = vadd.f32 %v878, %v883
    %v885 = vmul.f32 %v867, %v536
    %v886 = vadd.f32 %v880, %v885
    %v887 = vmul.f32 %v867, %v542
    %v888 = vadd.f32 %v882, %v887
    %v889 = vmul.f32 %v867, %v548
    %v890 = vadd.f32 %v884, %v889
    %v891 = vmul.f32 %v871, %v554
    %v892 = vadd.f32 %v886, %v891
    %v893 = vmul.f32 %v871, %v560
    %v894 = vadd.f32 %v888, %v893
    %v895 = vmul.f32 %v871, %v566
    %v896 = vadd.f32 %v890, %v895
    %v897 = vmul.f32 %v892, 0.5
    %v898 = vtanh.pop %v897
    %v899 = vmul.f32 %v898, 0.5
    %v900 = vadd.f32 %v899, 0.5
    %v901 = vmul.f32 %v894, 0.5
    %v902 = vtanh.pop %v901
    %v903 = vmul.f32 %v902, 0.5
    %v904 = vadd.f32 %v903, 0.5
    %v905 = vmul.f32 %v900, %v896
    %v906 = vadd.f32 %v855, %v905
    %v907 = vtanh.pop %v906
    %v908 = vsub.f32 %v746, %v907
    %v909 = vmul.f32 %v904, %v908
    %v910 = vadd.f32 %v909, %v907
    %912 = vset.pattern.permute.xlu0 0
    %913 = vperm.xlu0 %912, %v831
    %v914 = vpop.permute.xlu0 %913
    %916 = vset.pattern.permute.xlu0 1
    %917 = vperm.xlu0 %916, %v831
    %v918 = vpop.permute.xlu0 %917
    %920 = vset.pattern.permute.xlu0 2
    %921 = vperm.xlu0 %920, %v831
    %v922 = vpop.permute.xlu0 %921
    %924 = vset.pattern.permute.xlu0 3
    %925 = vperm.xlu0 %924, %v831
    %v926 = vpop.permute.xlu0 %925
    %928 = vset.pattern.permute.xlu0 15
    %929 = vperm.xlu0 %928, %v70
    %v930 = vpop.permute.xlu0 %929
    %932 = vset.pattern.permute.xlu0 16
    %933 = vperm.xlu0 %932, %v70
    %v934 = vpop.permute.xlu0 %933
    %936 = vset.pattern.permute.xlu0 17
    %937 = vperm.xlu0 %936, %v70
    %v938 = vpop.permute.xlu0 %937
    %v940 = vmul.f32 %v930, %v87
    %v941 = vadd.f32 %v29, %v940
    %v942 = vmul.f32 %v930, %v93
    %v943 = vadd.f32 %v34, %v942
    %v944 = vmul.f32 %v930, %v99
    %v945 = vadd.f32 %v39, %v944
    %v946 = vmul.f32 %v934, %v105
    %v947 = vadd.f32 %v941, %v946
    %v948 = vmul.f32 %v934, %v111
    %v949 = vadd.f32 %v943, %v948
    %v950 = vmul.f32 %v934, %v117
    %v951 = vadd.f32 %v945, %v950
    %v952 = vmul.f32 %v938, %v123
    %v953 = vadd.f32 %v947, %v952
    %v954 = vmul.f32 %v938, %v129
    %v955 = vadd.f32 %v949, %v954
    %v956 = vmul.f32 %v938, %v135
    %v957 = vadd.f32 %v951, %v956
    %v958 = vmul.f32 %v914, %v202
    %v959 = vadd.f32 %v953, %v958
    %v960 = vmul.f32 %v914, %v208
    %v961 = vadd.f32 %v955, %v960
    %v962 = vmul.f32 %v914, %v214
    %v963 = vadd.f32 %v44, %v962
    %v964 = vmul.f32 %v918, %v220
    %v965 = vadd.f32 %v959, %v964
    %v966 = vmul.f32 %v918, %v226
    %v967 = vadd.f32 %v961, %v966
    %v968 = vmul.f32 %v918, %v232
    %v969 = vadd.f32 %v963, %v968
    %v970 = vmul.f32 %v922, %v238
    %v971 = vadd.f32 %v965, %v970
    %v972 = vmul.f32 %v922, %v244
    %v973 = vadd.f32 %v967, %v972
    %v974 = vmul.f32 %v922, %v250
    %v975 = vadd.f32 %v969, %v974
    %v976 = vmul.f32 %v926, %v256
    %v977 = vadd.f32 %v971, %v976
    %v978 = vmul.f32 %v926, %v262
    %v979 = vadd.f32 %v973, %v978
    %v980 = vmul.f32 %v926, %v268
    %v981 = vadd.f32 %v975, %v980
    %v982 = vmul.f32 %v977, 0.5
    %v983 = vtanh.pop %v982
    %v984 = vmul.f32 %v983, 0.5
    %v985 = vadd.f32 %v984, 0.5
    %v986 = vmul.f32 %v979, 0.5
    %v987 = vtanh.pop %v986
    %v988 = vmul.f32 %v987, 0.5
    %v989 = vadd.f32 %v988, 0.5
    %v990 = vmul.f32 %v985, %v981
    %v991 = vadd.f32 %v957, %v990
    %v992 = vtanh.pop %v991
    %v993 = vsub.f32 %v831, %v992
    %v994 = vmul.f32 %v989, %v993
    %v995 = vadd.f32 %v994, %v992
    %v996 = vmul.f32 %v914, %v288
    %v997 = vadd.f32 %v49, %v996
    %v998 = vmul.f32 %v914, %v294
    %v999 = vadd.f32 %v54, %v998
    %v1000 = vmul.f32 %v914, %v300
    %v1001 = vadd.f32 %v59, %v1000
    %v1002 = vmul.f32 %v918, %v306
    %v1003 = vadd.f32 %v997, %v1002
    %v1004 = vmul.f32 %v918, %v312
    %v1005 = vadd.f32 %v999, %v1004
    %v1006 = vmul.f32 %v918, %v318
    %v1007 = vadd.f32 %v1001, %v1006
    %v1008 = vmul.f32 %v922, %v324
    %v1009 = vadd.f32 %v1003, %v1008
    %v1010 = vmul.f32 %v922, %v330
    %v1011 = vadd.f32 %v1005, %v1010
    %v1012 = vmul.f32 %v922, %v336
    %v1013 = vadd.f32 %v1007, %v1012
    %v1014 = vmul.f32 %v926, %v342
    %v1015 = vadd.f32 %v1009, %v1014
    %v1016 = vmul.f32 %v926, %v348
    %v1017 = vadd.f32 %v1011, %v1016
    %v1018 = vmul.f32 %v926, %v354
    %v1019 = vadd.f32 %v1013, %v1018
    %1021 = vset.pattern.permute.xlu0 0
    %1022 = vperm.xlu0 %1021, %v910
    %v1023 = vpop.permute.xlu0 %1022
    %1025 = vset.pattern.permute.xlu0 1
    %1026 = vperm.xlu0 %1025, %v910
    %v1027 = vpop.permute.xlu0 %1026
    %1029 = vset.pattern.permute.xlu0 2
    %1030 = vperm.xlu0 %1029, %v910
    %v1031 = vpop.permute.xlu0 %1030
    %1033 = vset.pattern.permute.xlu0 3
    %1034 = vperm.xlu0 %1033, %v910
    %v1035 = vpop.permute.xlu0 %1034
    %v1037 = vmul.f32 %v1023, %v500
    %v1038 = vadd.f32 %v1015, %v1037
    %v1039 = vmul.f32 %v1023, %v506
    %v1040 = vadd.f32 %v1017, %v1039
    %v1041 = vmul.f32 %v1023, %v512
    %v1042 = vadd.f32 %v64, %v1041
    %v1043 = vmul.f32 %v1027, %v518
    %v1044 = vadd.f32 %v1038, %v1043
    %v1045 = vmul.f32 %v1027, %v524
    %v1046 = vadd.f32 %v1040, %v1045
    %v1047 = vmul.f32 %v1027, %v530
    %v1048 = vadd.f32 %v1042, %v1047
    %v1049 = vmul.f32 %v1031, %v536
    %v1050 = vadd.f32 %v1044, %v1049
    %v1051 = vmul.f32 %v1031, %v542
    %v1052 = vadd.f32 %v1046, %v1051
    %v1053 = vmul.f32 %v1031, %v548
    %v1054 = vadd.f32 %v1048, %v1053
    %v1055 = vmul.f32 %v1035, %v554
    %v1056 = vadd.f32 %v1050, %v1055
    %v1057 = vmul.f32 %v1035, %v560
    %v1058 = vadd.f32 %v1052, %v1057
    %v1059 = vmul.f32 %v1035, %v566
    %v1060 = vadd.f32 %v1054, %v1059
    %v1061 = vmul.f32 %v1056, 0.5
    %v1062 = vtanh.pop %v1061
    %v1063 = vmul.f32 %v1062, 0.5
    %v1064 = vadd.f32 %v1063, 0.5
    %v1065 = vmul.f32 %v1058, 0.5
    %v1066 = vtanh.pop %v1065
    %v1067 = vmul.f32 %v1066, 0.5
    %v1068 = vadd.f32 %v1067, 0.5
    %v1069 = vmul.f32 %v1064, %v1060
    %v1070 = vadd.f32 %v1019, %v1069
    %v1071 = vtanh.pop %v1070
    %v1072 = vsub.f32 %v910, %v1071
    %v1073 = vmul.f32 %v1068, %v1072
    %v1074 = vadd.f32 %v1073, %v1071
    %1076 = vset.pattern.permute.xlu0 0
    %1077 = vperm.xlu0 %1076, %v995
    %v1078 = vpop.permute.xlu0 %1077
    %1080 = vset.pattern.permute.xlu0 1
    %1081 = vperm.xlu0 %1080, %v995
    %v1082 = vpop.permute.xlu0 %1081
    %1084 = vset.pattern.permute.xlu0 2
    %1085 = vperm.xlu0 %1084, %v995
    %v1086 = vpop.permute.xlu0 %1085
    %1088 = vset.pattern.permute.xlu0 3
    %1089 = vperm.xlu0 %1088, %v995
    %v1090 = vpop.permute.xlu0 %1089
    %1092 = vset.pattern.permute.xlu0 18
    %1093 = vperm.xlu0 %1092, %v70
    %v1094 = vpop.permute.xlu0 %1093
    %1096 = vset.pattern.permute.xlu0 19
    %1097 = vperm.xlu0 %1096, %v70
    %v1098 = vpop.permute.xlu0 %1097
    %1100 = vset.pattern.permute.xlu0 20
    %1101 = vperm.xlu0 %1100, %v70
    %v1102 = vpop.permute.xlu0 %1101
    %v1104 = vmul.f32 %v1094, %v87
    %v1105 = vadd.f32 %v29, %v1104
    %v1106 = vmul.f32 %v1094, %v93
    %v1107 = vadd.f32 %v34, %v1106
    %v1108 = vmul.f32 %v1094, %v99
    %v1109 = vadd.f32 %v39, %v1108
    %v1110 = vmul.f32 %v1098, %v105
    %v1111 = vadd.f32 %v1105, %v1110
    %v1112 = vmul.f32 %v1098, %v111
    %v1113 = vadd.f32 %v1107, %v1112
    %v1114 = vmul.f32 %v1098, %v117
    %v1115 = vadd.f32 %v1109, %v1114
    %v1116 = vmul.f32 %v1102, %v123
    %v1117 = vadd.f32 %v1111, %v1116
    %v1118 = vmul.f32 %v1102, %v129
    %v1119 = vadd.f32 %v1113, %v1118
    %v1120 = vmul.f32 %v1102, %v135
    %v1121 = vadd.f32 %v1115, %v1120
    %v1122 = vmul.f32 %v1078, %v202
    %v1123 = vadd.f32 %v1117, %v1122
    %v1124 = vmul.f32 %v1078, %v208
    %v1125 = vadd.f32 %v1119, %v1124
    %v1126 = vmul.f32 %v1078, %v214
    %v1127 = vadd.f32 %v44, %v1126
    %v1128 = vmul.f32 %v1082, %v220
    %v1129 = vadd.f32 %v1123, %v1128
    %v1130 = vmul.f32 %v1082, %v226
    %v1131 = vadd.f32 %v1125, %v1130
    %v1132 = vmul.f32 %v1082, %v232
    %v1133 = vadd.f32 %v1127, %v1132
    %v1134 = vmul.f32 %v1086, %v238
    %v1135 = vadd.f32 %v1129, %v1134
    %v1136 = vmul.f32 %v1086, %v244
    %v1137 = vadd.f32 %v1131, %v1136
    %v1138 = vmul.f32 %v1086, %v250
    %v1139 = vadd.f32 %v1133, %v1138
    %v1140 = vmul.f32 %v1090, %v256
    %v1141 = vadd.f32 %v1135, %v1140
    %v1142 = vmul.f32 %v1090, %v262
    %v1143 = vadd.f32 %v1137, %v1142
    %v1144 = vmul.f32 %v1090, %v268
    %v1145 = vadd.f32 %v1139, %v1144
    %v1146 = vmul.f32 %v1141, 0.5
    %v1147 = vtanh.pop %v1146
    %v1148 = vmul.f32 %v1147, 0.5
    %v1149 = vadd.f32 %v1148, 0.5
    %v1150 = vmul.f32 %v1143, 0.5
    %v1151 = vtanh.pop %v1150
    %v1152 = vmul.f32 %v1151, 0.5
    %v1153 = vadd.f32 %v1152, 0.5
    %v1154 = vmul.f32 %v1149, %v1145
    %v1155 = vadd.f32 %v1121, %v1154
    %v1156 = vtanh.pop %v1155
    %v1157 = vsub.f32 %v995, %v1156
    %v1158 = vmul.f32 %v1153, %v1157
    %v1159 = vadd.f32 %v1158, %v1156
    %v1160 = vmul.f32 %v1078, %v288
    %v1161 = vadd.f32 %v49, %v1160
    %v1162 = vmul.f32 %v1078, %v294
    %v1163 = vadd.f32 %v54, %v1162
    %v1164 = vmul.f32 %v1078, %v300
    %v1165 = vadd.f32 %v59, %v1164
    %v1166 = vmul.f32 %v1082, %v306
    %v1167 = vadd.f32 %v1161, %v1166
    %v1168 = vmul.f32 %v1082, %v312
    %v1169 = vadd.f32 %v1163, %v1168
    %v1170 = vmul.f32 %v1082, %v318
    %v1171 = vadd.f32 %v1165, %v1170
    %v1172 = vmul.f32 %v1086, %v324
    %v1173 = vadd.f32 %v1167, %v1172
    %v1174 = vmul.f32 %v1086, %v330
    %v1175 = vadd.f32 %v1169, %v1174
    %v1176 = vmul.f32 %v1086, %v336
    %v1177 = vadd.f32 %v1171, %v1176
    %v1178 = vmul.f32 %v1090, %v342
    %v1179 = vadd.f32 %v1173, %v1178
    %v1180 = vmul.f32 %v1090, %v348
    %v1181 = vadd.f32 %v1175, %v1180
    %v1182 = vmul.f32 %v1090, %v354
    %v1183 = vadd.f32 %v1177, %v1182
    %1185 = vset.pattern.permute.xlu0 0
    %1186 = vperm.xlu0 %1185, %v1074
    %v1187 = vpop.permute.xlu0 %1186
    %1189 = vset.pattern.permute.xlu0 1
    %1190 = vperm.xlu0 %1189, %v1074
    %v1191 = vpop.permute.xlu0 %1190
    %1193 = vset.pattern.permute.xlu0 2
    %1194 = vperm.xlu0 %1193, %v1074
    %v1195 = vpop.permute.xlu0 %1194
    %1197 = vset.pattern.permute.xlu0 3
    %1198 = vperm.xlu0 %1197, %v1074
    %v1199 = vpop.permute.xlu0 %1198
    %v1201 = vmul.f32 %v1187, %v500
    %v1202 = vadd.f32 %v1179, %v1201
    %v1203 = vmul.f32 %v1187, %v506
    %v1204 = vadd.f32 %v1181, %v1203
    %v1205 = vmul.f32 %v1187, %v512
    %v1206 = vadd.f32 %v64, %v1205
    %v1207 = vmul.f32 %v1191, %v518
    %v1208 = vadd.f32 %v1202, %v1207
    %v1209 = vmul.f32 %v1191, %v524
    %v1210 = vadd.f32 %v1204, %v1209
    %v1211 = vmul.f32 %v1191, %v530
    %v1212 = vadd.f32 %v1206, %v1211
    %v1213 = vmul.f32 %v1195, %v536
    %v1214 = vadd.f32 %v1208, %v1213
    %v1215 = vmul.f32 %v1195, %v542
    %v1216 = vadd.f32 %v1210, %v1215
    %v1217 = vmul.f32 %v1195, %v548
    %v1218 = vadd.f32 %v1212, %v1217
    %v1219 = vmul.f32 %v1199, %v554
    %v1220 = vadd.f32 %v1214, %v1219
    %v1221 = vmul.f32 %v1199, %v560
    %v1222 = vadd.f32 %v1216, %v1221
    %v1223 = vmul.f32 %v1199, %v566
    %v1224 = vadd.f32 %v1218, %v1223
    %v1225 = vmul.f32 %v1220, 0.5
    %v1226 = vtanh.pop %v1225
    %v1227 = vmul.f32 %v1226, 0.5
    %v1228 = vadd.f32 %v1227, 0.5
    %v1229 = vmul.f32 %v1222, 0.5
    %v1230 = vtanh.pop %v1229
    %v1231 = vmul.f32 %v1230, 0.5
    %v1232 = vadd.f32 %v1231, 0.5
    %v1233 = vmul.f32 %v1228, %v1224
    %v1234 = vadd.f32 %v1183, %v1233
    %v1235 = vtanh.pop %v1234
    %v1236 = vsub.f32 %v1074, %v1235
    %v1237 = vmul.f32 %v1232, %v1236
    %v1238 = vadd.f32 %v1237, %v1235
    %1240 = vset.pattern.permute.xlu0 0
    %1241 = vperm.xlu0 %1240, %v1159
    %v1242 = vpop.permute.xlu0 %1241
    %1244 = vset.pattern.permute.xlu0 1
    %1245 = vperm.xlu0 %1244, %v1159
    %v1246 = vpop.permute.xlu0 %1245
    %1248 = vset.pattern.permute.xlu0 2
    %1249 = vperm.xlu0 %1248, %v1159
    %v1250 = vpop.permute.xlu0 %1249
    %1252 = vset.pattern.permute.xlu0 3
    %1253 = vperm.xlu0 %1252, %v1159
    %v1254 = vpop.permute.xlu0 %1253
    %1256 = vset.pattern.permute.xlu0 21
    %1257 = vperm.xlu0 %1256, %v70
    %v1258 = vpop.permute.xlu0 %1257
    %1260 = vset.pattern.permute.xlu0 22
    %1261 = vperm.xlu0 %1260, %v70
    %v1262 = vpop.permute.xlu0 %1261
    %1264 = vset.pattern.permute.xlu0 23
    %1265 = vperm.xlu0 %1264, %v70
    %v1266 = vpop.permute.xlu0 %1265
    %v1268 = vmul.f32 %v1258, %v87
    %v1269 = vadd.f32 %v29, %v1268
    %v1270 = vmul.f32 %v1258, %v93
    %v1271 = vadd.f32 %v34, %v1270
    %v1272 = vmul.f32 %v1258, %v99
    %v1273 = vadd.f32 %v39, %v1272
    %v1274 = vmul.f32 %v1262, %v105
    %v1275 = vadd.f32 %v1269, %v1274
    %v1276 = vmul.f32 %v1262, %v111
    %v1277 = vadd.f32 %v1271, %v1276
    %v1278 = vmul.f32 %v1262, %v117
    %v1279 = vadd.f32 %v1273, %v1278
    %v1280 = vmul.f32 %v1266, %v123
    %v1281 = vadd.f32 %v1275, %v1280
    %v1282 = vmul.f32 %v1266, %v129
    %v1283 = vadd.f32 %v1277, %v1282
    %v1284 = vmul.f32 %v1266, %v135
    %v1285 = vadd.f32 %v1279, %v1284
    %v1286 = vmul.f32 %v1242, %v202
    %v1287 = vadd.f32 %v1281, %v1286
    %v1288 = vmul.f32 %v1242, %v208
    %v1289 = vadd.f32 %v1283, %v1288
    %v1290 = vmul.f32 %v1242, %v214
    %v1291 = vadd.f32 %v44, %v1290
    %v1292 = vmul.f32 %v1246, %v220
    %v1293 = vadd.f32 %v1287, %v1292
    %v1294 = vmul.f32 %v1246, %v226
    %v1295 = vadd.f32 %v1289, %v1294
    %v1296 = vmul.f32 %v1246, %v232
    %v1297 = vadd.f32 %v1291, %v1296
    %v1298 = vmul.f32 %v1250, %v238
    %v1299 = vadd.f32 %v1293, %v1298
    %v1300 = vmul.f32 %v1250, %v244
    %v1301 = vadd.f32 %v1295, %v1300
    %v1302 = vmul.f32 %v1250, %v250
    %v1303 = vadd.f32 %v1297, %v1302
    %v1304 = vmul.f32 %v1254, %v256
    %v1305 = vadd.f32 %v1299, %v1304
    %v1306 = vmul.f32 %v1254, %v262
    %v1307 = vadd.f32 %v1301, %v1306
    %v1308 = vmul.f32 %v1254, %v268
    %v1309 = vadd.f32 %v1303, %v1308
    %v1310 = vmul.f32 %v1305, 0.5
    %v1311 = vtanh.pop %v1310
    %v1312 = vmul.f32 %v1311, 0.5
    %v1313 = vadd.f32 %v1312, 0.5
    %v1314 = vmul.f32 %v1307, 0.5
    %v1315 = vtanh.pop %v1314
    %v1316 = vmul.f32 %v1315, 0.5
    %v1317 = vadd.f32 %v1316, 0.5
    %v1318 = vmul.f32 %v1313, %v1309
    %v1319 = vadd.f32 %v1285, %v1318
    %v1320 = vtanh.pop %v1319
    %v1321 = vsub.f32 %v1159, %v1320
    %v1322 = vmul.f32 %v1317, %v1321
    %v1323 = vadd.f32 %v1322, %v1320
    %v1324 = vmul.f32 %v1242, %v288
    %v1325 = vadd.f32 %v49, %v1324
    %v1326 = vmul.f32 %v1242, %v294
    %v1327 = vadd.f32 %v54, %v1326
    %v1328 = vmul.f32 %v1242, %v300
    %v1329 = vadd.f32 %v59, %v1328
    %v1330 = vmul.f32 %v1246, %v306
    %v1331 = vadd.f32 %v1325, %v1330
    %v1332 = vmul.f32 %v1246, %v312
    %v1333 = vadd.f32 %v1327, %v1332
    %v1334 = vmul.f32 %v1246, %v318
    %v1335 = vadd.f32 %v1329, %v1334
    %v1336 = vmul.f32 %v1250, %v324
    %v1337 = vadd.f32 %v1331, %v1336
    %v1338 = vmul.f32 %v1250, %v330
    %v1339 = vadd.f32 %v1333, %v1338
    %v1340 = vmul.f32 %v1250, %v336
    %v1341 = vadd.f32 %v1335, %v1340
    %v1342 = vmul.f32 %v1254, %v342
    %v1343 = vadd.f32 %v1337, %v1342
    %v1344 = vmul.f32 %v1254, %v348
    %v1345 = vadd.f32 %v1339, %v1344
    %v1346 = vmul.f32 %v1254, %v354
    %v1347 = vadd.f32 %v1341, %v1346
    %1349 = vset.pattern.permute.xlu0 0
    %1350 = vperm.xlu0 %1349, %v1238
    %v1351 = vpop.permute.xlu0 %1350
    %1353 = vset.pattern.permute.xlu0 1
    %1354 = vperm.xlu0 %1353, %v1238
    %v1355 = vpop.permute.xlu0 %1354
    %1357 = vset.pattern.permute.xlu0 2
    %1358 = vperm.xlu0 %1357, %v1238
    %v1359 = vpop.permute.xlu0 %1358
    %1361 = vset.pattern.permute.xlu0 3
    %1362 = vperm.xlu0 %1361, %v1238
    %v1363 = vpop.permute.xlu0 %1362
    %v1365 = vmul.f32 %v1351, %v500
    %v1366 = vadd.f32 %v1343, %v1365
    %v1367 = vmul.f32 %v1351, %v506
    %v1368 = vadd.f32 %v1345, %v1367
    %v1369 = vmul.f32 %v1351, %v512
    %v1370 = vadd.f32 %v64, %v1369
    %v1371 = vmul.f32 %v1355, %v518
    %v1372 = vadd.f32 %v1366, %v1371
    %v1373 = vmul.f32 %v1355, %v524
    %v1374 = vadd.f32 %v1368, %v1373
    %v1375 = vmul.f32 %v1355, %v530
    %v1376 = vadd.f32 %v1370, %v1375
    %v1377 = vmul.f32 %v1359, %v536
    %v1378 = vadd.f32 %v1372, %v1377
    %v1379 = vmul.f32 %v1359, %v542
    %v1380 = vadd.f32 %v1374, %v1379
    %v1381 = vmul.f32 %v1359, %v548
    %v1382 = vadd.f32 %v1376, %v1381
    %v1383 = vmul.f32 %v1363, %v554
    %v1384 = vadd.f32 %v1378, %v1383
    %v1385 = vmul.f32 %v1363, %v560
    %v1386 = vadd.f32 %v1380, %v1385
    %v1387 = vmul.f32 %v1363, %v566
    %v1388 = vadd.f32 %v1382, %v1387
    %v1389 = vmul.f32 %v1384, 0.5
    %v1390 = vtanh.pop %v1389
    %v1391 = vmul.f32 %v1390, 0.5
    %v1392 = vadd.f32 %v1391, 0.5
    %v1393 = vmul.f32 %v1386, 0.5
    %v1394 = vtanh.pop %v1393
    %v1395 = vmul.f32 %v1394, 0.5
    %v1396 = vadd.f32 %v1395, 0.5
    %v1397 = vmul.f32 %v1392, %v1388
    %v1398 = vadd.f32 %v1347, %v1397
    %v1399 = vtanh.pop %v1398
    %v1400 = vsub.f32 %v1238, %v1399
    %v1401 = vmul.f32 %v1396, %v1400
    %v1402 = vadd.f32 %v1401, %v1399
    %1404 = vset.pattern.permute.xlu0 0
    %1405 = vperm.xlu0 %1404, %v1323
    %v1406 = vpop.permute.xlu0 %1405
    %1408 = vset.pattern.permute.xlu0 1
    %1409 = vperm.xlu0 %1408, %v1323
    %v1410 = vpop.permute.xlu0 %1409
    %1412 = vset.pattern.permute.xlu0 2
    %1413 = vperm.xlu0 %1412, %v1323
    %v1414 = vpop.permute.xlu0 %1413
    %1416 = vset.pattern.permute.xlu0 3
    %1417 = vperm.xlu0 %1416, %v1323
    %v1418 = vpop.permute.xlu0 %1417
    %v1420 = vmul.f32 %v1406, %v288
    %v1421 = vadd.f32 %v49, %v1420
    %v1422 = vmul.f32 %v1406, %v294
    %v1423 = vadd.f32 %v54, %v1422
    %v1424 = vmul.f32 %v1406, %v300
    %v1425 = vadd.f32 %v59, %v1424
    %v1426 = vmul.f32 %v1410, %v306
    %v1427 = vadd.f32 %v1421, %v1426
    %v1428 = vmul.f32 %v1410, %v312
    %v1429 = vadd.f32 %v1423, %v1428
    %v1430 = vmul.f32 %v1410, %v318
    %v1431 = vadd.f32 %v1425, %v1430
    %v1432 = vmul.f32 %v1414, %v324
    %v1433 = vadd.f32 %v1427, %v1432
    %v1434 = vmul.f32 %v1414, %v330
    %v1435 = vadd.f32 %v1429, %v1434
    %v1436 = vmul.f32 %v1414, %v336
    %v1437 = vadd.f32 %v1431, %v1436
    %v1438 = vmul.f32 %v1418, %v342
    %v1439 = vadd.f32 %v1433, %v1438
    %v1440 = vmul.f32 %v1418, %v348
    %v1441 = vadd.f32 %v1435, %v1440
    %v1442 = vmul.f32 %v1418, %v354
    %v1443 = vadd.f32 %v1437, %v1442
    %1445 = vset.pattern.permute.xlu0 0
    %1446 = vperm.xlu0 %1445, %v1402
    %v1447 = vpop.permute.xlu0 %1446
    %1449 = vset.pattern.permute.xlu0 1
    %1450 = vperm.xlu0 %1449, %v1402
    %v1451 = vpop.permute.xlu0 %1450
    %1453 = vset.pattern.permute.xlu0 2
    %1454 = vperm.xlu0 %1453, %v1402
    %v1455 = vpop.permute.xlu0 %1454
    %1457 = vset.pattern.permute.xlu0 3
    %1458 = vperm.xlu0 %1457, %v1402
    %v1459 = vpop.permute.xlu0 %1458
    %v1461 = vmul.f32 %v1447, %v500
    %v1462 = vadd.f32 %v1439, %v1461
    %v1463 = vmul.f32 %v1447, %v506
    %v1464 = vadd.f32 %v1441, %v1463
    %v1465 = vmul.f32 %v1447, %v512
    %v1466 = vadd.f32 %v64, %v1465
    %v1467 = vmul.f32 %v1451, %v518
    %v1468 = vadd.f32 %v1462, %v1467
    %v1469 = vmul.f32 %v1451, %v524
    %v1470 = vadd.f32 %v1464, %v1469
    %v1471 = vmul.f32 %v1451, %v530
    %v1472 = vadd.f32 %v1466, %v1471
    %v1473 = vmul.f32 %v1455, %v536
    %v1474 = vadd.f32 %v1468, %v1473
    %v1475 = vmul.f32 %v1455, %v542
    %v1476 = vadd.f32 %v1470, %v1475
    %v1477 = vmul.f32 %v1455, %v548
    %v1478 = vadd.f32 %v1472, %v1477
    %v1479 = vmul.f32 %v1459, %v554
    %v1480 = vadd.f32 %v1474, %v1479
    %v1481 = vmul.f32 %v1459, %v560
    %v1482 = vadd.f32 %v1476, %v1481
    %v1483 = vmul.f32 %v1459, %v566
    %v1484 = vadd.f32 %v1478, %v1483
    %v1485 = vmul.f32 %v1480, 0.5
    %v1486 = vtanh.pop %v1485
    %v1487 = vmul.f32 %v1486, 0.5
    %v1488 = vadd.f32 %v1487, 0.5
    %v1489 = vmul.f32 %v1482, 0.5
    %v1490 = vtanh.pop %v1489
    %v1491 = vmul.f32 %v1490, 0.5
    %v1492 = vadd.f32 %v1491, 0.5
    %v1493 = vmul.f32 %v1488, %v1484
    %v1494 = vadd.f32 %v1443, %v1493
    %v1495 = vtanh.pop %v1494
    %v1496 = vsub.f32 %v1402, %v1495
    %v1497 = vmul.f32 %v1492, %v1496
    %v1498 = vadd.f32 %v1497, %v1495
    %1500 = vset.pattern.permute.xlu0 0
    %1501 = vperm.xlu0 %1500, %v1498
    %v1502 = vpop.permute.xlu0 %1501
    %1504 = vset.pattern.permute.xlu0 1
    %1505 = vperm.xlu0 %1504, %v1498
    %v1506 = vpop.permute.xlu0 %1505
    %1508 = vset.pattern.permute.xlu0 2
    %1509 = vperm.xlu0 %1508, %v1498
    %v1510 = vpop.permute.xlu0 %1509
    %1512 = vset.pattern.permute.xlu0 3
    %1513 = vperm.xlu0 %1512, %v1498
    %v1514 = vpop.permute.xlu0 %1513
    %v1516 = vlaneseq
    %v1517 = vshrl.u32 %v1516, 7
    %v1518 = vsub.s32 0, %v1517
    %v1519 = vrot.slane %v24, %v1518
    %v1520 = vmul.f32 %v1502, %v1519
    %v1521 = vadd.f32 %v69, %v1520
    %v1522 = vlaneseq
    %v1523 = vshrl.u32 %v1522, 7
    %v1524 = vsub.s32 1, %v1523
    %v1525 = vrot.slane %v24, %v1524
    %v1526 = vmul.f32 %v1506, %v1525
    %v1527 = vadd.f32 %v1521, %v1526
    %v1528 = vlaneseq
    %v1529 = vshrl.u32 %v1528, 7
    %v1530 = vsub.s32 2, %v1529
    %v1531 = vrot.slane %v24, %v1530
    %v1532 = vmul.f32 %v1510, %v1531
    %v1533 = vadd.f32 %v1527, %v1532
    %v1534 = vlaneseq
    %v1535 = vshrl.u32 %v1534, 7
    %v1536 = vsub.s32 3, %v1535
    %v1537 = vrot.slane %v24, %v1536
    %v1538 = vmul.f32 %v1514, %v1537
    %v1539 = vadd.f32 %v1533, %v1538
    %vm1540 = vcmask 140288
    %1541 = vst.msk [vmem:[#allocation2] sm:$0x3] %vm1540, %v1539
    // Predicated region
    $region10: #{my_gru_forward.1} parent=1 // pred_check
      _
    $region11: #{my_gru_forward.1} parent=1 // pred_check_branch
      %1543 = sbr.rel (0) target = $region13
    $region12: #{my_gru_forward.1} parent=1 // pred_region
      %s1545 = ssub.s32 32, 32
      %1546 = vsyncadd [#allocation3], %s1545
      %s1548 = sshll.u32 [#allocation2], 4
      %s1549 = int_to_ptr.vmem [resolvable:$true] %s1548
      %1551 = dma.vmem_to_hbm [thread:$0]  %s1549, 32, %s2, [#allocation3]
    $region13: #{my_gru_forward.1} parent=1 // pred_fallthru
      _
    // Predicated region
    $region14: #{my_gru_forward.1} parent=1 // pred_check
      _
    $region15: #{my_gru_forward.1} parent=1 // pred_check_branch
      %1553 = sbr.rel (0) target = $region17
    $region16: #{my_gru_forward.1} parent=1 // pred_region
      %1554 = dma.done [#allocation3], 32
    $region17: #{my_gru_forward.1} parent=1 // pred_fallthru
      _
    %1555 = vsyncpa [#allocation3], 1

</llo_original>
